<compile_context>
chip_gen: v6e
topology: v6e:2x2x1
jax: 0.10.0
libtpu: 0.0.40
codegen_flags: <defaults>
</compile_context>

<pallas_src>
import functools

import numpy as np
import jax
import jax.numpy as jnp
from jax.experimental import pallas as pl
from jax.experimental.pallas import tpu as pltpu


def _round_up(a: int, b: int) -> int:
    return ((a + b - 1) // b) * b


def _pows_f32(d: int) -> np.ndarray:
    # pows[j] = pi * 2**j, computed in f64 and rounded once to f32 (shared by
    # kernel constants and the pure-JAX reference so products match bit-exactly).
    return (np.pi * (2.0 ** np.arange(d, dtype=np.float64))).astype(np.float32)


def _encoder_kernel(x_ref, pows_ref, off_ref, out_ref, *, td: int,
                    expand_in_kernel: bool):
    # x_ref:    (TM, G) f32 if expand_in_kernel else (TM, 128) f32 (pre-expanded)
    # pows_ref: (1, 128) f32, pows_ref[0, c] = pi * 2**((c % td) // 2)
    # off_ref:  (1, 128) f32, +pi/2 on "cos" lanes, 0 on "sin" lanes
    # out_ref:  (TM, 128) f32
    x = x_ref[...]
    if expand_in_kernel:
        # (TM, G) -> (TM, G*td): each x value repeated across its group's 2d lanes.
        x = jnp.repeat(x, td, axis=1)
    # cos(t) = sin(t + pi/2): one EUP transcendental for all lanes.
    out_ref[...] = jnp.sin(x * pows_ref[...] + off_ref[...])


def encoder(x, d: int = 4, *, block_rows: int = 512):
    """x: (n, 1) float32 -> (n, 2*d) float32 interleaved [cos, sin] features."""
    n = x.shape[0]
    assert x.ndim == 2 and x.shape[1] == 1, "Encoder expects x of shape (n, 1)"
    td = 2 * d
    if 128 % td != 0:
        # TODO(synk): d with 2*d not dividing 128 needs a different lane packing.
        raise NotImplementedError("encoder kernel assumes 2*d divides 128")
    g = 128 // td                       # original rows packed per lane-dense output row

    # Lane-dense view geometry; pad so every block is full (arbitrary n supported).
    rows = _round_up(n, g) // g                        # rows of the (rows, 128) view
    tm = min(_round_up(block_rows, 8), _round_up(rows, 8))
    rows_pad = _round_up(rows, tm)
    n_pad = rows_pad * g

    xf = jnp.ravel(x).astype(jnp.float32)
    if n_pad != n:
        xf = jnp.pad(xf, (0, n_pad - n))
    x_view = xf.reshape(rows_pad, g)

    # Frequency / phase-offset constants, tiled across the 128 lanes.
    pows2 = np.repeat(_pows_f32(d), 2)                                 # (td,)
    pows_tiled = jnp.asarray(np.tile(pows2, g).reshape(1, 128))        # (1, 128)
    off2 = np.tile(np.array([np.pi / 2.0, 0.0], dtype=np.float32), d)  # cos -> +pi/2
    off_tiled = jnp.asarray(np.tile(off2, g).reshape(1, 128))          # (1, 128)

    grid = (rows_pad // tm,)
    const_spec = pl.BlockSpec((1, 128), lambda i: (0, 0))
    out_spec = pl.BlockSpec((tm, 128), lambda i: (i, 0))
    out_shape = jax.ShapeDtypeStruct((rows_pad, 128), jnp.float32)
    cparams = pltpu.CompilerParams(dimension_semantics=("parallel",))

    def _call(x_arr, expand_in_kernel):
        x_block = (tm, g) if expand_in_kernel else (tm, 128)
        return pl.pallas_call(
            functools.partial(_encoder_kernel, td=td,
                              expand_in_kernel=expand_in_kernel),
            out_shape=out_shape,
            grid=grid,
            in_specs=[pl.BlockSpec(x_block, lambda i: (i, 0)),
                      const_spec, const_spec],
            out_specs=out_spec,
            compiler_params=cparams,
        )(x_arr, pows_tiled, off_tiled)

    try:
        out_view = _call(x_view, expand_in_kernel=True)
        jax.block_until_ready(out_view)
    except Exception:
        # Fallback: if Mosaic rejects the in-kernel (TM, G, td)->(TM, 128)
        # reshape, expand x with XLA outside the kernel instead (same math,
        # kernel body becomes pure mul+add+sin on lane-dense blocks).
        x_exp = jnp.repeat(x_view, td, axis=1)          # (rows_pad, 128)
        out_view = _call(x_exp, expand_in_kernel=False)

    # Free row-major reshape back to the interleaved (n, 2d) layout.
    return out_view.reshape(n_pad, td)[:n]


def encoder_ref(x, d: int = 4):
    """Pure-JAX reference matching the PyTorch forward exactly."""
    pows = jnp.asarray(_pows_f32(d))
    phase = x.astype(jnp.float32) * pows[None, :]       # (n, d)
    out = jnp.zeros((x.shape[0], 2 * d), dtype=jnp.float32)
    out = out.at[:, 0::2].set(jnp.cos(phase))
    out = out.at[:, 1::2].set(jnp.sin(phase))
    return out


if __name__ == "__main__":
    d = 4
    key = jax.random.PRNGKey(0)
    k1, k2 = jax.random.split(key)

    # Case 1: n not a multiple of the 16-row lane packing (exercises padding/slicing).
    x1 = jax.random.uniform(k1, (1000, 1), dtype=jnp.float32)
    out1 = jax.block_until_ready(encoder(x1, d=d))
    np.testing.assert_allclose(np.asarray(out1), np.asarray(encoder_ref(x1, d=d)),
                               rtol=1e-5, atol=1e-5)

    # Case 2: several grid steps with a smaller row block (multi-tile pipeline path).
    x2 = jax.random.uniform(k2, (4096, 1), dtype=jnp.float32)
    out2 = jax.block_until_ready(encoder(x2, d=d, block_rows=64))
    np.testing.assert_allclose(np.asarray(out2), np.asarray(encoder_ref(x2, d=d)),
                               rtol=1e-5, atol=1e-5)

    print("KERNEL_OK")
</pallas_src>

<mosaic_0001>
module attributes {stable_mosaic.version = 11 : i64} {
  func.func @_encoder_kernel(%arg0: i32, %arg1: memref<64x16xf32, #tpu.memory_space<vmem>>, %arg2: memref<1x128xf32, #tpu.memory_space<vmem>>, %arg3: memref<1x128xf32, #tpu.memory_space<vmem>>, %arg4: memref<64x128xf32, #tpu.memory_space<vmem>>) attributes {dimension_semantics = [#tpu.dimension_semantics<parallel>], iteration_bounds = array<i64: 1>, scalar_prefetch = 0 : i64, scratch_operands = 0 : i64, tpu.core_type = #tpu.core_type<tc>, window_params = [{transform_indices = @transform_0, window_bounds = array<i64: 64, 16>}, {pipeline_mode = #tpu.pipeline_mode<synchronous>, transform_indices = @transform_1, window_bounds = array<i64: 1, 128>}, {pipeline_mode = #tpu.pipeline_mode<synchronous>, transform_indices = @transform_2, window_bounds = array<i64: 1, 128>}, {transform_indices = @transform_3, window_bounds = array<i64: 64, 128>}]} {
    %c0 = arith.constant 0 : index
    %c0_0 = arith.constant 0 : index
    %0 = vector.load %arg1[%c0, %c0_0] : memref<64x16xf32, #tpu.memory_space<vmem>>, vector<64x16xf32>
    %1 = vector.shape_cast %0 : vector<64x16xf32> to vector<64x16x1xf32>
    %2 = vector.broadcast %1 : vector<64x16x1xf32> to vector<64x16x8xf32>
    %3 = vector.shape_cast %2 : vector<64x16x8xf32> to vector<64x128xf32>
    %c0_1 = arith.constant 0 : index
    %c0_2 = arith.constant 0 : index
    %4 = vector.load %arg2[%c0_1, %c0_2] : memref<1x128xf32, #tpu.memory_space<vmem>>, vector<1x128xf32>
    %5 = vector.broadcast %4 : vector<1x128xf32> to vector<64x128xf32>
    %6 = arith.mulf %3, %5 : vector<64x128xf32>
    %c0_3 = arith.constant 0 : index
    %c0_4 = arith.constant 0 : index
    %7 = vector.load %arg3[%c0_3, %c0_4] : memref<1x128xf32, #tpu.memory_space<vmem>>, vector<1x128xf32>
    %8 = vector.broadcast %7 : vector<1x128xf32> to vector<64x128xf32>
    %9 = arith.addf %6, %8 : vector<64x128xf32>
    %10 = math.sin %9 : vector<64x128xf32>
    %c0_5 = arith.constant 0 : index
    %c0_6 = arith.constant 0 : index
    %11 = vector.load %arg4[%c0_5, %c0_6] : memref<64x128xf32, #tpu.memory_space<vmem>>, vector<64x128xf32>
    tpu.vector_store %arg4[%c0_5, %c0_6], %10 {strides = array<i32>} : memref<64x128xf32, #tpu.memory_space<vmem>>, vector<64x128xf32>,
    return
  }
  func.func @transform_0(%arg0: i32) -> (i32, i32) {
    %c0_i32 = arith.constant 0 : i32
    %c0_i32_0 = arith.constant 0 : i32
    return %arg0, %c0_i32 : i32, i32
  }
  func.func @transform_1(%arg0: i32) -> (i32, i32) {
    %c0_i32 = arith.constant 0 : i32
    %c0_i32_0 = arith.constant 0 : i32
    %c0_i32_1 = arith.constant 0 : i32
    return %c0_i32, %c0_i32_0 : i32, i32
  }
  func.func @transform_2(%arg0: i32) -> (i32, i32) {
    %c0_i32 = arith.constant 0 : i32
    %c0_i32_0 = arith.constant 0 : i32
    %c0_i32_1 = arith.constant 0 : i32
    return %c0_i32, %c0_i32_0 : i32, i32
  }
  func.func @transform_3(%arg0: i32) -> (i32, i32) {
    %c0_i32 = arith.constant 0 : i32
    %c0_i32_0 = arith.constant 0 : i32
    return %arg0, %c0_i32 : i32, i32
  }
}

module attributes {stable_mosaic.version = 11 : i64} {
  func.func @_encoder_kernel(%arg0: i32, %arg1: memref<64x128xf32, #tpu.memory_space<vmem>>, %arg2: memref<1x128xf32, #tpu.memory_space<vmem>>, %arg3: memref<1x128xf32, #tpu.memory_space<vmem>>, %arg4: memref<64x128xf32, #tpu.memory_space<vmem>>) attributes {dimension_semantics = [#tpu.dimension_semantics<parallel>], iteration_bounds = array<i64: 1>, scalar_prefetch = 0 : i64, scratch_operands = 0 : i64, tpu.core_type = #tpu.core_type<tc>, window_params = [{transform_indices = @transform_0, window_bounds = array<i64: 64, 128>}, {pipeline_mode = #tpu.pipeline_mode<synchronous>, transform_indices = @transform_1, window_bounds = array<i64: 1, 128>}, {pipeline_mode = #tpu.pipeline_mode<synchronous>, transform_indices = @transform_2, window_bounds = array<i64: 1, 128>}, {transform_indices = @transform_3, window_bounds = array<i64: 64, 128>}]} {
    %c0 = arith.constant 0 : index
    %c0_0 = arith.constant 0 : index
    %0 = vector.load %arg1[%c0, %c0_0] : memref<64x128xf32, #tpu.memory_space<vmem>>, vector<64x128xf32>
    %c0_1 = arith.constant 0 : index
    %c0_2 = arith.constant 0 : index
    %1 = vector.load %arg2[%c0_1, %c0_2] : memref<1x128xf32, #tpu.memory_space<vmem>>, vector<1x128xf32>
    %2 = vector.broadcast %1 : vector<1x128xf32> to vector<64x128xf32>
    %3 = arith.mulf %0, %2 : vector<64x128xf32>
    %c0_3 = arith.constant 0 : index
    %c0_4 = arith.constant 0 : index
    %4 = vector.load %arg3[%c0_3, %c0_4] : memref<1x128xf32, #tpu.memory_space<vmem>>, vector<1x128xf32>
    %5 = vector.broadcast %4 : vector<1x128xf32> to vector<64x128xf32>
    %6 = arith.addf %3, %5 : vector<64x128xf32>
    %7 = math.sin %6 : vector<64x128xf32>
    %c0_5 = arith.constant 0 : index
    %c0_6 = arith.constant 0 : index
    %8 = vector.load %arg4[%c0_5, %c0_6] : memref<64x128xf32, #tpu.memory_space<vmem>>, vector<64x128xf32>
    tpu.vector_store %arg4[%c0_5, %c0_6], %7 {strides = array<i32>} : memref<64x128xf32, #tpu.memory_space<vmem>>, vector<64x128xf32>,
    return
  }
  func.func @transform_0(%arg0: i32) -> (i32, i32) {
    %c0_i32 = arith.constant 0 : i32
    %c0_i32_0 = arith.constant 0 : i32
    return %arg0, %c0_i32 : i32, i32
  }
  func.func @transform_1(%arg0: i32) -> (i32, i32) {
    %c0_i32 = arith.constant 0 : i32
    %c0_i32_0 = arith.constant 0 : i32
    %c0_i32_1 = arith.constant 0 : i32
    return %c0_i32, %c0_i32_0 : i32, i32
  }
  func.func @transform_2(%arg0: i32) -> (i32, i32) {
    %c0_i32 = arith.constant 0 : i32
    %c0_i32_0 = arith.constant 0 : i32
    %c0_i32_1 = arith.constant 0 : i32
    return %c0_i32, %c0_i32_0 : i32, i32
  }
  func.func @transform_3(%arg0: i32) -> (i32, i32) {
    %c0_i32 = arith.constant 0 : i32
    %c0_i32_0 = arith.constant 0 : i32
    return %arg0, %c0_i32 : i32, i32
  }
}

</mosaic_0001>

<llo_original>
// kernel: tpu_custom_call.1
$region0: #{tpu_custom_call.1}
  #allocation0 [shape = 'u32[]', space=smem, size = 0x4, offset = 0x4, fixed_abs, tag = 'smem constant byte address 0x4 - core index']
  #allocation1 [shape = 'u32[144,128]{1,0:T(1,128)}', space=vmem, size = 0x12000, scoped, tag = 'internal scratch']
  %s0 = inlined_call_operand.vmem [shape: f32[64,16], index: 0, kind: input, shape index: {}]
  %s1 = inlined_call_operand.vmem [shape: f32[1,128], index: 1, kind: input, shape index: {}]
  %s2 = inlined_call_operand.vmem [shape: f32[1,128], index: 2, kind: input, shape index: {}]
  %s3 = inlined_call_operand.hbm [shape: f32[64,128], index: 3, kind: output, shape index: {}]
  %s4 = sld [smem:[#allocation0]]
  $region22: #{tpu_custom_call.1} parent=0
    _
  %s6 = ssub.s32 1, %s4
  %s7 = scalar_select 0, %s6, %s4
  $region1: #{tpu_custom_call.1} parent=0
    #allocation2 [shape = 'u8[32768]{0}', space=vmem, size = 0x8000, scoped, tag = 'output window, operand 0, single buffered']
    #allocation3 [shape = 's32[1]{0}', space=sflag, size = 0x4, scoped, tag = 'scoped memory for tpu_custom_call.1']
    %8 = vsyncpa [#allocation3], 0
    // Predicated region
    $region2: #{tpu_custom_call.1} parent=1 // pred_check
      _
    $region3: #{tpu_custom_call.1} parent=1 // pred_check_branch
      %10 = sbr.rel (0) target = $region5
    $region4: #{tpu_custom_call.1} parent=1 // pred_region
      _
    $region5: #{tpu_custom_call.1} parent=1 // pred_fallthru
      _
    // Predicated region
    $region6: #{tpu_custom_call.1} parent=1 // pred_check
      _
    $region7: #{tpu_custom_call.1} parent=1 // pred_check_branch
      %12 = sbr.rel (0) target = $region9
    $region8: #{tpu_custom_call.1} parent=1 // pred_region
      _
    $region9: #{tpu_custom_call.1} parent=1 // pred_fallthru
      _
    // Predicated region
    $region10: #{tpu_custom_call.1} parent=1 // pred_check
      _
    $region11: #{tpu_custom_call.1} parent=1 // pred_check_branch
      %14 = sbr.rel (0) target = $region13
    $region12: #{tpu_custom_call.1} parent=1 // pred_region
      _
    $region13: #{tpu_custom_call.1} parent=1 // pred_fallthru
      _
    %v15 = vld [vmem:[%s0] sm:$0xff]
    %v16 = vld [vmem:[%s0 + $0x8] sm:$0xff]
    %v17 = vld [vmem:[%s0 + $0x10] sm:$0xff]
    %v18 = vld [vmem:[%s0 + $0x18] sm:$0xff]
    %v19 = vld [vmem:[%s0 + $0x20] sm:$0xff]
    %v20 = vld [vmem:[%s0 + $0x28] sm:$0xff]
    %v21 = vld [vmem:[%s0 + $0x30] sm:$0xff]
    %v22 = vld [vmem:[%s0 + $0x38] sm:$0xff]
    %v23 = vlaneseq
    %v24 = vshrl.u32 %v23, 7
    %v25 = vsub.s32 0, %v24
    %v26 = vrot.slane %v15, %v25
    %28 = vbcast.lane.b32.xlu0 %v26, 256
    %v29 = vpop.permute.xlu0 %28
    %s31 = sor.u32 256, 8
    %32 = vbcast.lane.b32.xlu0 %v26, %s31
    %v33 = vpop.permute.xlu0 %32
    %v34 = vlaneseq
    %v35 = vshrl.u32 %v34, 7
    %v36 = vsub.s32 1, %v35
    %v37 = vrot.slane %v15, %v36
    %39 = vbcast.lane.b32.xlu0 %v37, 256
    %v40 = vpop.permute.xlu0 %39
    %s42 = sor.u32 256, 8
    %43 = vbcast.lane.b32.xlu0 %v37, %s42
    %v44 = vpop.permute.xlu0 %43
    %v45 = vlaneseq
    %v46 = vshrl.u32 %v45, 7
    %v47 = vsub.s32 2, %v46
    %v48 = vrot.slane %v15, %v47
    %50 = vbcast.lane.b32.xlu0 %v48, 256
    %v51 = vpop.permute.xlu0 %50
    %s53 = sor.u32 256, 8
    %54 = vbcast.lane.b32.xlu0 %v48, %s53
    %v55 = vpop.permute.xlu0 %54
    %v56 = vlaneseq
    %v57 = vshrl.u32 %v56, 7
    %v58 = vsub.s32 3, %v57
    %v59 = vrot.slane %v15, %v58
    %61 = vbcast.lane.b32.xlu0 %v59, 256
    %v62 = vpop.permute.xlu0 %61
    %s64 = sor.u32 256, 8
    %65 = vbcast.lane.b32.xlu0 %v59, %s64
    %v66 = vpop.permute.xlu0 %65
    %v67 = vlaneseq
    %v68 = vshrl.u32 %v67, 7
    %v69 = vsub.s32 4, %v68
    %v70 = vrot.slane %v15, %v69
    %72 = vbcast.lane.b32.xlu0 %v70, 256
    %v73 = vpop.permute.xlu0 %72
    %s75 = sor.u32 256, 8
    %76 = vbcast.lane.b32.xlu0 %v70, %s75
    %v77 = vpop.permute.xlu0 %76
    %v78 = vlaneseq
    %v79 = vshrl.u32 %v78, 7
    %v80 = vsub.s32 5, %v79
    %v81 = vrot.slane %v15, %v80
    %83 = vbcast.lane.b32.xlu0 %v81, 256
    %v84 = vpop.permute.xlu0 %83
    %s86 = sor.u32 256, 8
    %87 = vbcast.lane.b32.xlu0 %v81, %s86
    %v88 = vpop.permute.xlu0 %87
    %v89 = vlaneseq
    %v90 = vshrl.u32 %v89, 7
    %v91 = vsub.s32 6, %v90
    %v92 = vrot.slane %v15, %v91
    %94 = vbcast.lane.b32.xlu0 %v92, 256
    %v95 = vpop.permute.xlu0 %94
    %s97 = sor.u32 256, 8
    %98 = vbcast.lane.b32.xlu0 %v92, %s97
    %v99 = vpop.permute.xlu0 %98
    %v100 = vlaneseq
    %v101 = vshrl.u32 %v100, 7
    %v102 = vsub.s32 7, %v101
    %v103 = vrot.slane %v15, %v102
    %105 = vbcast.lane.b32.xlu0 %v103, 256
    %v106 = vpop.permute.xlu0 %105
    %s108 = sor.u32 256, 8
    %109 = vbcast.lane.b32.xlu0 %v103, %s108
    %v110 = vpop.permute.xlu0 %109
    %v111 = vlaneseq
    %v112 = vshrl.u32 %v111, 7
    %v113 = vsub.s32 0, %v112
    %v114 = vrot.slane %v16, %v113
    %116 = vbcast.lane.b32.xlu0 %v114, 256
    %v117 = vpop.permute.xlu0 %116
    %s119 = sor.u32 256, 8
    %120 = vbcast.lane.b32.xlu0 %v114, %s119
    %v121 = vpop.permute.xlu0 %120
    %v122 = vlaneseq
    %v123 = vshrl.u32 %v122, 7
    %v124 = vsub.s32 1, %v123
    %v125 = vrot.slane %v16, %v124
    %127 = vbcast.lane.b32.xlu0 %v125, 256
    %v128 = vpop.permute.xlu0 %127
    %s130 = sor.u32 256, 8
    %131 = vbcast.lane.b32.xlu0 %v125, %s130
    %v132 = vpop.permute.xlu0 %131
    %v133 = vlaneseq
    %v134 = vshrl.u32 %v133, 7
    %v135 = vsub.s32 2, %v134
    %v136 = vrot.slane %v16, %v135
    %138 = vbcast.lane.b32.xlu0 %v136, 256
    %v139 = vpop.permute.xlu0 %138
    %s141 = sor.u32 256, 8
    %142 = vbcast.lane.b32.xlu0 %v136, %s141
    %v143 = vpop.permute.xlu0 %142
    %v144 = vlaneseq
    %v145 = vshrl.u32 %v144, 7
    %v146 = vsub.s32 3, %v145
    %v147 = vrot.slane %v16, %v146
    %149 = vbcast.lane.b32.xlu0 %v147, 256
    %v150 = vpop.permute.xlu0 %149
    %s152 = sor.u32 256, 8
    %153 = vbcast.lane.b32.xlu0 %v147, %s152
    %v154 = vpop.permute.xlu0 %153
    %v155 = vlaneseq
    %v156 = vshrl.u32 %v155, 7
    %v157 = vsub.s32 4, %v156
    %v158 = vrot.slane %v16, %v157
    %160 = vbcast.lane.b32.xlu0 %v158, 256
    %v161 = vpop.permute.xlu0 %160
    %s163 = sor.u32 256, 8
    %164 = vbcast.lane.b32.xlu0 %v158, %s163
    %v165 = vpop.permute.xlu0 %164
    %v166 = vlaneseq
    %v167 = vshrl.u32 %v166, 7
    %v168 = vsub.s32 5, %v167
    %v169 = vrot.slane %v16, %v168
    %171 = vbcast.lane.b32.xlu0 %v169, 256
    %v172 = vpop.permute.xlu0 %171
    %s174 = sor.u32 256, 8
    %175 = vbcast.lane.b32.xlu0 %v169, %s174
    %v176 = vpop.permute.xlu0 %175
    %v177 = vlaneseq
    %v178 = vshrl.u32 %v177, 7
    %v179 = vsub.s32 6, %v178
    %v180 = vrot.slane %v16, %v179
    %182 = vbcast.lane.b32.xlu0 %v180, 256
    %v183 = vpop.permute.xlu0 %182
    %s185 = sor.u32 256, 8
    %186 = vbcast.lane.b32.xlu0 %v180, %s185
    %v187 = vpop.permute.xlu0 %186
    %v188 = vlaneseq
    %v189 = vshrl.u32 %v188, 7
    %v190 = vsub.s32 7, %v189
    %v191 = vrot.slane %v16, %v190
    %193 = vbcast.lane.b32.xlu0 %v191, 256
    %v194 = vpop.permute.xlu0 %193
    %s196 = sor.u32 256, 8
    %197 = vbcast.lane.b32.xlu0 %v191, %s196
    %v198 = vpop.permute.xlu0 %197
    %v199 = vlaneseq
    %v200 = vshrl.u32 %v199, 7
    %v201 = vsub.s32 0, %v200
    %v202 = vrot.slane %v17, %v201
    %204 = vbcast.lane.b32.xlu0 %v202, 256
    %v205 = vpop.permute.xlu0 %204
    %s207 = sor.u32 256, 8
    %208 = vbcast.lane.b32.xlu0 %v202, %s207
    %v209 = vpop.permute.xlu0 %208
    %v210 = vlaneseq
    %v211 = vshrl.u32 %v210, 7
    %v212 = vsub.s32 1, %v211
    %v213 = vrot.slane %v17, %v212
    %215 = vbcast.lane.b32.xlu0 %v213, 256
    %v216 = vpop.permute.xlu0 %215
    %s218 = sor.u32 256, 8
    %219 = vbcast.lane.b32.xlu0 %v213, %s218
    %v220 = vpop.permute.xlu0 %219
    %v221 = vlaneseq
    %v222 = vshrl.u32 %v221, 7
    %v223 = vsub.s32 2, %v222
    %v224 = vrot.slane %v17, %v223
    %226 = vbcast.lane.b32.xlu0 %v224, 256
    %v227 = vpop.permute.xlu0 %226
    %s229 = sor.u32 256, 8
    %230 = vbcast.lane.b32.xlu0 %v224, %s229
    %v231 = vpop.permute.xlu0 %230
    %v232 = vlaneseq
    %v233 = vshrl.u32 %v232, 7
    %v234 = vsub.s32 3, %v233
    %v235 = vrot.slane %v17, %v234
    %237 = vbcast.lane.b32.xlu0 %v235, 256
    %v238 = vpop.permute.xlu0 %237
    %s240 = sor.u32 256, 8
    %241 = vbcast.lane.b32.xlu0 %v235, %s240
    %v242 = vpop.permute.xlu0 %241
    %v243 = vlaneseq
    %v244 = vshrl.u32 %v243, 7
    %v245 = vsub.s32 4, %v244
    %v246 = vrot.slane %v17, %v245
    %248 = vbcast.lane.b32.xlu0 %v246, 256
    %v249 = vpop.permute.xlu0 %248
    %s251 = sor.u32 256, 8
    %252 = vbcast.lane.b32.xlu0 %v246, %s251
    %v253 = vpop.permute.xlu0 %252
    %v254 = vlaneseq
    %v255 = vshrl.u32 %v254, 7
    %v256 = vsub.s32 5, %v255
    %v257 = vrot.slane %v17, %v256
    %259 = vbcast.lane.b32.xlu0 %v257, 256
    %v260 = vpop.permute.xlu0 %259
    %s262 = sor.u32 256, 8
    %263 = vbcast.lane.b32.xlu0 %v257, %s262
    %v264 = vpop.permute.xlu0 %263
    %v265 = vlaneseq
    %v266 = vshrl.u32 %v265, 7
    %v267 = vsub.s32 6, %v266
    %v268 = vrot.slane %v17, %v267
    %270 = vbcast.lane.b32.xlu0 %v268, 256
    %v271 = vpop.permute.xlu0 %270
    %s273 = sor.u32 256, 8
    %274 = vbcast.lane.b32.xlu0 %v268, %s273
    %v275 = vpop.permute.xlu0 %274
    %v276 = vlaneseq
    %v277 = vshrl.u32 %v276, 7
    %v278 = vsub.s32 7, %v277
    %v279 = vrot.slane %v17, %v278
    %281 = vbcast.lane.b32.xlu0 %v279, 256
    %v282 = vpop.permute.xlu0 %281
    %s284 = sor.u32 256, 8
    %285 = vbcast.lane.b32.xlu0 %v279, %s284
    %v286 = vpop.permute.xlu0 %285
    %v287 = vlaneseq
    %v288 = vshrl.u32 %v287, 7
    %v289 = vsub.s32 0, %v288
    %v290 = vrot.slane %v18, %v289
    %292 = vbcast.lane.b32.xlu0 %v290, 256
    %v293 = vpop.permute.xlu0 %292
    %s295 = sor.u32 256, 8
    %296 = vbcast.lane.b32.xlu0 %v290, %s295
    %v297 = vpop.permute.xlu0 %296
    %v298 = vlaneseq
    %v299 = vshrl.u32 %v298, 7
    %v300 = vsub.s32 1, %v299
    %v301 = vrot.slane %v18, %v300
    %303 = vbcast.lane.b32.xlu0 %v301, 256
    %v304 = vpop.permute.xlu0 %303
    %s306 = sor.u32 256, 8
    %307 = vbcast.lane.b32.xlu0 %v301, %s306
    %v308 = vpop.permute.xlu0 %307
    %v309 = vlaneseq
    %v310 = vshrl.u32 %v309, 7
    %v311 = vsub.s32 2, %v310
    %v312 = vrot.slane %v18, %v311
    %314 = vbcast.lane.b32.xlu0 %v312, 256
    %v315 = vpop.permute.xlu0 %314
    %s317 = sor.u32 256, 8
    %318 = vbcast.lane.b32.xlu0 %v312, %s317
    %v319 = vpop.permute.xlu0 %318
    %v320 = vlaneseq
    %v321 = vshrl.u32 %v320, 7
    %v322 = vsub.s32 3, %v321
    %v323 = vrot.slane %v18, %v322
    %325 = vbcast.lane.b32.xlu0 %v323, 256
    %v326 = vpop.permute.xlu0 %325
    %s328 = sor.u32 256, 8
    %329 = vbcast.lane.b32.xlu0 %v323, %s328
    %v330 = vpop.permute.xlu0 %329
    %v331 = vlaneseq
    %v332 = vshrl.u32 %v331, 7
    %v333 = vsub.s32 4, %v332
    %v334 = vrot.slane %v18, %v333
    %336 = vbcast.lane.b32.xlu0 %v334, 256
    %v337 = vpop.permute.xlu0 %336
    %s339 = sor.u32 256, 8
    %340 = vbcast.lane.b32.xlu0 %v334, %s339
    %v341 = vpop.permute.xlu0 %340
    %v342 = vlaneseq
    %v343 = vshrl.u32 %v342, 7
    %v344 = vsub.s32 5, %v343
    %v345 = vrot.slane %v18, %v344
    %347 = vbcast.lane.b32.xlu0 %v345, 256
    %v348 = vpop.permute.xlu0 %347
    %s350 = sor.u32 256, 8
    %351 = vbcast.lane.b32.xlu0 %v345, %s350
    %v352 = vpop.permute.xlu0 %351
    %v353 = vlaneseq
    %v354 = vshrl.u32 %v353, 7
    %v355 = vsub.s32 6, %v354
    %v356 = vrot.slane %v18, %v355
    %358 = vbcast.lane.b32.xlu0 %v356, 256
    %v359 = vpop.permute.xlu0 %358
    %s361 = sor.u32 256, 8
    %362 = vbcast.lane.b32.xlu0 %v356, %s361
    %v363 = vpop.permute.xlu0 %362
    %v364 = vlaneseq
    %v365 = vshrl.u32 %v364, 7
    %v366 = vsub.s32 7, %v365
    %v367 = vrot.slane %v18, %v366
    %369 = vbcast.lane.b32.xlu0 %v367, 256
    %v370 = vpop.permute.xlu0 %369
    %s372 = sor.u32 256, 8
    %373 = vbcast.lane.b32.xlu0 %v367, %s372
    %v374 = vpop.permute.xlu0 %373
    %v375 = vlaneseq
    %v376 = vshrl.u32 %v375, 7
    %v377 = vsub.s32 0, %v376
    %v378 = vrot.slane %v19, %v377
    %380 = vbcast.lane.b32.xlu0 %v378, 256
    %v381 = vpop.permute.xlu0 %380
    %s383 = sor.u32 256, 8
    %384 = vbcast.lane.b32.xlu0 %v378, %s383
    %v385 = vpop.permute.xlu0 %384
    %v386 = vlaneseq
    %v387 = vshrl.u32 %v386, 7
    %v388 = vsub.s32 1, %v387
    %v389 = vrot.slane %v19, %v388
    %391 = vbcast.lane.b32.xlu0 %v389, 256
    %v392 = vpop.permute.xlu0 %391
    %s394 = sor.u32 256, 8
    %395 = vbcast.lane.b32.xlu0 %v389, %s394
    %v396 = vpop.permute.xlu0 %395
    %v397 = vlaneseq
    %v398 = vshrl.u32 %v397, 7
    %v399 = vsub.s32 2, %v398
    %v400 = vrot.slane %v19, %v399
    %402 = vbcast.lane.b32.xlu0 %v400, 256
    %v403 = vpop.permute.xlu0 %402
    %s405 = sor.u32 256, 8
    %406 = vbcast.lane.b32.xlu0 %v400, %s405
    %v407 = vpop.permute.xlu0 %406
    %v408 = vlaneseq
    %v409 = vshrl.u32 %v408, 7
    %v410 = vsub.s32 3, %v409
    %v411 = vrot.slane %v19, %v410
    %413 = vbcast.lane.b32.xlu0 %v411, 256
    %v414 = vpop.permute.xlu0 %413
    %s416 = sor.u32 256, 8
    %417 = vbcast.lane.b32.xlu0 %v411, %s416
    %v418 = vpop.permute.xlu0 %417
    %v419 = vlaneseq
    %v420 = vshrl.u32 %v419, 7
    %v421 = vsub.s32 4, %v420
    %v422 = vrot.slane %v19, %v421
    %424 = vbcast.lane.b32.xlu0 %v422, 256
    %v425 = vpop.permute.xlu0 %424
    %s427 = sor.u32 256, 8
    %428 = vbcast.lane.b32.xlu0 %v422, %s427
    %v429 = vpop.permute.xlu0 %428
    %v430 = vlaneseq
    %v431 = vshrl.u32 %v430, 7
    %v432 = vsub.s32 5, %v431
    %v433 = vrot.slane %v19, %v432
    %435 = vbcast.lane.b32.xlu0 %v433, 256
    %v436 = vpop.permute.xlu0 %435
    %s438 = sor.u32 256, 8
    %439 = vbcast.lane.b32.xlu0 %v433, %s438
    %v440 = vpop.permute.xlu0 %439
    %v441 = vlaneseq
    %v442 = vshrl.u32 %v441, 7
    %v443 = vsub.s32 6, %v442
    %v444 = vrot.slane %v19, %v443
    %446 = vbcast.lane.b32.xlu0 %v444, 256
    %v447 = vpop.permute.xlu0 %446
    %s449 = sor.u32 256, 8
    %450 = vbcast.lane.b32.xlu0 %v444, %s449
    %v451 = vpop.permute.xlu0 %450
    %v452 = vlaneseq
    %v453 = vshrl.u32 %v452, 7
    %v454 = vsub.s32 7, %v453
    %v455 = vrot.slane %v19, %v454
    %457 = vbcast.lane.b32.xlu0 %v455, 256
    %v458 = vpop.permute.xlu0 %457
    %s460 = sor.u32 256, 8
    %461 = vbcast.lane.b32.xlu0 %v455, %s460
    %v462 = vpop.permute.xlu0 %461
    %v463 = vlaneseq
    %v464 = vshrl.u32 %v463, 7
    %v465 = vsub.s32 0, %v464
    %v466 = vrot.slane %v20, %v465
    %468 = vbcast.lane.b32.xlu0 %v466, 256
    %v469 = vpop.permute.xlu0 %468
    %s471 = sor.u32 256, 8
    %472 = vbcast.lane.b32.xlu0 %v466, %s471
    %v473 = vpop.permute.xlu0 %472
    %v474 = vlaneseq
    %v475 = vshrl.u32 %v474, 7
    %v476 = vsub.s32 1, %v475
    %v477 = vrot.slane %v20, %v476
    %479 = vbcast.lane.b32.xlu0 %v477, 256
    %v480 = vpop.permute.xlu0 %479
    %s482 = sor.u32 256, 8
    %483 = vbcast.lane.b32.xlu0 %v477, %s482
    %v484 = vpop.permute.xlu0 %483
    %v485 = vlaneseq
    %v486 = vshrl.u32 %v485, 7
    %v487 = vsub.s32 2, %v486
    %v488 = vrot.slane %v20, %v487
    %490 = vbcast.lane.b32.xlu0 %v488, 256
    %v491 = vpop.permute.xlu0 %490
    %s493 = sor.u32 256, 8
    %494 = vbcast.lane.b32.xlu0 %v488, %s493
    %v495 = vpop.permute.xlu0 %494
    %v496 = vlaneseq
    %v497 = vshrl.u32 %v496, 7
    %v498 = vsub.s32 3, %v497
    %v499 = vrot.slane %v20, %v498
    %501 = vbcast.lane.b32.xlu0 %v499, 256
    %v502 = vpop.permute.xlu0 %501
    %s504 = sor.u32 256, 8
    %505 = vbcast.lane.b32.xlu0 %v499, %s504
    %v506 = vpop.permute.xlu0 %505
    %v507 = vlaneseq
    %v508 = vshrl.u32 %v507, 7
    %v509 = vsub.s32 4, %v508
    %v510 = vrot.slane %v20, %v509
    %512 = vbcast.lane.b32.xlu0 %v510, 256
    %v513 = vpop.permute.xlu0 %512
    %s515 = sor.u32 256, 8
    %516 = vbcast.lane.b32.xlu0 %v510, %s515
    %v517 = vpop.permute.xlu0 %516
    %v518 = vlaneseq
    %v519 = vshrl.u32 %v518, 7
    %v520 = vsub.s32 5, %v519
    %v521 = vrot.slane %v20, %v520
    %523 = vbcast.lane.b32.xlu0 %v521, 256
    %v524 = vpop.permute.xlu0 %523
    %s526 = sor.u32 256, 8
    %527 = vbcast.lane.b32.xlu0 %v521, %s526
    %v528 = vpop.permute.xlu0 %527
    %v529 = vlaneseq
    %v530 = vshrl.u32 %v529, 7
    %v531 = vsub.s32 6, %v530
    %v532 = vrot.slane %v20, %v531
    %534 = vbcast.lane.b32.xlu0 %v532, 256
    %v535 = vpop.permute.xlu0 %534
    %s537 = sor.u32 256, 8
    %538 = vbcast.lane.b32.xlu0 %v532, %s537
    %v539 = vpop.permute.xlu0 %538
    %v540 = vlaneseq
    %v541 = vshrl.u32 %v540, 7
    %v542 = vsub.s32 7, %v541
    %v543 = vrot.slane %v20, %v542
    %545 = vbcast.lane.b32.xlu0 %v543, 256
    %v546 = vpop.permute.xlu0 %545
    %s548 = sor.u32 256, 8
    %549 = vbcast.lane.b32.xlu0 %v543, %s548
    %v550 = vpop.permute.xlu0 %549
    %v551 = vlaneseq
    %v552 = vshrl.u32 %v551, 7
    %v553 = vsub.s32 0, %v552
    %v554 = vrot.slane %v21, %v553
    %556 = vbcast.lane.b32.xlu0 %v554, 256
    %v557 = vpop.permute.xlu0 %556
    %s559 = sor.u32 256, 8
    %560 = vbcast.lane.b32.xlu0 %v554, %s559
    %v561 = vpop.permute.xlu0 %560
    %v562 = vlaneseq
    %v563 = vshrl.u32 %v562, 7
    %v564 = vsub.s32 1, %v563
    %v565 = vrot.slane %v21, %v564
    %567 = vbcast.lane.b32.xlu0 %v565, 256
    %v568 = vpop.permute.xlu0 %567
    %s570 = sor.u32 256, 8
    %571 = vbcast.lane.b32.xlu0 %v565, %s570
    %v572 = vpop.permute.xlu0 %571
    %v573 = vlaneseq
    %v574 = vshrl.u32 %v573, 7
    %v575 = vsub.s32 2, %v574
    %v576 = vrot.slane %v21, %v575
    %578 = vbcast.lane.b32.xlu0 %v576, 256
    %v579 = vpop.permute.xlu0 %578
    %s581 = sor.u32 256, 8
    %582 = vbcast.lane.b32.xlu0 %v576, %s581
    %v583 = vpop.permute.xlu0 %582
    %v584 = vlaneseq
    %v585 = vshrl.u32 %v584, 7
    %v586 = vsub.s32 3, %v585
    %v587 = vrot.slane %v21, %v586
    %589 = vbcast.lane.b32.xlu0 %v587, 256
    %v590 = vpop.permute.xlu0 %589
    %s592 = sor.u32 256, 8
    %593 = vbcast.lane.b32.xlu0 %v587, %s592
    %v594 = vpop.permute.xlu0 %593
    %v595 = vlaneseq
    %v596 = vshrl.u32 %v595, 7
    %v597 = vsub.s32 4, %v596
    %v598 = vrot.slane %v21, %v597
    %600 = vbcast.lane.b32.xlu0 %v598, 256
    %v601 = vpop.permute.xlu0 %600
    %s603 = sor.u32 256, 8
    %604 = vbcast.lane.b32.xlu0 %v598, %s603
    %v605 = vpop.permute.xlu0 %604
    %v606 = vlaneseq
    %v607 = vshrl.u32 %v606, 7
    %v608 = vsub.s32 5, %v607
    %v609 = vrot.slane %v21, %v608
    %611 = vbcast.lane.b32.xlu0 %v609, 256
    %v612 = vpop.permute.xlu0 %611
    %s614 = sor.u32 256, 8
    %615 = vbcast.lane.b32.xlu0 %v609, %s614
    %v616 = vpop.permute.xlu0 %615
    %v617 = vlaneseq
    %v618 = vshrl.u32 %v617, 7
    %v619 = vsub.s32 6, %v618
    %v620 = vrot.slane %v21, %v619
    %622 = vbcast.lane.b32.xlu0 %v620, 256
    %v623 = vpop.permute.xlu0 %622
    %s625 = sor.u32 256, 8
    %626 = vbcast.lane.b32.xlu0 %v620, %s625
    %v627 = vpop.permute.xlu0 %626
    %v628 = vlaneseq
    %v629 = vshrl.u32 %v628, 7
    %v630 = vsub.s32 7, %v629
    %v631 = vrot.slane %v21, %v630
    %633 = vbcast.lane.b32.xlu0 %v631, 256
    %v634 = vpop.permute.xlu0 %633
    %s636 = sor.u32 256, 8
    %637 = vbcast.lane.b32.xlu0 %v631, %s636
    %v638 = vpop.permute.xlu0 %637
    %v639 = vlaneseq
    %v640 = vshrl.u32 %v639, 7
    %v641 = vsub.s32 0, %v640
    %v642 = vrot.slane %v22, %v641
    %644 = vbcast.lane.b32.xlu0 %v642, 256
    %v645 = vpop.permute.xlu0 %644
    %s647 = sor.u32 256, 8
    %648 = vbcast.lane.b32.xlu0 %v642, %s647
    %v649 = vpop.permute.xlu0 %648
    %v650 = vlaneseq
    %v651 = vshrl.u32 %v650, 7
    %v652 = vsub.s32 1, %v651
    %v653 = vrot.slane %v22, %v652
    %655 = vbcast.lane.b32.xlu0 %v653, 256
    %v656 = vpop.permute.xlu0 %655
    %s658 = sor.u32 256, 8
    %659 = vbcast.lane.b32.xlu0 %v653, %s658
    %v660 = vpop.permute.xlu0 %659
    %v661 = vlaneseq
    %v662 = vshrl.u32 %v661, 7
    %v663 = vsub.s32 2, %v662
    %v664 = vrot.slane %v22, %v663
    %666 = vbcast.lane.b32.xlu0 %v664, 256
    %v667 = vpop.permute.xlu0 %666
    %s669 = sor.u32 256, 8
    %670 = vbcast.lane.b32.xlu0 %v664, %s669
    %v671 = vpop.permute.xlu0 %670
    %v672 = vlaneseq
    %v673 = vshrl.u32 %v672, 7
    %v674 = vsub.s32 3, %v673
    %v675 = vrot.slane %v22, %v674
    %677 = vbcast.lane.b32.xlu0 %v675, 256
    %v678 = vpop.permute.xlu0 %677
    %s680 = sor.u32 256, 8
    %681 = vbcast.lane.b32.xlu0 %v675, %s680
    %v682 = vpop.permute.xlu0 %681
    %v683 = vlaneseq
    %v684 = vshrl.u32 %v683, 7
    %v685 = vsub.s32 4, %v684
    %v686 = vrot.slane %v22, %v685
    %688 = vbcast.lane.b32.xlu0 %v686, 256
    %v689 = vpop.permute.xlu0 %688
    %s691 = sor.u32 256, 8
    %692 = vbcast.lane.b32.xlu0 %v686, %s691
    %v693 = vpop.permute.xlu0 %692
    %v694 = vlaneseq
    %v695 = vshrl.u32 %v694, 7
    %v696 = vsub.s32 5, %v695
    %v697 = vrot.slane %v22, %v696
    %699 = vbcast.lane.b32.xlu0 %v697, 256
    %v700 = vpop.permute.xlu0 %699
    %s702 = sor.u32 256, 8
    %703 = vbcast.lane.b32.xlu0 %v697, %s702
    %v704 = vpop.permute.xlu0 %703
    %v705 = vlaneseq
    %v706 = vshrl.u32 %v705, 7
    %v707 = vsub.s32 6, %v706
    %v708 = vrot.slane %v22, %v707
    %710 = vbcast.lane.b32.xlu0 %v708, 256
    %v711 = vpop.permute.xlu0 %710
    %s713 = sor.u32 256, 8
    %714 = vbcast.lane.b32.xlu0 %v708, %s713
    %v715 = vpop.permute.xlu0 %714
    %v716 = vlaneseq
    %v717 = vshrl.u32 %v716, 7
    %v718 = vsub.s32 7, %v717
    %v719 = vrot.slane %v22, %v718
    %721 = vbcast.lane.b32.xlu0 %v719, 256
    %v722 = vpop.permute.xlu0 %721
    %s724 = sor.u32 256, 8
    %725 = vbcast.lane.b32.xlu0 %v719, %s724
    %v726 = vpop.permute.xlu0 %725
    %v727 = vcombine.low %v29, %v51
    %v728 = vcombine.high %v29, %v51
    %v730 = vunpack.c.l.s4 1983009808
    %v731 = vunpack.c.0.s8 %v730
    %v732 = vlaneseq
    %v733 = vshrl.u32 %v732, 7
    %v734 = vsub.s32 %v731, %v733
    %v735 = vrot.slane %v727, %v734
    %v737 = vunpack.c.l.s4 1983009808
    %v738 = vunpack.c.0.s8 %v737
    %v739 = vlaneseq
    %v740 = vshrl.u32 %v739, 7
    %v741 = vsub.s32 %v738, %v740
    %v742 = vrot.slane %v728, %v741
    %v743 = vcombine.low %v40, %v62
    %v744 = vcombine.high %v40, %v62
    %v746 = vunpack.c.l.s4 1983009808
    %v747 = vunpack.c.0.s8 %v746
    %v748 = vlaneseq
    %v749 = vshrl.u32 %v748, 7
    %v750 = vsub.s32 %v747, %v749
    %v751 = vrot.slane %v743, %v750
    %v753 = vunpack.c.l.s4 1983009808
    %v754 = vunpack.c.0.s8 %v753
    %v755 = vlaneseq
    %v756 = vshrl.u32 %v755, 7
    %v757 = vsub.s32 %v754, %v756
    %v758 = vrot.slane %v744, %v757
    %v759 = vcombine.low %v73, %v95
    %v760 = vcombine.high %v73, %v95
    %v762 = vunpack.c.l.s4 1983009808
    %v763 = vunpack.c.0.s8 %v762
    %v764 = vlaneseq
    %v765 = vshrl.u32 %v764, 7
    %v766 = vsub.s32 %v763, %v765
    %v767 = vrot.slane %v759, %v766
    %v769 = vunpack.c.l.s4 1983009808
    %v770 = vunpack.c.0.s8 %v769
    %v771 = vlaneseq
    %v772 = vshrl.u32 %v771, 7
    %v773 = vsub.s32 %v770, %v772
    %v774 = vrot.slane %v760, %v773
    %v775 = vcombine.low %v84, %v106
    %v776 = vcombine.high %v84, %v106
    %v778 = vunpack.c.l.s4 1983009808
    %v779 = vunpack.c.0.s8 %v778
    %v780 = vlaneseq
    %v781 = vshrl.u32 %v780, 7
    %v782 = vsub.s32 %v779, %v781
    %v783 = vrot.slane %v775, %v782
    %v785 = vunpack.c.l.s4 1983009808
    %v786 = vunpack.c.0.s8 %v785
    %v787 = vlaneseq
    %v788 = vshrl.u32 %v787, 7
    %v789 = vsub.s32 %v786, %v788
    %v790 = vrot.slane %v776, %v789
    %v791 = vcombine.low %v735, %v751
    %v792 = vcombine.high %v735, %v751
    %v794 = vunpack.c.l.s4 1934713408
    %v795 = vunpack.c.0.s8 %v794
    %v796 = vlaneseq
    %v797 = vshrl.u32 %v796, 7
    %v798 = vsub.s32 %v795, %v797
    %v799 = vrot.slane %v791, %v798
    %v801 = vunpack.c.l.s4 1934713408
    %v802 = vunpack.c.0.s8 %v801
    %v803 = vlaneseq
    %v804 = vshrl.u32 %v803, 7
    %v805 = vsub.s32 %v802, %v804
    %v806 = vrot.slane %v792, %v805
    %v807 = vcombine.low %v742, %v758
    %v808 = vcombine.high %v742, %v758
    %v810 = vunpack.c.l.s4 1934713408
    %v811 = vunpack.c.0.s8 %v810
    %v812 = vlaneseq
    %v813 = vshrl.u32 %v812, 7
    %v814 = vsub.s32 %v811, %v813
    %v815 = vrot.slane %v807, %v814
    %v817 = vunpack.c.l.s4 1934713408
    %v818 = vunpack.c.0.s8 %v817
    %v819 = vlaneseq
    %v820 = vshrl.u32 %v819, 7
    %v821 = vsub.s32 %v818, %v820
    %v822 = vrot.slane %v808, %v821
    %v823 = vcombine.low %v767, %v783
    %v824 = vcombine.high %v767, %v783
    %v826 = vunpack.c.l.s4 1934713408
    %v827 = vunpack.c.0.s8 %v826
    %v828 = vlaneseq
    %v829 = vshrl.u32 %v828, 7
    %v830 = vsub.s32 %v827, %v829
    %v831 = vrot.slane %v823, %v830
    %v833 = vunpack.c.l.s4 1934713408
    %v834 = vunpack.c.0.s8 %v833
    %v835 = vlaneseq
    %v836 = vshrl.u32 %v835, 7
    %v837 = vsub.s32 %v834, %v836
    %v838 = vrot.slane %v824, %v837
    %v839 = vcombine.low %v774, %v790
    %v840 = vcombine.high %v774, %v790
    %v842 = vunpack.c.l.s4 1934713408
    %v843 = vunpack.c.0.s8 %v842
    %v844 = vlaneseq
    %v845 = vshrl.u32 %v844, 7
    %v846 = vsub.s32 %v843, %v845
    %v847 = vrot.slane %v839, %v846
    %v849 = vunpack.c.l.s4 1934713408
    %v850 = vunpack.c.0.s8 %v849
    %v851 = vlaneseq
    %v852 = vshrl.u32 %v851, 7
    %v853 = vsub.s32 %v850, %v852
    %v854 = vrot.slane %v840, %v853
    %v855 = vcombine.low %v799, %v831
    %v856 = vcombine.high %v799, %v831
    %v857 = vcombine.low %v806, %v838
    %v858 = vcombine.high %v806, %v838
    %v859 = vcombine.low %v815, %v847
    %v860 = vcombine.high %v815, %v847
    %v861 = vcombine.low %v822, %v854
    %v862 = vcombine.high %v822, %v854
    %v863 = vcombine.low %v117, %v139
    %v864 = vcombine.high %v117, %v139
    %v866 = vunpack.c.l.s4 1983009808
    %v867 = vunpack.c.0.s8 %v866
    %v868 = vlaneseq
    %v869 = vshrl.u32 %v868, 7
    %v870 = vsub.s32 %v867, %v869
    %v871 = vrot.slane %v863, %v870
    %v873 = vunpack.c.l.s4 1983009808
    %v874 = vunpack.c.0.s8 %v873
    %v875 = vlaneseq
    %v876 = vshrl.u32 %v875, 7
    %v877 = vsub.s32 %v874, %v876
    %v878 = vrot.slane %v864, %v877
    %v879 = vcombine.low %v128, %v150
    %v880 = vcombine.high %v128, %v150
    %v882 = vunpack.c.l.s4 1983009808
    %v883 = vunpack.c.0.s8 %v882
    %v884 = vlaneseq
    %v885 = vshrl.u32 %v884, 7
    %v886 = vsub.s32 %v883, %v885
    %v887 = vrot.slane %v879, %v886
    %v889 = vunpack.c.l.s4 1983009808
    %v890 = vunpack.c.0.s8 %v889
    %v891 = vlaneseq
    %v892 = vshrl.u32 %v891, 7
    %v893 = vsub.s32 %v890, %v892
    %v894 = vrot.slane %v880, %v893
    %v895 = vcombine.low %v161, %v183
    %v896 = vcombine.high %v161, %v183
    %v898 = vunpack.c.l.s4 1983009808
    %v899 = vunpack.c.0.s8 %v898
    %v900 = vlaneseq
    %v901 = vshrl.u32 %v900, 7
    %v902 = vsub.s32 %v899, %v901
    %v903 = vrot.slane %v895, %v902
    %v905 = vunpack.c.l.s4 1983009808
    %v906 = vunpack.c.0.s8 %v905
    %v907 = vlaneseq
    %v908 = vshrl.u32 %v907, 7
    %v909 = vsub.s32 %v906, %v908
    %v910 = vrot.slane %v896, %v909
    %v911 = vcombine.low %v172, %v194
    %v912 = vcombine.high %v172, %v194
    %v914 = vunpack.c.l.s4 1983009808
    %v915 = vunpack.c.0.s8 %v914
    %v916 = vlaneseq
    %v917 = vshrl.u32 %v916, 7
    %v918 = vsub.s32 %v915, %v917
    %v919 = vrot.slane %v911, %v918
    %v921 = vunpack.c.l.s4 1983009808
    %v922 = vunpack.c.0.s8 %v921
    %v923 = vlaneseq
    %v924 = vshrl.u32 %v923, 7
    %v925 = vsub.s32 %v922, %v924
    %v926 = vrot.slane %v912, %v925
    %v927 = vcombine.low %v871, %v887
    %v928 = vcombine.high %v871, %v887
    %v930 = vunpack.c.l.s4 1934713408
    %v931 = vunpack.c.0.s8 %v930
    %v932 = vlaneseq
    %v933 = vshrl.u32 %v932, 7
    %v934 = vsub.s32 %v931, %v933
    %v935 = vrot.slane %v927, %v934
    %v937 = vunpack.c.l.s4 1934713408
    %v938 = vunpack.c.0.s8 %v937
    %v939 = vlaneseq
    %v940 = vshrl.u32 %v939, 7
    %v941 = vsub.s32 %v938, %v940
    %v942 = vrot.slane %v928, %v941
    %v943 = vcombine.low %v878, %v894
    %v944 = vcombine.high %v878, %v894
    %v946 = vunpack.c.l.s4 1934713408
    %v947 = vunpack.c.0.s8 %v946
    %v948 = vlaneseq
    %v949 = vshrl.u32 %v948, 7
    %v950 = vsub.s32 %v947, %v949
    %v951 = vrot.slane %v943, %v950
    %v953 = vunpack.c.l.s4 1934713408
    %v954 = vunpack.c.0.s8 %v953
    %v955 = vlaneseq
    %v956 = vshrl.u32 %v955, 7
    %v957 = vsub.s32 %v954, %v956
    %v958 = vrot.slane %v944, %v957
    %v959 = vcombine.low %v903, %v919
    %v960 = vcombine.high %v903, %v919
    %v962 = vunpack.c.l.s4 1934713408
    %v963 = vunpack.c.0.s8 %v962
    %v964 = vlaneseq
    %v965 = vshrl.u32 %v964, 7
    %v966 = vsub.s32 %v963, %v965
    %v967 = vrot.slane %v959, %v966
    %v969 = vunpack.c.l.s4 1934713408
    %v970 = vunpack.c.0.s8 %v969
    %v971 = vlaneseq
    %v972 = vshrl.u32 %v971, 7
    %v973 = vsub.s32 %v970, %v972
    %v974 = vrot.slane %v960, %v973
    %v975 = vcombine.low %v910, %v926
    %v976 = vcombine.high %v910, %v926
    %v978 = vunpack.c.l.s4 1934713408
    %v979 = vunpack.c.0.s8 %v978
    %v980 = vlaneseq
    %v981 = vshrl.u32 %v980, 7
    %v982 = vsub.s32 %v979, %v981
    %v983 = vrot.slane %v975, %v982
    %v985 = vunpack.c.l.s4 1934713408
    %v986 = vunpack.c.0.s8 %v985
    %v987 = vlaneseq
    %v988 = vshrl.u32 %v987, 7
    %v989 = vsub.s32 %v986, %v988
    %v990 = vrot.slane %v976, %v989
    %v991 = vcombine.low %v935, %v967
    %v992 = vcombine.high %v935, %v967
    %v993 = vcombine.low %v942, %v974
    %v994 = vcombine.high %v942, %v974
    %v995 = vcombine.low %v951, %v983
    %v996 = vcombine.high %v951, %v983
    %v997 = vcombine.low %v958, %v990
    %v998 = vcombine.high %v958, %v990
    %v999 = vcombine.low %v205, %v227
    %v1000 = vcombine.high %v205, %v227
    %v1002 = vunpack.c.l.s4 1983009808
    %v1003 = vunpack.c.0.s8 %v1002
    %v1004 = vlaneseq
    %v1005 = vshrl.u32 %v1004, 7
    %v1006 = vsub.s32 %v1003, %v1005
    %v1007 = vrot.slane %v999, %v1006
    %v1009 = vunpack.c.l.s4 1983009808
    %v1010 = vunpack.c.0.s8 %v1009
    %v1011 = vlaneseq
    %v1012 = vshrl.u32 %v1011, 7
    %v1013 = vsub.s32 %v1010, %v1012
    %v1014 = vrot.slane %v1000, %v1013
    %v1015 = vcombine.low %v216, %v238
    %v1016 = vcombine.high %v216, %v238
    %v1018 = vunpack.c.l.s4 1983009808
    %v1019 = vunpack.c.0.s8 %v1018
    %v1020 = vlaneseq
    %v1021 = vshrl.u32 %v1020, 7
    %v1022 = vsub.s32 %v1019, %v1021
    %v1023 = vrot.slane %v1015, %v1022
    %v1025 = vunpack.c.l.s4 1983009808
    %v1026 = vunpack.c.0.s8 %v1025
    %v1027 = vlaneseq
    %v1028 = vshrl.u32 %v1027, 7
    %v1029 = vsub.s32 %v1026, %v1028
    %v1030 = vrot.slane %v1016, %v1029
    %v1031 = vcombine.low %v249, %v271
    %v1032 = vcombine.high %v249, %v271
    %v1034 = vunpack.c.l.s4 1983009808
    %v1035 = vunpack.c.0.s8 %v1034
    %v1036 = vlaneseq
    %v1037 = vshrl.u32 %v1036, 7
    %v1038 = vsub.s32 %v1035, %v1037
    %v1039 = vrot.slane %v1031, %v1038
    %v1041 = vunpack.c.l.s4 1983009808
    %v1042 = vunpack.c.0.s8 %v1041
    %v1043 = vlaneseq
    %v1044 = vshrl.u32 %v1043, 7
    %v1045 = vsub.s32 %v1042, %v1044
    %v1046 = vrot.slane %v1032, %v1045
    %v1047 = vcombine.low %v260, %v282
    %v1048 = vcombine.high %v260, %v282
    %v1050 = vunpack.c.l.s4 1983009808
    %v1051 = vunpack.c.0.s8 %v1050
    %v1052 = vlaneseq
    %v1053 = vshrl.u32 %v1052, 7
    %v1054 = vsub.s32 %v1051, %v1053
    %v1055 = vrot.slane %v1047, %v1054
    %v1057 = vunpack.c.l.s4 1983009808
    %v1058 = vunpack.c.0.s8 %v1057
    %v1059 = vlaneseq
    %v1060 = vshrl.u32 %v1059, 7
    %v1061 = vsub.s32 %v1058, %v1060
    %v1062 = vrot.slane %v1048, %v1061
    %v1063 = vcombine.low %v1007, %v1023
    %v1064 = vcombine.high %v1007, %v1023
    %v1066 = vunpack.c.l.s4 1934713408
    %v1067 = vunpack.c.0.s8 %v1066
    %v1068 = vlaneseq
    %v1069 = vshrl.u32 %v1068, 7
    %v1070 = vsub.s32 %v1067, %v1069
    %v1071 = vrot.slane %v1063, %v1070
    %v1073 = vunpack.c.l.s4 1934713408
    %v1074 = vunpack.c.0.s8 %v1073
    %v1075 = vlaneseq
    %v1076 = vshrl.u32 %v1075, 7
    %v1077 = vsub.s32 %v1074, %v1076
    %v1078 = vrot.slane %v1064, %v1077
    %v1079 = vcombine.low %v1014, %v1030
    %v1080 = vcombine.high %v1014, %v1030
    %v1082 = vunpack.c.l.s4 1934713408
    %v1083 = vunpack.c.0.s8 %v1082
    %v1084 = vlaneseq
    %v1085 = vshrl.u32 %v1084, 7
    %v1086 = vsub.s32 %v1083, %v1085
    %v1087 = vrot.slane %v1079, %v1086
    %v1089 = vunpack.c.l.s4 1934713408
    %v1090 = vunpack.c.0.s8 %v1089
    %v1091 = vlaneseq
    %v1092 = vshrl.u32 %v1091, 7
    %v1093 = vsub.s32 %v1090, %v1092
    %v1094 = vrot.slane %v1080, %v1093
    %v1095 = vcombine.low %v1039, %v1055
    %v1096 = vcombine.high %v1039, %v1055
    %v1098 = vunpack.c.l.s4 1934713408
    %v1099 = vunpack.c.0.s8 %v1098
    %v1100 = vlaneseq
    %v1101 = vshrl.u32 %v1100, 7
    %v1102 = vsub.s32 %v1099, %v1101
    %v1103 = vrot.slane %v1095, %v1102
    %v1105 = vunpack.c.l.s4 1934713408
    %v1106 = vunpack.c.0.s8 %v1105
    %v1107 = vlaneseq
    %v1108 = vshrl.u32 %v1107, 7
    %v1109 = vsub.s32 %v1106, %v1108
    %v1110 = vrot.slane %v1096, %v1109
    %v1111 = vcombine.low %v1046, %v1062
    %v1112 = vcombine.high %v1046, %v1062
    %v1114 = vunpack.c.l.s4 1934713408
    %v1115 = vunpack.c.0.s8 %v1114
    %v1116 = vlaneseq
    %v1117 = vshrl.u32 %v1116, 7
    %v1118 = vsub.s32 %v1115, %v1117
    %v1119 = vrot.slane %v1111, %v1118
    %v1121 = vunpack.c.l.s4 1934713408
    %v1122 = vunpack.c.0.s8 %v1121
    %v1123 = vlaneseq
    %v1124 = vshrl.u32 %v1123, 7
    %v1125 = vsub.s32 %v1122, %v1124
    %v1126 = vrot.slane %v1112, %v1125
    %v1127 = vcombine.low %v1071, %v1103
    %v1128 = vcombine.high %v1071, %v1103
    %v1129 = vcombine.low %v1078, %v1110
    %v1130 = vcombine.high %v1078, %v1110
    %v1131 = vcombine.low %v1087, %v1119
    %v1132 = vcombine.high %v1087, %v1119
    %v1133 = vcombine.low %v1094, %v1126
    %v1134 = vcombine.high %v1094, %v1126
    %v1135 = vcombine.low %v293, %v315
    %v1136 = vcombine.high %v293, %v315
    %v1138 = vunpack.c.l.s4 1983009808
    %v1139 = vunpack.c.0.s8 %v1138
    %v1140 = vlaneseq
    %v1141 = vshrl.u32 %v1140, 7
    %v1142 = vsub.s32 %v1139, %v1141
    %v1143 = vrot.slane %v1135, %v1142
    %v1145 = vunpack.c.l.s4 1983009808
    %v1146 = vunpack.c.0.s8 %v1145
    %v1147 = vlaneseq
    %v1148 = vshrl.u32 %v1147, 7
    %v1149 = vsub.s32 %v1146, %v1148
    %v1150 = vrot.slane %v1136, %v1149
    %v1151 = vcombine.low %v304, %v326
    %v1152 = vcombine.high %v304, %v326
    %v1154 = vunpack.c.l.s4 1983009808
    %v1155 = vunpack.c.0.s8 %v1154
    %v1156 = vlaneseq
    %v1157 = vshrl.u32 %v1156, 7
    %v1158 = vsub.s32 %v1155, %v1157
    %v1159 = vrot.slane %v1151, %v1158
    %v1161 = vunpack.c.l.s4 1983009808
    %v1162 = vunpack.c.0.s8 %v1161
    %v1163 = vlaneseq
    %v1164 = vshrl.u32 %v1163, 7
    %v1165 = vsub.s32 %v1162, %v1164
    %v1166 = vrot.slane %v1152, %v1165
    %v1167 = vcombine.low %v337, %v359
    %v1168 = vcombine.high %v337, %v359
    %v1170 = vunpack.c.l.s4 1983009808
    %v1171 = vunpack.c.0.s8 %v1170
    %v1172 = vlaneseq
    %v1173 = vshrl.u32 %v1172, 7
    %v1174 = vsub.s32 %v1171, %v1173
    %v1175 = vrot.slane %v1167, %v1174
    %v1177 = vunpack.c.l.s4 1983009808
    %v1178 = vunpack.c.0.s8 %v1177
    %v1179 = vlaneseq
    %v1180 = vshrl.u32 %v1179, 7
    %v1181 = vsub.s32 %v1178, %v1180
    %v1182 = vrot.slane %v1168, %v1181
    %v1183 = vcombine.low %v348, %v370
    %v1184 = vcombine.high %v348, %v370
    %v1186 = vunpack.c.l.s4 1983009808
    %v1187 = vunpack.c.0.s8 %v1186
    %v1188 = vlaneseq
    %v1189 = vshrl.u32 %v1188, 7
    %v1190 = vsub.s32 %v1187, %v1189
    %v1191 = vrot.slane %v1183, %v1190
    %v1193 = vunpack.c.l.s4 1983009808
    %v1194 = vunpack.c.0.s8 %v1193
    %v1195 = vlaneseq
    %v1196 = vshrl.u32 %v1195, 7
    %v1197 = vsub.s32 %v1194, %v1196
    %v1198 = vrot.slane %v1184, %v1197
    %v1199 = vcombine.low %v1143, %v1159
    %v1200 = vcombine.high %v1143, %v1159
    %v1202 = vunpack.c.l.s4 1934713408
    %v1203 = vunpack.c.0.s8 %v1202
    %v1204 = vlaneseq
    %v1205 = vshrl.u32 %v1204, 7
    %v1206 = vsub.s32 %v1203, %v1205
    %v1207 = vrot.slane %v1199, %v1206
    %v1209 = vunpack.c.l.s4 1934713408
    %v1210 = vunpack.c.0.s8 %v1209
    %v1211 = vlaneseq
    %v1212 = vshrl.u32 %v1211, 7
    %v1213 = vsub.s32 %v1210, %v1212
    %v1214 = vrot.slane %v1200, %v1213
    %v1215 = vcombine.low %v1150, %v1166
    %v1216 = vcombine.high %v1150, %v1166
    %v1218 = vunpack.c.l.s4 1934713408
    %v1219 = vunpack.c.0.s8 %v1218
    %v1220 = vlaneseq
    %v1221 = vshrl.u32 %v1220, 7
    %v1222 = vsub.s32 %v1219, %v1221
    %v1223 = vrot.slane %v1215, %v1222
    %v1225 = vunpack.c.l.s4 1934713408
    %v1226 = vunpack.c.0.s8 %v1225
    %v1227 = vlaneseq
    %v1228 = vshrl.u32 %v1227, 7
    %v1229 = vsub.s32 %v1226, %v1228
    %v1230 = vrot.slane %v1216, %v1229
    %v1231 = vcombine.low %v1175, %v1191
    %v1232 = vcombine.high %v1175, %v1191
    %v1234 = vunpack.c.l.s4 1934713408
    %v1235 = vunpack.c.0.s8 %v1234
    %v1236 = vlaneseq
    %v1237 = vshrl.u32 %v1236, 7
    %v1238 = vsub.s32 %v1235, %v1237
    %v1239 = vrot.slane %v1231, %v1238
    %v1241 = vunpack.c.l.s4 1934713408
    %v1242 = vunpack.c.0.s8 %v1241
    %v1243 = vlaneseq
    %v1244 = vshrl.u32 %v1243, 7
    %v1245 = vsub.s32 %v1242, %v1244
    %v1246 = vrot.slane %v1232, %v1245
    %v1247 = vcombine.low %v1182, %v1198
    %v1248 = vcombine.high %v1182, %v1198
    %v1250 = vunpack.c.l.s4 1934713408
    %v1251 = vunpack.c.0.s8 %v1250
    %v1252 = vlaneseq
    %v1253 = vshrl.u32 %v1252, 7
    %v1254 = vsub.s32 %v1251, %v1253
    %v1255 = vrot.slane %v1247, %v1254
    %v1257 = vunpack.c.l.s4 1934713408
    %v1258 = vunpack.c.0.s8 %v1257
    %v1259 = vlaneseq
    %v1260 = vshrl.u32 %v1259, 7
    %v1261 = vsub.s32 %v1258, %v1260
    %v1262 = vrot.slane %v1248, %v1261
    %v1263 = vcombine.low %v1207, %v1239
    %v1264 = vcombine.high %v1207, %v1239
    %v1265 = vcombine.low %v1214, %v1246
    %v1266 = vcombine.high %v1214, %v1246
    %v1267 = vcombine.low %v1223, %v1255
    %v1268 = vcombine.high %v1223, %v1255
    %v1269 = vcombine.low %v1230, %v1262
    %v1270 = vcombine.high %v1230, %v1262
    %v1271 = vcombine.low %v381, %v403
    %v1272 = vcombine.high %v381, %v403
    %v1274 = vunpack.c.l.s4 1983009808
    %v1275 = vunpack.c.0.s8 %v1274
    %v1276 = vlaneseq
    %v1277 = vshrl.u32 %v1276, 7
    %v1278 = vsub.s32 %v1275, %v1277
    %v1279 = vrot.slane %v1271, %v1278
    %v1281 = vunpack.c.l.s4 1983009808
    %v1282 = vunpack.c.0.s8 %v1281
    %v1283 = vlaneseq
    %v1284 = vshrl.u32 %v1283, 7
    %v1285 = vsub.s32 %v1282, %v1284
    %v1286 = vrot.slane %v1272, %v1285
    %v1287 = vcombine.low %v392, %v414
    %v1288 = vcombine.high %v392, %v414
    %v1290 = vunpack.c.l.s4 1983009808
    %v1291 = vunpack.c.0.s8 %v1290
    %v1292 = vlaneseq
    %v1293 = vshrl.u32 %v1292, 7
    %v1294 = vsub.s32 %v1291, %v1293
    %v1295 = vrot.slane %v1287, %v1294
    %v1297 = vunpack.c.l.s4 1983009808
    %v1298 = vunpack.c.0.s8 %v1297
    %v1299 = vlaneseq
    %v1300 = vshrl.u32 %v1299, 7
    %v1301 = vsub.s32 %v1298, %v1300
    %v1302 = vrot.slane %v1288, %v1301
    %v1303 = vcombine.low %v425, %v447
    %v1304 = vcombine.high %v425, %v447
    %v1306 = vunpack.c.l.s4 1983009808
    %v1307 = vunpack.c.0.s8 %v1306
    %v1308 = vlaneseq
    %v1309 = vshrl.u32 %v1308, 7
    %v1310 = vsub.s32 %v1307, %v1309
    %v1311 = vrot.slane %v1303, %v1310
    %v1313 = vunpack.c.l.s4 1983009808
    %v1314 = vunpack.c.0.s8 %v1313
    %v1315 = vlaneseq
    %v1316 = vshrl.u32 %v1315, 7
    %v1317 = vsub.s32 %v1314, %v1316
    %v1318 = vrot.slane %v1304, %v1317
    %v1319 = vcombine.low %v436, %v458
    %v1320 = vcombine.high %v436, %v458
    %v1322 = vunpack.c.l.s4 1983009808
    %v1323 = vunpack.c.0.s8 %v1322
    %v1324 = vlaneseq
    %v1325 = vshrl.u32 %v1324, 7
    %v1326 = vsub.s32 %v1323, %v1325
    %v1327 = vrot.slane %v1319, %v1326
    %v1329 = vunpack.c.l.s4 1983009808
    %v1330 = vunpack.c.0.s8 %v1329
    %v1331 = vlaneseq
    %v1332 = vshrl.u32 %v1331, 7
    %v1333 = vsub.s32 %v1330, %v1332
    %v1334 = vrot.slane %v1320, %v1333
    %v1335 = vcombine.low %v1279, %v1295
    %v1336 = vcombine.high %v1279, %v1295
    %v1338 = vunpack.c.l.s4 1934713408
    %v1339 = vunpack.c.0.s8 %v1338
    %v1340 = vlaneseq
    %v1341 = vshrl.u32 %v1340, 7
    %v1342 = vsub.s32 %v1339, %v1341
    %v1343 = vrot.slane %v1335, %v1342
    %v1345 = vunpack.c.l.s4 1934713408
    %v1346 = vunpack.c.0.s8 %v1345
    %v1347 = vlaneseq
    %v1348 = vshrl.u32 %v1347, 7
    %v1349 = vsub.s32 %v1346, %v1348
    %v1350 = vrot.slane %v1336, %v1349
    %v1351 = vcombine.low %v1286, %v1302
    %v1352 = vcombine.high %v1286, %v1302
    %v1354 = vunpack.c.l.s4 1934713408
    %v1355 = vunpack.c.0.s8 %v1354
    %v1356 = vlaneseq
    %v1357 = vshrl.u32 %v1356, 7
    %v1358 = vsub.s32 %v1355, %v1357
    %v1359 = vrot.slane %v1351, %v1358
    %v1361 = vunpack.c.l.s4 1934713408
    %v1362 = vunpack.c.0.s8 %v1361
    %v1363 = vlaneseq
    %v1364 = vshrl.u32 %v1363, 7
    %v1365 = vsub.s32 %v1362, %v1364
    %v1366 = vrot.slane %v1352, %v1365
    %v1367 = vcombine.low %v1311, %v1327
    %v1368 = vcombine.high %v1311, %v1327
    %v1370 = vunpack.c.l.s4 1934713408
    %v1371 = vunpack.c.0.s8 %v1370
    %v1372 = vlaneseq
    %v1373 = vshrl.u32 %v1372, 7
    %v1374 = vsub.s32 %v1371, %v1373
    %v1375 = vrot.slane %v1367, %v1374
    %v1377 = vunpack.c.l.s4 1934713408
    %v1378 = vunpack.c.0.s8 %v1377
    %v1379 = vlaneseq
    %v1380 = vshrl.u32 %v1379, 7
    %v1381 = vsub.s32 %v1378, %v1380
    %v1382 = vrot.slane %v1368, %v1381
    %v1383 = vcombine.low %v1318, %v1334
    %v1384 = vcombine.high %v1318, %v1334
    %v1386 = vunpack.c.l.s4 1934713408
    %v1387 = vunpack.c.0.s8 %v1386
    %v1388 = vlaneseq
    %v1389 = vshrl.u32 %v1388, 7
    %v1390 = vsub.s32 %v1387, %v1389
    %v1391 = vrot.slane %v1383, %v1390
    %v1393 = vunpack.c.l.s4 1934713408
    %v1394 = vunpack.c.0.s8 %v1393
    %v1395 = vlaneseq
    %v1396 = vshrl.u32 %v1395, 7
    %v1397 = vsub.s32 %v1394, %v1396
    %v1398 = vrot.slane %v1384, %v1397
    %v1399 = vcombine.low %v1343, %v1375
    %v1400 = vcombine.high %v1343, %v1375
    %v1401 = vcombine.low %v1350, %v1382
    %v1402 = vcombine.high %v1350, %v1382
    %v1403 = vcombine.low %v1359, %v1391
    %v1404 = vcombine.high %v1359, %v1391
    %v1405 = vcombine.low %v1366, %v1398
    %v1406 = vcombine.high %v1366, %v1398
    %v1407 = vcombine.low %v469, %v491
    %v1408 = vcombine.high %v469, %v491
    %v1410 = vunpack.c.l.s4 1983009808
    %v1411 = vunpack.c.0.s8 %v1410
    %v1412 = vlaneseq
    %v1413 = vshrl.u32 %v1412, 7
    %v1414 = vsub.s32 %v1411, %v1413
    %v1415 = vrot.slane %v1407, %v1414
    %v1417 = vunpack.c.l.s4 1983009808
    %v1418 = vunpack.c.0.s8 %v1417
    %v1419 = vlaneseq
    %v1420 = vshrl.u32 %v1419, 7
    %v1421 = vsub.s32 %v1418, %v1420
    %v1422 = vrot.slane %v1408, %v1421
    %v1423 = vcombine.low %v480, %v502
    %v1424 = vcombine.high %v480, %v502
    %v1426 = vunpack.c.l.s4 1983009808
    %v1427 = vunpack.c.0.s8 %v1426
    %v1428 = vlaneseq
    %v1429 = vshrl.u32 %v1428, 7
    %v1430 = vsub.s32 %v1427, %v1429
    %v1431 = vrot.slane %v1423, %v1430
    %v1433 = vunpack.c.l.s4 1983009808
    %v1434 = vunpack.c.0.s8 %v1433
    %v1435 = vlaneseq
    %v1436 = vshrl.u32 %v1435, 7
    %v1437 = vsub.s32 %v1434, %v1436
    %v1438 = vrot.slane %v1424, %v1437
    %v1439 = vcombine.low %v513, %v535
    %v1440 = vcombine.high %v513, %v535
    %v1442 = vunpack.c.l.s4 1983009808
    %v1443 = vunpack.c.0.s8 %v1442
    %v1444 = vlaneseq
    %v1445 = vshrl.u32 %v1444, 7
    %v1446 = vsub.s32 %v1443, %v1445
    %v1447 = vrot.slane %v1439, %v1446
    %v1449 = vunpack.c.l.s4 1983009808
    %v1450 = vunpack.c.0.s8 %v1449
    %v1451 = vlaneseq
    %v1452 = vshrl.u32 %v1451, 7
    %v1453 = vsub.s32 %v1450, %v1452
    %v1454 = vrot.slane %v1440, %v1453
    %v1455 = vcombine.low %v524, %v546
    %v1456 = vcombine.high %v524, %v546
    %v1458 = vunpack.c.l.s4 1983009808
    %v1459 = vunpack.c.0.s8 %v1458
    %v1460 = vlaneseq
    %v1461 = vshrl.u32 %v1460, 7
    %v1462 = vsub.s32 %v1459, %v1461
    %v1463 = vrot.slane %v1455, %v1462
    %v1465 = vunpack.c.l.s4 1983009808
    %v1466 = vunpack.c.0.s8 %v1465
    %v1467 = vlaneseq
    %v1468 = vshrl.u32 %v1467, 7
    %v1469 = vsub.s32 %v1466, %v1468
    %v1470 = vrot.slane %v1456, %v1469
    %v1471 = vcombine.low %v1415, %v1431
    %v1472 = vcombine.high %v1415, %v1431
    %v1474 = vunpack.c.l.s4 1934713408
    %v1475 = vunpack.c.0.s8 %v1474
    %v1476 = vlaneseq
    %v1477 = vshrl.u32 %v1476, 7
    %v1478 = vsub.s32 %v1475, %v1477
    %v1479 = vrot.slane %v1471, %v1478
    %v1481 = vunpack.c.l.s4 1934713408
    %v1482 = vunpack.c.0.s8 %v1481
    %v1483 = vlaneseq
    %v1484 = vshrl.u32 %v1483, 7
    %v1485 = vsub.s32 %v1482, %v1484
    %v1486 = vrot.slane %v1472, %v1485
    %v1487 = vcombine.low %v1422, %v1438
    %v1488 = vcombine.high %v1422, %v1438
    %v1490 = vunpack.c.l.s4 1934713408
    %v1491 = vunpack.c.0.s8 %v1490
    %v1492 = vlaneseq
    %v1493 = vshrl.u32 %v1492, 7
    %v1494 = vsub.s32 %v1491, %v1493
    %v1495 = vrot.slane %v1487, %v1494
    %v1497 = vunpack.c.l.s4 1934713408
    %v1498 = vunpack.c.0.s8 %v1497
    %v1499 = vlaneseq
    %v1500 = vshrl.u32 %v1499, 7
    %v1501 = vsub.s32 %v1498, %v1500
    %v1502 = vrot.slane %v1488, %v1501
    %v1503 = vcombine.low %v1447, %v1463
    %v1504 = vcombine.high %v1447, %v1463
    %v1506 = vunpack.c.l.s4 1934713408
    %v1507 = vunpack.c.0.s8 %v1506
    %v1508 = vlaneseq
    %v1509 = vshrl.u32 %v1508, 7
    %v1510 = vsub.s32 %v1507, %v1509
    %v1511 = vrot.slane %v1503, %v1510
    %v1513 = vunpack.c.l.s4 1934713408
    %v1514 = vunpack.c.0.s8 %v1513
    %v1515 = vlaneseq
    %v1516 = vshrl.u32 %v1515, 7
    %v1517 = vsub.s32 %v1514, %v1516
    %v1518 = vrot.slane %v1504, %v1517
    %v1519 = vcombine.low %v1454, %v1470
    %v1520 = vcombine.high %v1454, %v1470
    %v1522 = vunpack.c.l.s4 1934713408
    %v1523 = vunpack.c.0.s8 %v1522
    %v1524 = vlaneseq
    %v1525 = vshrl.u32 %v1524, 7
    %v1526 = vsub.s32 %v1523, %v1525
    %v1527 = vrot.slane %v1519, %v1526
    %v1529 = vunpack.c.l.s4 1934713408
    %v1530 = vunpack.c.0.s8 %v1529
    %v1531 = vlaneseq
    %v1532 = vshrl.u32 %v1531, 7
    %v1533 = vsub.s32 %v1530, %v1532
    %v1534 = vrot.slane %v1520, %v1533
    %v1535 = vcombine.low %v1479, %v1511
    %v1536 = vcombine.high %v1479, %v1511
    %v1537 = vcombine.low %v1486, %v1518
    %v1538 = vcombine.high %v1486, %v1518
    %v1539 = vcombine.low %v1495, %v1527
    %v1540 = vcombine.high %v1495, %v1527
    %v1541 = vcombine.low %v1502, %v1534
    %v1542 = vcombine.high %v1502, %v1534
    %v1543 = vcombine.low %v557, %v579
    %v1544 = vcombine.high %v557, %v579
    %v1546 = vunpack.c.l.s4 1983009808
    %v1547 = vunpack.c.0.s8 %v1546
    %v1548 = vlaneseq
    %v1549 = vshrl.u32 %v1548, 7
    %v1550 = vsub.s32 %v1547, %v1549
    %v1551 = vrot.slane %v1543, %v1550
    %v1553 = vunpack.c.l.s4 1983009808
    %v1554 = vunpack.c.0.s8 %v1553
    %v1555 = vlaneseq
    %v1556 = vshrl.u32 %v1555, 7
    %v1557 = vsub.s32 %v1554, %v1556
    %v1558 = vrot.slane %v1544, %v1557
    %v1559 = vcombine.low %v568, %v590
    %v1560 = vcombine.high %v568, %v590
    %v1562 = vunpack.c.l.s4 1983009808
    %v1563 = vunpack.c.0.s8 %v1562
    %v1564 = vlaneseq
    %v1565 = vshrl.u32 %v1564, 7
    %v1566 = vsub.s32 %v1563, %v1565
    %v1567 = vrot.slane %v1559, %v1566
    %v1569 = vunpack.c.l.s4 1983009808
    %v1570 = vunpack.c.0.s8 %v1569
    %v1571 = vlaneseq
    %v1572 = vshrl.u32 %v1571, 7
    %v1573 = vsub.s32 %v1570, %v1572
    %v1574 = vrot.slane %v1560, %v1573
    %v1575 = vcombine.low %v601, %v623
    %v1576 = vcombine.high %v601, %v623
    %v1578 = vunpack.c.l.s4 1983009808
    %v1579 = vunpack.c.0.s8 %v1578
    %v1580 = vlaneseq
    %v1581 = vshrl.u32 %v1580, 7
    %v1582 = vsub.s32 %v1579, %v1581
    %v1583 = vrot.slane %v1575, %v1582
    %v1585 = vunpack.c.l.s4 1983009808
    %v1586 = vunpack.c.0.s8 %v1585
    %v1587 = vlaneseq
    %v1588 = vshrl.u32 %v1587, 7
    %v1589 = vsub.s32 %v1586, %v1588
    %v1590 = vrot.slane %v1576, %v1589
    %v1591 = vcombine.low %v612, %v634
    %v1592 = vcombine.high %v612, %v634
    %v1594 = vunpack.c.l.s4 1983009808
    %v1595 = vunpack.c.0.s8 %v1594
    %v1596 = vlaneseq
    %v1597 = vshrl.u32 %v1596, 7
    %v1598 = vsub.s32 %v1595, %v1597
    %v1599 = vrot.slane %v1591, %v1598
    %v1601 = vunpack.c.l.s4 1983009808
    %v1602 = vunpack.c.0.s8 %v1601
    %v1603 = vlaneseq
    %v1604 = vshrl.u32 %v1603, 7
    %v1605 = vsub.s32 %v1602, %v1604
    %v1606 = vrot.slane %v1592, %v1605
    %v1607 = vcombine.low %v1551, %v1567
    %v1608 = vcombine.high %v1551, %v1567
    %v1610 = vunpack.c.l.s4 1934713408
    %v1611 = vunpack.c.0.s8 %v1610
    %v1612 = vlaneseq
    %v1613 = vshrl.u32 %v1612, 7
    %v1614 = vsub.s32 %v1611, %v1613
    %v1615 = vrot.slane %v1607, %v1614
    %v1617 = vunpack.c.l.s4 1934713408
    %v1618 = vunpack.c.0.s8 %v1617
    %v1619 = vlaneseq
    %v1620 = vshrl.u32 %v1619, 7
    %v1621 = vsub.s32 %v1618, %v1620
    %v1622 = vrot.slane %v1608, %v1621
    %v1623 = vcombine.low %v1558, %v1574
    %v1624 = vcombine.high %v1558, %v1574
    %v1626 = vunpack.c.l.s4 1934713408
    %v1627 = vunpack.c.0.s8 %v1626
    %v1628 = vlaneseq
    %v1629 = vshrl.u32 %v1628, 7
    %v1630 = vsub.s32 %v1627, %v1629
    %v1631 = vrot.slane %v1623, %v1630
    %v1633 = vunpack.c.l.s4 1934713408
    %v1634 = vunpack.c.0.s8 %v1633
    %v1635 = vlaneseq
    %v1636 = vshrl.u32 %v1635, 7
    %v1637 = vsub.s32 %v1634, %v1636
    %v1638 = vrot.slane %v1624, %v1637
    %v1639 = vcombine.low %v1583, %v1599
    %v1640 = vcombine.high %v1583, %v1599
    %v1642 = vunpack.c.l.s4 1934713408
    %v1643 = vunpack.c.0.s8 %v1642
    %v1644 = vlaneseq
    %v1645 = vshrl.u32 %v1644, 7
    %v1646 = vsub.s32 %v1643, %v1645
    %v1647 = vrot.slane %v1639, %v1646
    %v1649 = vunpack.c.l.s4 1934713408
    %v1650 = vunpack.c.0.s8 %v1649
    %v1651 = vlaneseq
    %v1652 = vshrl.u32 %v1651, 7
    %v1653 = vsub.s32 %v1650, %v1652
    %v1654 = vrot.slane %v1640, %v1653
    %v1655 = vcombine.low %v1590, %v1606
    %v1656 = vcombine.high %v1590, %v1606
    %v1658 = vunpack.c.l.s4 1934713408
    %v1659 = vunpack.c.0.s8 %v1658
    %v1660 = vlaneseq
    %v1661 = vshrl.u32 %v1660, 7
    %v1662 = vsub.s32 %v1659, %v1661
    %v1663 = vrot.slane %v1655, %v1662
    %v1665 = vunpack.c.l.s4 1934713408
    %v1666 = vunpack.c.0.s8 %v1665
    %v1667 = vlaneseq
    %v1668 = vshrl.u32 %v1667, 7
    %v1669 = vsub.s32 %v1666, %v1668
    %v1670 = vrot.slane %v1656, %v1669
    %v1671 = vcombine.low %v1615, %v1647
    %v1672 = vcombine.high %v1615, %v1647
    %v1673 = vcombine.low %v1622, %v1654
    %v1674 = vcombine.high %v1622, %v1654
    %v1675 = vcombine.low %v1631, %v1663
    %v1676 = vcombine.high %v1631, %v1663
    %v1677 = vcombine.low %v1638, %v1670
    %v1678 = vcombine.high %v1638, %v1670
    %v1679 = vcombine.low %v645, %v667
    %v1680 = vcombine.high %v645, %v667
    %v1682 = vunpack.c.l.s4 1983009808
    %v1683 = vunpack.c.0.s8 %v1682
    %v1684 = vlaneseq
    %v1685 = vshrl.u32 %v1684, 7
    %v1686 = vsub.s32 %v1683, %v1685
    %v1687 = vrot.slane %v1679, %v1686
    %v1689 = vunpack.c.l.s4 1983009808
    %v1690 = vunpack.c.0.s8 %v1689
    %v1691 = vlaneseq
    %v1692 = vshrl.u32 %v1691, 7
    %v1693 = vsub.s32 %v1690, %v1692
    %v1694 = vrot.slane %v1680, %v1693
    %v1695 = vcombine.low %v656, %v678
    %v1696 = vcombine.high %v656, %v678
    %v1698 = vunpack.c.l.s4 1983009808
    %v1699 = vunpack.c.0.s8 %v1698
    %v1700 = vlaneseq
    %v1701 = vshrl.u32 %v1700, 7
    %v1702 = vsub.s32 %v1699, %v1701
    %v1703 = vrot.slane %v1695, %v1702
    %v1705 = vunpack.c.l.s4 1983009808
    %v1706 = vunpack.c.0.s8 %v1705
    %v1707 = vlaneseq
    %v1708 = vshrl.u32 %v1707, 7
    %v1709 = vsub.s32 %v1706, %v1708
    %v1710 = vrot.slane %v1696, %v1709
    %v1711 = vcombine.low %v689, %v711
    %v1712 = vcombine.high %v689, %v711
    %v1714 = vunpack.c.l.s4 1983009808
    %v1715 = vunpack.c.0.s8 %v1714
    %v1716 = vlaneseq
    %v1717 = vshrl.u32 %v1716, 7
    %v1718 = vsub.s32 %v1715, %v1717
    %v1719 = vrot.slane %v1711, %v1718
    %v1721 = vunpack.c.l.s4 1983009808
    %v1722 = vunpack.c.0.s8 %v1721
    %v1723 = vlaneseq
    %v1724 = vshrl.u32 %v1723, 7
    %v1725 = vsub.s32 %v1722, %v1724
    %v1726 = vrot.slane %v1712, %v1725
    %v1727 = vcombine.low %v700, %v722
    %v1728 = vcombine.high %v700, %v722
    %v1730 = vunpack.c.l.s4 1983009808
    %v1731 = vunpack.c.0.s8 %v1730
    %v1732 = vlaneseq
    %v1733 = vshrl.u32 %v1732, 7
    %v1734 = vsub.s32 %v1731, %v1733
    %v1735 = vrot.slane %v1727, %v1734
    %v1737 = vunpack.c.l.s4 1983009808
    %v1738 = vunpack.c.0.s8 %v1737
    %v1739 = vlaneseq
    %v1740 = vshrl.u32 %v1739, 7
    %v1741 = vsub.s32 %v1738, %v1740
    %v1742 = vrot.slane %v1728, %v1741
    %v1743 = vcombine.low %v1687, %v1703
    %v1744 = vcombine.high %v1687, %v1703
    %v1746 = vunpack.c.l.s4 1934713408
    %v1747 = vunpack.c.0.s8 %v1746
    %v1748 = vlaneseq
    %v1749 = vshrl.u32 %v1748, 7
    %v1750 = vsub.s32 %v1747, %v1749
    %v1751 = vrot.slane %v1743, %v1750
    %v1753 = vunpack.c.l.s4 1934713408
    %v1754 = vunpack.c.0.s8 %v1753
    %v1755 = vlaneseq
    %v1756 = vshrl.u32 %v1755, 7
    %v1757 = vsub.s32 %v1754, %v1756
    %v1758 = vrot.slane %v1744, %v1757
    %v1759 = vcombine.low %v1694, %v1710
    %v1760 = vcombine.high %v1694, %v1710
    %v1762 = vunpack.c.l.s4 1934713408
    %v1763 = vunpack.c.0.s8 %v1762
    %v1764 = vlaneseq
    %v1765 = vshrl.u32 %v1764, 7
    %v1766 = vsub.s32 %v1763, %v1765
    %v1767 = vrot.slane %v1759, %v1766
    %v1769 = vunpack.c.l.s4 1934713408
    %v1770 = vunpack.c.0.s8 %v1769
    %v1771 = vlaneseq
    %v1772 = vshrl.u32 %v1771, 7
    %v1773 = vsub.s32 %v1770, %v1772
    %v1774 = vrot.slane %v1760, %v1773
    %v1775 = vcombine.low %v1719, %v1735
    %v1776 = vcombine.high %v1719, %v1735
    %v1778 = vunpack.c.l.s4 1934713408
    %v1779 = vunpack.c.0.s8 %v1778
    %v1780 = vlaneseq
    %v1781 = vshrl.u32 %v1780, 7
    %v1782 = vsub.s32 %v1779, %v1781
    %v1783 = vrot.slane %v1775, %v1782
    %v1785 = vunpack.c.l.s4 1934713408
    %v1786 = vunpack.c.0.s8 %v1785
    %v1787 = vlaneseq
    %v1788 = vshrl.u32 %v1787, 7
    %v1789 = vsub.s32 %v1786, %v1788
    %v1790 = vrot.slane %v1776, %v1789
    %v1791 = vcombine.low %v1726, %v1742
    %v1792 = vcombine.high %v1726, %v1742
    %v1794 = vunpack.c.l.s4 1934713408
    %v1795 = vunpack.c.0.s8 %v1794
    %v1796 = vlaneseq
    %v1797 = vshrl.u32 %v1796, 7
    %v1798 = vsub.s32 %v1795, %v1797
    %v1799 = vrot.slane %v1791, %v1798
    %v1801 = vunpack.c.l.s4 1934713408
    %v1802 = vunpack.c.0.s8 %v1801
    %v1803 = vlaneseq
    %v1804 = vshrl.u32 %v1803, 7
    %v1805 = vsub.s32 %v1802, %v1804
    %v1806 = vrot.slane %v1792, %v1805
    %v1807 = vcombine.low %v1751, %v1783
    %v1808 = vcombine.high %v1751, %v1783
    %v1809 = vcombine.low %v1758, %v1790
    %v1810 = vcombine.high %v1758, %v1790
    %v1811 = vcombine.low %v1767, %v1799
    %v1812 = vcombine.high %v1767, %v1799
    %v1813 = vcombine.low %v1774, %v1806
    %v1814 = vcombine.high %v1774, %v1806
    %v1815 = vcombine.low %v33, %v55
    %v1816 = vcombine.high %v33, %v55
    %v1818 = vunpack.c.l.s4 1983009808
    %v1819 = vunpack.c.0.s8 %v1818
    %v1820 = vlaneseq
    %v1821 = vshrl.u32 %v1820, 7
    %v1822 = vsub.s32 %v1819, %v1821
    %v1823 = vrot.slane %v1815, %v1822
    %v1825 = vunpack.c.l.s4 1983009808
    %v1826 = vunpack.c.0.s8 %v1825
    %v1827 = vlaneseq
    %v1828 = vshrl.u32 %v1827, 7
    %v1829 = vsub.s32 %v1826, %v1828
    %v1830 = vrot.slane %v1816, %v1829
    %v1831 = vcombine.low %v44, %v66
    %v1832 = vcombine.high %v44, %v66
    %v1834 = vunpack.c.l.s4 1983009808
    %v1835 = vunpack.c.0.s8 %v1834
    %v1836 = vlaneseq
    %v1837 = vshrl.u32 %v1836, 7
    %v1838 = vsub.s32 %v1835, %v1837
    %v1839 = vrot.slane %v1831, %v1838
    %v1841 = vunpack.c.l.s4 1983009808
    %v1842 = vunpack.c.0.s8 %v1841
    %v1843 = vlaneseq
    %v1844 = vshrl.u32 %v1843, 7
    %v1845 = vsub.s32 %v1842, %v1844
    %v1846 = vrot.slane %v1832, %v1845
    %v1847 = vcombine.low %v77, %v99
    %v1848 = vcombine.high %v77, %v99
    %v1850 = vunpack.c.l.s4 1983009808
    %v1851 = vunpack.c.0.s8 %v1850
    %v1852 = vlaneseq
    %v1853 = vshrl.u32 %v1852, 7
    %v1854 = vsub.s32 %v1851, %v1853
    %v1855 = vrot.slane %v1847, %v1854
    %v1857 = vunpack.c.l.s4 1983009808
    %v1858 = vunpack.c.0.s8 %v1857
    %v1859 = vlaneseq
    %v1860 = vshrl.u32 %v1859, 7
    %v1861 = vsub.s32 %v1858, %v1860
    %v1862 = vrot.slane %v1848, %v1861
    %v1863 = vcombine.low %v88, %v110
    %v1864 = vcombine.high %v88, %v110
    %v1866 = vunpack.c.l.s4 1983009808
    %v1867 = vunpack.c.0.s8 %v1866
    %v1868 = vlaneseq
    %v1869 = vshrl.u32 %v1868, 7
    %v1870 = vsub.s32 %v1867, %v1869
    %v1871 = vrot.slane %v1863, %v1870
    %v1873 = vunpack.c.l.s4 1983009808
    %v1874 = vunpack.c.0.s8 %v1873
    %v1875 = vlaneseq
    %v1876 = vshrl.u32 %v1875, 7
    %v1877 = vsub.s32 %v1874, %v1876
    %v1878 = vrot.slane %v1864, %v1877
    %v1879 = vcombine.low %v1823, %v1839
    %v1880 = vcombine.high %v1823, %v1839
    %v1882 = vunpack.c.l.s4 1934713408
    %v1883 = vunpack.c.0.s8 %v1882
    %v1884 = vlaneseq
    %v1885 = vshrl.u32 %v1884, 7
    %v1886 = vsub.s32 %v1883, %v1885
    %v1887 = vrot.slane %v1879, %v1886
    %v1889 = vunpack.c.l.s4 1934713408
    %v1890 = vunpack.c.0.s8 %v1889
    %v1891 = vlaneseq
    %v1892 = vshrl.u32 %v1891, 7
    %v1893 = vsub.s32 %v1890, %v1892
    %v1894 = vrot.slane %v1880, %v1893
    %v1895 = vcombine.low %v1830, %v1846
    %v1896 = vcombine.high %v1830, %v1846
    %v1898 = vunpack.c.l.s4 1934713408
    %v1899 = vunpack.c.0.s8 %v1898
    %v1900 = vlaneseq
    %v1901 = vshrl.u32 %v1900, 7
    %v1902 = vsub.s32 %v1899, %v1901
    %v1903 = vrot.slane %v1895, %v1902
    %v1905 = vunpack.c.l.s4 1934713408
    %v1906 = vunpack.c.0.s8 %v1905
    %v1907 = vlaneseq
    %v1908 = vshrl.u32 %v1907, 7
    %v1909 = vsub.s32 %v1906, %v1908
    %v1910 = vrot.slane %v1896, %v1909
    %v1911 = vcombine.low %v1855, %v1871
    %v1912 = vcombine.high %v1855, %v1871
    %v1914 = vunpack.c.l.s4 1934713408
    %v1915 = vunpack.c.0.s8 %v1914
    %v1916 = vlaneseq
    %v1917 = vshrl.u32 %v1916, 7
    %v1918 = vsub.s32 %v1915, %v1917
    %v1919 = vrot.slane %v1911, %v1918
    %v1921 = vunpack.c.l.s4 1934713408
    %v1922 = vunpack.c.0.s8 %v1921
    %v1923 = vlaneseq
    %v1924 = vshrl.u32 %v1923, 7
    %v1925 = vsub.s32 %v1922, %v1924
    %v1926 = vrot.slane %v1912, %v1925
    %v1927 = vcombine.low %v1862, %v1878
    %v1928 = vcombine.high %v1862, %v1878
    %v1930 = vunpack.c.l.s4 1934713408
    %v1931 = vunpack.c.0.s8 %v1930
    %v1932 = vlaneseq
    %v1933 = vshrl.u32 %v1932, 7
    %v1934 = vsub.s32 %v1931, %v1933
    %v1935 = vrot.slane %v1927, %v1934
    %v1937 = vunpack.c.l.s4 1934713408
    %v1938 = vunpack.c.0.s8 %v1937
    %v1939 = vlaneseq
    %v1940 = vshrl.u32 %v1939, 7
    %v1941 = vsub.s32 %v1938, %v1940
    %v1942 = vrot.slane %v1928, %v1941
    %v1943 = vcombine.low %v1887, %v1919
    %v1944 = vcombine.high %v1887, %v1919
    %v1945 = vcombine.low %v1894, %v1926
    %v1946 = vcombine.high %v1894, %v1926
    %v1947 = vcombine.low %v1903, %v1935
    %v1948 = vcombine.high %v1903, %v1935
    %v1949 = vcombine.low %v1910, %v1942
    %v1950 = vcombine.high %v1910, %v1942
    %v1951 = vcombine.low %v121, %v143
    %v1952 = vcombine.high %v121, %v143
    %v1954 = vunpack.c.l.s4 1983009808
    %v1955 = vunpack.c.0.s8 %v1954
    %v1956 = vlaneseq
    %v1957 = vshrl.u32 %v1956, 7
    %v1958 = vsub.s32 %v1955, %v1957
    %v1959 = vrot.slane %v1951, %v1958
    %v1961 = vunpack.c.l.s4 1983009808
    %v1962 = vunpack.c.0.s8 %v1961
    %v1963 = vlaneseq
    %v1964 = vshrl.u32 %v1963, 7
    %v1965 = vsub.s32 %v1962, %v1964
    %v1966 = vrot.slane %v1952, %v1965
    %v1967 = vcombine.low %v132, %v154
    %v1968 = vcombine.high %v132, %v154
    %v1970 = vunpack.c.l.s4 1983009808
    %v1971 = vunpack.c.0.s8 %v1970
    %v1972 = vlaneseq
    %v1973 = vshrl.u32 %v1972, 7
    %v1974 = vsub.s32 %v1971, %v1973
    %v1975 = vrot.slane %v1967, %v1974
    %v1977 = vunpack.c.l.s4 1983009808
    %v1978 = vunpack.c.0.s8 %v1977
    %v1979 = vlaneseq
    %v1980 = vshrl.u32 %v1979, 7
    %v1981 = vsub.s32 %v1978, %v1980
    %v1982 = vrot.slane %v1968, %v1981
    %v1983 = vcombine.low %v165, %v187
    %v1984 = vcombine.high %v165, %v187
    %v1986 = vunpack.c.l.s4 1983009808
    %v1987 = vunpack.c.0.s8 %v1986
    %v1988 = vlaneseq
    %v1989 = vshrl.u32 %v1988, 7
    %v1990 = vsub.s32 %v1987, %v1989
    %v1991 = vrot.slane %v1983, %v1990
    %v1993 = vunpack.c.l.s4 1983009808
    %v1994 = vunpack.c.0.s8 %v1993
    %v1995 = vlaneseq
    %v1996 = vshrl.u32 %v1995, 7
    %v1997 = vsub.s32 %v1994, %v1996
    %v1998 = vrot.slane %v1984, %v1997
    %v1999 = vcombine.low %v176, %v198
    %v2000 = vcombine.high %v176, %v198
    %v2002 = vunpack.c.l.s4 1983009808
    %v2003 = vunpack.c.0.s8 %v2002
    %v2004 = vlaneseq
    %v2005 = vshrl.u32 %v2004, 7
    %v2006 = vsub.s32 %v2003, %v2005
    %v2007 = vrot.slane %v1999, %v2006
    %v2009 = vunpack.c.l.s4 1983009808
    %v2010 = vunpack.c.0.s8 %v2009
    %v2011 = vlaneseq
    %v2012 = vshrl.u32 %v2011, 7
    %v2013 = vsub.s32 %v2010, %v2012
    %v2014 = vrot.slane %v2000, %v2013
    %v2015 = vcombine.low %v1959, %v1975
    %v2016 = vcombine.high %v1959, %v1975
    %v2018 = vunpack.c.l.s4 1934713408
    %v2019 = vunpack.c.0.s8 %v2018
    %v2020 = vlaneseq
    %v2021 = vshrl.u32 %v2020, 7
    %v2022 = vsub.s32 %v2019, %v2021
    %v2023 = vrot.slane %v2015, %v2022
    %v2025 = vunpack.c.l.s4 1934713408
    %v2026 = vunpack.c.0.s8 %v2025
    %v2027 = vlaneseq
    %v2028 = vshrl.u32 %v2027, 7
    %v2029 = vsub.s32 %v2026, %v2028
    %v2030 = vrot.slane %v2016, %v2029
    %v2031 = vcombine.low %v1966, %v1982
    %v2032 = vcombine.high %v1966, %v1982
    %v2034 = vunpack.c.l.s4 1934713408
    %v2035 = vunpack.c.0.s8 %v2034
    %v2036 = vlaneseq
    %v2037 = vshrl.u32 %v2036, 7
    %v2038 = vsub.s32 %v2035, %v2037
    %v2039 = vrot.slane %v2031, %v2038
    %v2041 = vunpack.c.l.s4 1934713408
    %v2042 = vunpack.c.0.s8 %v2041
    %v2043 = vlaneseq
    %v2044 = vshrl.u32 %v2043, 7
    %v2045 = vsub.s32 %v2042, %v2044
    %v2046 = vrot.slane %v2032, %v2045
    %v2047 = vcombine.low %v1991, %v2007
    %v2048 = vcombine.high %v1991, %v2007
    %v2050 = vunpack.c.l.s4 1934713408
    %v2051 = vunpack.c.0.s8 %v2050
    %v2052 = vlaneseq
    %v2053 = vshrl.u32 %v2052, 7
    %v2054 = vsub.s32 %v2051, %v2053
    %v2055 = vrot.slane %v2047, %v2054
    %v2057 = vunpack.c.l.s4 1934713408
    %v2058 = vunpack.c.0.s8 %v2057
    %v2059 = vlaneseq
    %v2060 = vshrl.u32 %v2059, 7
    %v2061 = vsub.s32 %v2058, %v2060
    %v2062 = vrot.slane %v2048, %v2061
    %v2063 = vcombine.low %v1998, %v2014
    %v2064 = vcombine.high %v1998, %v2014
    %v2066 = vunpack.c.l.s4 1934713408
    %v2067 = vunpack.c.0.s8 %v2066
    %v2068 = vlaneseq
    %v2069 = vshrl.u32 %v2068, 7
    %v2070 = vsub.s32 %v2067, %v2069
    %v2071 = vrot.slane %v2063, %v2070
    %v2073 = vunpack.c.l.s4 1934713408
    %v2074 = vunpack.c.0.s8 %v2073
    %v2075 = vlaneseq
    %v2076 = vshrl.u32 %v2075, 7
    %v2077 = vsub.s32 %v2074, %v2076
    %v2078 = vrot.slane %v2064, %v2077
    %v2079 = vcombine.low %v2023, %v2055
    %v2080 = vcombine.high %v2023, %v2055
    %v2081 = vcombine.low %v2030, %v2062
    %v2082 = vcombine.high %v2030, %v2062
    %v2083 = vcombine.low %v2039, %v2071
    %v2084 = vcombine.high %v2039, %v2071
    %v2085 = vcombine.low %v2046, %v2078
    %v2086 = vcombine.high %v2046, %v2078
    %v2087 = vcombine.low %v209, %v231
    %v2088 = vcombine.high %v209, %v231
    %v2090 = vunpack.c.l.s4 1983009808
    %v2091 = vunpack.c.0.s8 %v2090
    %v2092 = vlaneseq
    %v2093 = vshrl.u32 %v2092, 7
    %v2094 = vsub.s32 %v2091, %v2093
    %v2095 = vrot.slane %v2087, %v2094
    %v2097 = vunpack.c.l.s4 1983009808
    %v2098 = vunpack.c.0.s8 %v2097
    %v2099 = vlaneseq
    %v2100 = vshrl.u32 %v2099, 7
    %v2101 = vsub.s32 %v2098, %v2100
    %v2102 = vrot.slane %v2088, %v2101
    %v2103 = vcombine.low %v220, %v242
    %v2104 = vcombine.high %v220, %v242
    %v2106 = vunpack.c.l.s4 1983009808
    %v2107 = vunpack.c.0.s8 %v2106
    %v2108 = vlaneseq
    %v2109 = vshrl.u32 %v2108, 7
    %v2110 = vsub.s32 %v2107, %v2109
    %v2111 = vrot.slane %v2103, %v2110
    %v2113 = vunpack.c.l.s4 1983009808
    %v2114 = vunpack.c.0.s8 %v2113
    %v2115 = vlaneseq
    %v2116 = vshrl.u32 %v2115, 7
    %v2117 = vsub.s32 %v2114, %v2116
    %v2118 = vrot.slane %v2104, %v2117
    %v2119 = vcombine.low %v253, %v275
    %v2120 = vcombine.high %v253, %v275
    %v2122 = vunpack.c.l.s4 1983009808
    %v2123 = vunpack.c.0.s8 %v2122
    %v2124 = vlaneseq
    %v2125 = vshrl.u32 %v2124, 7
    %v2126 = vsub.s32 %v2123, %v2125
    %v2127 = vrot.slane %v2119, %v2126
    %v2129 = vunpack.c.l.s4 1983009808
    %v2130 = vunpack.c.0.s8 %v2129
    %v2131 = vlaneseq
    %v2132 = vshrl.u32 %v2131, 7
    %v2133 = vsub.s32 %v2130, %v2132
    %v2134 = vrot.slane %v2120, %v2133
    %v2135 = vcombine.low %v264, %v286
    %v2136 = vcombine.high %v264, %v286
    %v2138 = vunpack.c.l.s4 1983009808
    %v2139 = vunpack.c.0.s8 %v2138
    %v2140 = vlaneseq
    %v2141 = vshrl.u32 %v2140, 7
    %v2142 = vsub.s32 %v2139, %v2141
    %v2143 = vrot.slane %v2135, %v2142
    %v2145 = vunpack.c.l.s4 1983009808
    %v2146 = vunpack.c.0.s8 %v2145
    %v2147 = vlaneseq
    %v2148 = vshrl.u32 %v2147, 7
    %v2149 = vsub.s32 %v2146, %v2148
    %v2150 = vrot.slane %v2136, %v2149
    %v2151 = vcombine.low %v2095, %v2111
    %v2152 = vcombine.high %v2095, %v2111
    %v2154 = vunpack.c.l.s4 1934713408
    %v2155 = vunpack.c.0.s8 %v2154
    %v2156 = vlaneseq
    %v2157 = vshrl.u32 %v2156, 7
    %v2158 = vsub.s32 %v2155, %v2157
    %v2159 = vrot.slane %v2151, %v2158
    %v2161 = vunpack.c.l.s4 1934713408
    %v2162 = vunpack.c.0.s8 %v2161
    %v2163 = vlaneseq
    %v2164 = vshrl.u32 %v2163, 7
    %v2165 = vsub.s32 %v2162, %v2164
    %v2166 = vrot.slane %v2152, %v2165
    %v2167 = vcombine.low %v2102, %v2118
    %v2168 = vcombine.high %v2102, %v2118
    %v2170 = vunpack.c.l.s4 1934713408
    %v2171 = vunpack.c.0.s8 %v2170
    %v2172 = vlaneseq
    %v2173 = vshrl.u32 %v2172, 7
    %v2174 = vsub.s32 %v2171, %v2173
    %v2175 = vrot.slane %v2167, %v2174
    %v2177 = vunpack.c.l.s4 1934713408
    %v2178 = vunpack.c.0.s8 %v2177
    %v2179 = vlaneseq
    %v2180 = vshrl.u32 %v2179, 7
    %v2181 = vsub.s32 %v2178, %v2180
    %v2182 = vrot.slane %v2168, %v2181
    %v2183 = vcombine.low %v2127, %v2143
    %v2184 = vcombine.high %v2127, %v2143
    %v2186 = vunpack.c.l.s4 1934713408
    %v2187 = vunpack.c.0.s8 %v2186
    %v2188 = vlaneseq
    %v2189 = vshrl.u32 %v2188, 7
    %v2190 = vsub.s32 %v2187, %v2189
    %v2191 = vrot.slane %v2183, %v2190
    %v2193 = vunpack.c.l.s4 1934713408
    %v2194 = vunpack.c.0.s8 %v2193
    %v2195 = vlaneseq
    %v2196 = vshrl.u32 %v2195, 7
    %v2197 = vsub.s32 %v2194, %v2196
    %v2198 = vrot.slane %v2184, %v2197
    %v2199 = vcombine.low %v2134, %v2150
    %v2200 = vcombine.high %v2134, %v2150
    %v2202 = vunpack.c.l.s4 1934713408
    %v2203 = vunpack.c.0.s8 %v2202
    %v2204 = vlaneseq
    %v2205 = vshrl.u32 %v2204, 7
    %v2206 = vsub.s32 %v2203, %v2205
    %v2207 = vrot.slane %v2199, %v2206
    %v2209 = vunpack.c.l.s4 1934713408
    %v2210 = vunpack.c.0.s8 %v2209
    %v2211 = vlaneseq
    %v2212 = vshrl.u32 %v2211, 7
    %v2213 = vsub.s32 %v2210, %v2212
    %v2214 = vrot.slane %v2200, %v2213
    %v2215 = vcombine.low %v2159, %v2191
    %v2216 = vcombine.high %v2159, %v2191
    %v2217 = vcombine.low %v2166, %v2198
    %v2218 = vcombine.high %v2166, %v2198
    %v2219 = vcombine.low %v2175, %v2207
    %v2220 = vcombine.high %v2175, %v2207
    %v2221 = vcombine.low %v2182, %v2214
    %v2222 = vcombine.high %v2182, %v2214
    %v2223 = vcombine.low %v297, %v319
    %v2224 = vcombine.high %v297, %v319
    %v2226 = vunpack.c.l.s4 1983009808
    %v2227 = vunpack.c.0.s8 %v2226
    %v2228 = vlaneseq
    %v2229 = vshrl.u32 %v2228, 7
    %v2230 = vsub.s32 %v2227, %v2229
    %v2231 = vrot.slane %v2223, %v2230
    %v2233 = vunpack.c.l.s4 1983009808
    %v2234 = vunpack.c.0.s8 %v2233
    %v2235 = vlaneseq
    %v2236 = vshrl.u32 %v2235, 7
    %v2237 = vsub.s32 %v2234, %v2236
    %v2238 = vrot.slane %v2224, %v2237
    %v2239 = vcombine.low %v308, %v330
    %v2240 = vcombine.high %v308, %v330
    %v2242 = vunpack.c.l.s4 1983009808
    %v2243 = vunpack.c.0.s8 %v2242
    %v2244 = vlaneseq
    %v2245 = vshrl.u32 %v2244, 7
    %v2246 = vsub.s32 %v2243, %v2245
    %v2247 = vrot.slane %v2239, %v2246
    %v2249 = vunpack.c.l.s4 1983009808
    %v2250 = vunpack.c.0.s8 %v2249
    %v2251 = vlaneseq
    %v2252 = vshrl.u32 %v2251, 7
    %v2253 = vsub.s32 %v2250, %v2252
    %v2254 = vrot.slane %v2240, %v2253
    %v2255 = vcombine.low %v341, %v363
    %v2256 = vcombine.high %v341, %v363
    %v2258 = vunpack.c.l.s4 1983009808
    %v2259 = vunpack.c.0.s8 %v2258
    %v2260 = vlaneseq
    %v2261 = vshrl.u32 %v2260, 7
    %v2262 = vsub.s32 %v2259, %v2261
    %v2263 = vrot.slane %v2255, %v2262
    %v2265 = vunpack.c.l.s4 1983009808
    %v2266 = vunpack.c.0.s8 %v2265
    %v2267 = vlaneseq
    %v2268 = vshrl.u32 %v2267, 7
    %v2269 = vsub.s32 %v2266, %v2268
    %v2270 = vrot.slane %v2256, %v2269
    %v2271 = vcombine.low %v352, %v374
    %v2272 = vcombine.high %v352, %v374
    %v2274 = vunpack.c.l.s4 1983009808
    %v2275 = vunpack.c.0.s8 %v2274
    %v2276 = vlaneseq
    %v2277 = vshrl.u32 %v2276, 7
    %v2278 = vsub.s32 %v2275, %v2277
    %v2279 = vrot.slane %v2271, %v2278
    %v2281 = vunpack.c.l.s4 1983009808
    %v2282 = vunpack.c.0.s8 %v2281
    %v2283 = vlaneseq
    %v2284 = vshrl.u32 %v2283, 7
    %v2285 = vsub.s32 %v2282, %v2284
    %v2286 = vrot.slane %v2272, %v2285
    %v2287 = vcombine.low %v2231, %v2247
    %v2288 = vcombine.high %v2231, %v2247
    %v2290 = vunpack.c.l.s4 1934713408
    %v2291 = vunpack.c.0.s8 %v2290
    %v2292 = vlaneseq
    %v2293 = vshrl.u32 %v2292, 7
    %v2294 = vsub.s32 %v2291, %v2293
    %v2295 = vrot.slane %v2287, %v2294
    %v2297 = vunpack.c.l.s4 1934713408
    %v2298 = vunpack.c.0.s8 %v2297
    %v2299 = vlaneseq
    %v2300 = vshrl.u32 %v2299, 7
    %v2301 = vsub.s32 %v2298, %v2300
    %v2302 = vrot.slane %v2288, %v2301
    %v2303 = vcombine.low %v2238, %v2254
    %v2304 = vcombine.high %v2238, %v2254
    %v2306 = vunpack.c.l.s4 1934713408
    %v2307 = vunpack.c.0.s8 %v2306
    %v2308 = vlaneseq
    %v2309 = vshrl.u32 %v2308, 7
    %v2310 = vsub.s32 %v2307, %v2309
    %v2311 = vrot.slane %v2303, %v2310
    %v2313 = vunpack.c.l.s4 1934713408
    %v2314 = vunpack.c.0.s8 %v2313
    %v2315 = vlaneseq
    %v2316 = vshrl.u32 %v2315, 7
    %v2317 = vsub.s32 %v2314, %v2316
    %v2318 = vrot.slane %v2304, %v2317
    %v2319 = vcombine.low %v2263, %v2279
    %v2320 = vcombine.high %v2263, %v2279
    %v2322 = vunpack.c.l.s4 1934713408
    %v2323 = vunpack.c.0.s8 %v2322
    %v2324 = vlaneseq
    %v2325 = vshrl.u32 %v2324, 7
    %v2326 = vsub.s32 %v2323, %v2325
    %v2327 = vrot.slane %v2319, %v2326
    %v2329 = vunpack.c.l.s4 1934713408
    %v2330 = vunpack.c.0.s8 %v2329
    %v2331 = vlaneseq
    %v2332 = vshrl.u32 %v2331, 7
    %v2333 = vsub.s32 %v2330, %v2332
    %v2334 = vrot.slane %v2320, %v2333
    %v2335 = vcombine.low %v2270, %v2286
    %v2336 = vcombine.high %v2270, %v2286
    %v2338 = vunpack.c.l.s4 1934713408
    %v2339 = vunpack.c.0.s8 %v2338
    %v2340 = vlaneseq
    %v2341 = vshrl.u32 %v2340, 7
    %v2342 = vsub.s32 %v2339, %v2341
    %v2343 = vrot.slane %v2335, %v2342
    %v2345 = vunpack.c.l.s4 1934713408
    %v2346 = vunpack.c.0.s8 %v2345
    %v2347 = vlaneseq
    %v2348 = vshrl.u32 %v2347, 7
    %v2349 = vsub.s32 %v2346, %v2348
    %v2350 = vrot.slane %v2336, %v2349
    %v2351 = vcombine.low %v2295, %v2327
    %v2352 = vcombine.high %v2295, %v2327
    %v2353 = vcombine.low %v2302, %v2334
    %v2354 = vcombine.high %v2302, %v2334
    %v2355 = vcombine.low %v2311, %v2343
    %v2356 = vcombine.high %v2311, %v2343
    %v2357 = vcombine.low %v2318, %v2350
    %v2358 = vcombine.high %v2318, %v2350
    %v2359 = vcombine.low %v385, %v407
    %v2360 = vcombine.high %v385, %v407
    %v2362 = vunpack.c.l.s4 1983009808
    %v2363 = vunpack.c.0.s8 %v2362
    %v2364 = vlaneseq
    %v2365 = vshrl.u32 %v2364, 7
    %v2366 = vsub.s32 %v2363, %v2365
    %v2367 = vrot.slane %v2359, %v2366
    %v2369 = vunpack.c.l.s4 1983009808
    %v2370 = vunpack.c.0.s8 %v2369
    %v2371 = vlaneseq
    %v2372 = vshrl.u32 %v2371, 7
    %v2373 = vsub.s32 %v2370, %v2372
    %v2374 = vrot.slane %v2360, %v2373
    %v2375 = vcombine.low %v396, %v418
    %v2376 = vcombine.high %v396, %v418
    %v2378 = vunpack.c.l.s4 1983009808
    %v2379 = vunpack.c.0.s8 %v2378
    %v2380 = vlaneseq
    %v2381 = vshrl.u32 %v2380, 7
    %v2382 = vsub.s32 %v2379, %v2381
    %v2383 = vrot.slane %v2375, %v2382
    %v2385 = vunpack.c.l.s4 1983009808
    %v2386 = vunpack.c.0.s8 %v2385
    %v2387 = vlaneseq
    %v2388 = vshrl.u32 %v2387, 7
    %v2389 = vsub.s32 %v2386, %v2388
    %v2390 = vrot.slane %v2376, %v2389
    %v2391 = vcombine.low %v429, %v451
    %v2392 = vcombine.high %v429, %v451
    %v2394 = vunpack.c.l.s4 1983009808
    %v2395 = vunpack.c.0.s8 %v2394
    %v2396 = vlaneseq
    %v2397 = vshrl.u32 %v2396, 7
    %v2398 = vsub.s32 %v2395, %v2397
    %v2399 = vrot.slane %v2391, %v2398
    %v2401 = vunpack.c.l.s4 1983009808
    %v2402 = vunpack.c.0.s8 %v2401
    %v2403 = vlaneseq
    %v2404 = vshrl.u32 %v2403, 7
    %v2405 = vsub.s32 %v2402, %v2404
    %v2406 = vrot.slane %v2392, %v2405
    %v2407 = vcombine.low %v440, %v462
    %v2408 = vcombine.high %v440, %v462
    %v2410 = vunpack.c.l.s4 1983009808
    %v2411 = vunpack.c.0.s8 %v2410
    %v2412 = vlaneseq
    %v2413 = vshrl.u32 %v2412, 7
    %v2414 = vsub.s32 %v2411, %v2413
    %v2415 = vrot.slane %v2407, %v2414
    %v2417 = vunpack.c.l.s4 1983009808
    %v2418 = vunpack.c.0.s8 %v2417
    %v2419 = vlaneseq
    %v2420 = vshrl.u32 %v2419, 7
    %v2421 = vsub.s32 %v2418, %v2420
    %v2422 = vrot.slane %v2408, %v2421
    %v2423 = vcombine.low %v2367, %v2383
    %v2424 = vcombine.high %v2367, %v2383
    %v2426 = vunpack.c.l.s4 1934713408
    %v2427 = vunpack.c.0.s8 %v2426
    %v2428 = vlaneseq
    %v2429 = vshrl.u32 %v2428, 7
    %v2430 = vsub.s32 %v2427, %v2429
    %v2431 = vrot.slane %v2423, %v2430
    %v2433 = vunpack.c.l.s4 1934713408
    %v2434 = vunpack.c.0.s8 %v2433
    %v2435 = vlaneseq
    %v2436 = vshrl.u32 %v2435, 7
    %v2437 = vsub.s32 %v2434, %v2436
    %v2438 = vrot.slane %v2424, %v2437
    %v2439 = vcombine.low %v2374, %v2390
    %v2440 = vcombine.high %v2374, %v2390
    %v2442 = vunpack.c.l.s4 1934713408
    %v2443 = vunpack.c.0.s8 %v2442
    %v2444 = vlaneseq
    %v2445 = vshrl.u32 %v2444, 7
    %v2446 = vsub.s32 %v2443, %v2445
    %v2447 = vrot.slane %v2439, %v2446
    %v2449 = vunpack.c.l.s4 1934713408
    %v2450 = vunpack.c.0.s8 %v2449
    %v2451 = vlaneseq
    %v2452 = vshrl.u32 %v2451, 7
    %v2453 = vsub.s32 %v2450, %v2452
    %v2454 = vrot.slane %v2440, %v2453
    %v2455 = vcombine.low %v2399, %v2415
    %v2456 = vcombine.high %v2399, %v2415
    %v2458 = vunpack.c.l.s4 1934713408
    %v2459 = vunpack.c.0.s8 %v2458
    %v2460 = vlaneseq
    %v2461 = vshrl.u32 %v2460, 7
    %v2462 = vsub.s32 %v2459, %v2461
    %v2463 = vrot.slane %v2455, %v2462
    %v2465 = vunpack.c.l.s4 1934713408
    %v2466 = vunpack.c.0.s8 %v2465
    %v2467 = vlaneseq
    %v2468 = vshrl.u32 %v2467, 7
    %v2469 = vsub.s32 %v2466, %v2468
    %v2470 = vrot.slane %v2456, %v2469
    %v2471 = vcombine.low %v2406, %v2422
    %v2472 = vcombine.high %v2406, %v2422
    %v2474 = vunpack.c.l.s4 1934713408
    %v2475 = vunpack.c.0.s8 %v2474
    %v2476 = vlaneseq
    %v2477 = vshrl.u32 %v2476, 7
    %v2478 = vsub.s32 %v2475, %v2477
    %v2479 = vrot.slane %v2471, %v2478
    %v2481 = vunpack.c.l.s4 1934713408
    %v2482 = vunpack.c.0.s8 %v2481
    %v2483 = vlaneseq
    %v2484 = vshrl.u32 %v2483, 7
    %v2485 = vsub.s32 %v2482, %v2484
    %v2486 = vrot.slane %v2472, %v2485
    %v2487 = vcombine.low %v2431, %v2463
    %v2488 = vcombine.high %v2431, %v2463
    %v2489 = vcombine.low %v2438, %v2470
    %v2490 = vcombine.high %v2438, %v2470
    %v2491 = vcombine.low %v2447, %v2479
    %v2492 = vcombine.high %v2447, %v2479
    %v2493 = vcombine.low %v2454, %v2486
    %v2494 = vcombine.high %v2454, %v2486
    %v2495 = vcombine.low %v473, %v495
    %v2496 = vcombine.high %v473, %v495
    %v2498 = vunpack.c.l.s4 1983009808
    %v2499 = vunpack.c.0.s8 %v2498
    %v2500 = vlaneseq
    %v2501 = vshrl.u32 %v2500, 7
    %v2502 = vsub.s32 %v2499, %v2501
    %v2503 = vrot.slane %v2495, %v2502
    %v2505 = vunpack.c.l.s4 1983009808
    %v2506 = vunpack.c.0.s8 %v2505
    %v2507 = vlaneseq
    %v2508 = vshrl.u32 %v2507, 7
    %v2509 = vsub.s32 %v2506, %v2508
    %v2510 = vrot.slane %v2496, %v2509
    %v2511 = vcombine.low %v484, %v506
    %v2512 = vcombine.high %v484, %v506
    %v2514 = vunpack.c.l.s4 1983009808
    %v2515 = vunpack.c.0.s8 %v2514
    %v2516 = vlaneseq
    %v2517 = vshrl.u32 %v2516, 7
    %v2518 = vsub.s32 %v2515, %v2517
    %v2519 = vrot.slane %v2511, %v2518
    %v2521 = vunpack.c.l.s4 1983009808
    %v2522 = vunpack.c.0.s8 %v2521
    %v2523 = vlaneseq
    %v2524 = vshrl.u32 %v2523, 7
    %v2525 = vsub.s32 %v2522, %v2524
    %v2526 = vrot.slane %v2512, %v2525
    %v2527 = vcombine.low %v517, %v539
    %v2528 = vcombine.high %v517, %v539
    %v2530 = vunpack.c.l.s4 1983009808
    %v2531 = vunpack.c.0.s8 %v2530
    %v2532 = vlaneseq
    %v2533 = vshrl.u32 %v2532, 7
    %v2534 = vsub.s32 %v2531, %v2533
    %v2535 = vrot.slane %v2527, %v2534
    %v2537 = vunpack.c.l.s4 1983009808
    %v2538 = vunpack.c.0.s8 %v2537
    %v2539 = vlaneseq
    %v2540 = vshrl.u32 %v2539, 7
    %v2541 = vsub.s32 %v2538, %v2540
    %v2542 = vrot.slane %v2528, %v2541
    %v2543 = vcombine.low %v528, %v550
    %v2544 = vcombine.high %v528, %v550
    %v2546 = vunpack.c.l.s4 1983009808
    %v2547 = vunpack.c.0.s8 %v2546
    %v2548 = vlaneseq
    %v2549 = vshrl.u32 %v2548, 7
    %v2550 = vsub.s32 %v2547, %v2549
    %v2551 = vrot.slane %v2543, %v2550
    %v2553 = vunpack.c.l.s4 1983009808
    %v2554 = vunpack.c.0.s8 %v2553
    %v2555 = vlaneseq
    %v2556 = vshrl.u32 %v2555, 7
    %v2557 = vsub.s32 %v2554, %v2556
    %v2558 = vrot.slane %v2544, %v2557
    %v2559 = vcombine.low %v2503, %v2519
    %v2560 = vcombine.high %v2503, %v2519
    %v2562 = vunpack.c.l.s4 1934713408
    %v2563 = vunpack.c.0.s8 %v2562
    %v2564 = vlaneseq
    %v2565 = vshrl.u32 %v2564, 7
    %v2566 = vsub.s32 %v2563, %v2565
    %v2567 = vrot.slane %v2559, %v2566
    %v2569 = vunpack.c.l.s4 1934713408
    %v2570 = vunpack.c.0.s8 %v2569
    %v2571 = vlaneseq
    %v2572 = vshrl.u32 %v2571, 7
    %v2573 = vsub.s32 %v2570, %v2572
    %v2574 = vrot.slane %v2560, %v2573
    %v2575 = vcombine.low %v2510, %v2526
    %v2576 = vcombine.high %v2510, %v2526
    %v2578 = vunpack.c.l.s4 1934713408
    %v2579 = vunpack.c.0.s8 %v2578
    %v2580 = vlaneseq
    %v2581 = vshrl.u32 %v2580, 7
    %v2582 = vsub.s32 %v2579, %v2581
    %v2583 = vrot.slane %v2575, %v2582
    %v2585 = vunpack.c.l.s4 1934713408
    %v2586 = vunpack.c.0.s8 %v2585
    %v2587 = vlaneseq
    %v2588 = vshrl.u32 %v2587, 7
    %v2589 = vsub.s32 %v2586, %v2588
    %v2590 = vrot.slane %v2576, %v2589
    %v2591 = vcombine.low %v2535, %v2551
    %v2592 = vcombine.high %v2535, %v2551
    %v2594 = vunpack.c.l.s4 1934713408
    %v2595 = vunpack.c.0.s8 %v2594
    %v2596 = vlaneseq
    %v2597 = vshrl.u32 %v2596, 7
    %v2598 = vsub.s32 %v2595, %v2597
    %v2599 = vrot.slane %v2591, %v2598
    %v2601 = vunpack.c.l.s4 1934713408
    %v2602 = vunpack.c.0.s8 %v2601
    %v2603 = vlaneseq
    %v2604 = vshrl.u32 %v2603, 7
    %v2605 = vsub.s32 %v2602, %v2604
    %v2606 = vrot.slane %v2592, %v2605
    %v2607 = vcombine.low %v2542, %v2558
    %v2608 = vcombine.high %v2542, %v2558
    %v2610 = vunpack.c.l.s4 1934713408
    %v2611 = vunpack.c.0.s8 %v2610
    %v2612 = vlaneseq
    %v2613 = vshrl.u32 %v2612, 7
    %v2614 = vsub.s32 %v2611, %v2613
    %v2615 = vrot.slane %v2607, %v2614
    %v2617 = vunpack.c.l.s4 1934713408
    %v2618 = vunpack.c.0.s8 %v2617
    %v2619 = vlaneseq
    %v2620 = vshrl.u32 %v2619, 7
    %v2621 = vsub.s32 %v2618, %v2620
    %v2622 = vrot.slane %v2608, %v2621
    %v2623 = vcombine.low %v2567, %v2599
    %v2624 = vcombine.high %v2567, %v2599
    %v2625 = vcombine.low %v2574, %v2606
    %v2626 = vcombine.high %v2574, %v2606
    %v2627 = vcombine.low %v2583, %v2615
    %v2628 = vcombine.high %v2583, %v2615
    %v2629 = vcombine.low %v2590, %v2622
    %v2630 = vcombine.high %v2590, %v2622
    %v2631 = vcombine.low %v561, %v583
    %v2632 = vcombine.high %v561, %v583
    %v2634 = vunpack.c.l.s4 1983009808
    %v2635 = vunpack.c.0.s8 %v2634
    %v2636 = vlaneseq
    %v2637 = vshrl.u32 %v2636, 7
    %v2638 = vsub.s32 %v2635, %v2637
    %v2639 = vrot.slane %v2631, %v2638
    %v2641 = vunpack.c.l.s4 1983009808
    %v2642 = vunpack.c.0.s8 %v2641
    %v2643 = vlaneseq
    %v2644 = vshrl.u32 %v2643, 7
    %v2645 = vsub.s32 %v2642, %v2644
    %v2646 = vrot.slane %v2632, %v2645
    %v2647 = vcombine.low %v572, %v594
    %v2648 = vcombine.high %v572, %v594
    %v2650 = vunpack.c.l.s4 1983009808
    %v2651 = vunpack.c.0.s8 %v2650
    %v2652 = vlaneseq
    %v2653 = vshrl.u32 %v2652, 7
    %v2654 = vsub.s32 %v2651, %v2653
    %v2655 = vrot.slane %v2647, %v2654
    %v2657 = vunpack.c.l.s4 1983009808
    %v2658 = vunpack.c.0.s8 %v2657
    %v2659 = vlaneseq
    %v2660 = vshrl.u32 %v2659, 7
    %v2661 = vsub.s32 %v2658, %v2660
    %v2662 = vrot.slane %v2648, %v2661
    %v2663 = vcombine.low %v605, %v627
    %v2664 = vcombine.high %v605, %v627
    %v2666 = vunpack.c.l.s4 1983009808
    %v2667 = vunpack.c.0.s8 %v2666
    %v2668 = vlaneseq
    %v2669 = vshrl.u32 %v2668, 7
    %v2670 = vsub.s32 %v2667, %v2669
    %v2671 = vrot.slane %v2663, %v2670
    %v2673 = vunpack.c.l.s4 1983009808
    %v2674 = vunpack.c.0.s8 %v2673
    %v2675 = vlaneseq
    %v2676 = vshrl.u32 %v2675, 7
    %v2677 = vsub.s32 %v2674, %v2676
    %v2678 = vrot.slane %v2664, %v2677
    %v2679 = vcombine.low %v616, %v638
    %v2680 = vcombine.high %v616, %v638
    %v2682 = vunpack.c.l.s4 1983009808
    %v2683 = vunpack.c.0.s8 %v2682
    %v2684 = vlaneseq
    %v2685 = vshrl.u32 %v2684, 7
    %v2686 = vsub.s32 %v2683, %v2685
    %v2687 = vrot.slane %v2679, %v2686
    %v2689 = vunpack.c.l.s4 1983009808
    %v2690 = vunpack.c.0.s8 %v2689
    %v2691 = vlaneseq
    %v2692 = vshrl.u32 %v2691, 7
    %v2693 = vsub.s32 %v2690, %v2692
    %v2694 = vrot.slane %v2680, %v2693
    %v2695 = vcombine.low %v2639, %v2655
    %v2696 = vcombine.high %v2639, %v2655
    %v2698 = vunpack.c.l.s4 1934713408
    %v2699 = vunpack.c.0.s8 %v2698
    %v2700 = vlaneseq
    %v2701 = vshrl.u32 %v2700, 7
    %v2702 = vsub.s32 %v2699, %v2701
    %v2703 = vrot.slane %v2695, %v2702
    %v2705 = vunpack.c.l.s4 1934713408
    %v2706 = vunpack.c.0.s8 %v2705
    %v2707 = vlaneseq
    %v2708 = vshrl.u32 %v2707, 7
    %v2709 = vsub.s32 %v2706, %v2708
    %v2710 = vrot.slane %v2696, %v2709
    %v2711 = vcombine.low %v2646, %v2662
    %v2712 = vcombine.high %v2646, %v2662
    %v2714 = vunpack.c.l.s4 1934713408
    %v2715 = vunpack.c.0.s8 %v2714
    %v2716 = vlaneseq
    %v2717 = vshrl.u32 %v2716, 7
    %v2718 = vsub.s32 %v2715, %v2717
    %v2719 = vrot.slane %v2711, %v2718
    %v2721 = vunpack.c.l.s4 1934713408
    %v2722 = vunpack.c.0.s8 %v2721
    %v2723 = vlaneseq
    %v2724 = vshrl.u32 %v2723, 7
    %v2725 = vsub.s32 %v2722, %v2724
    %v2726 = vrot.slane %v2712, %v2725
    %v2727 = vcombine.low %v2671, %v2687
    %v2728 = vcombine.high %v2671, %v2687
    %v2730 = vunpack.c.l.s4 1934713408
    %v2731 = vunpack.c.0.s8 %v2730
    %v2732 = vlaneseq
    %v2733 = vshrl.u32 %v2732, 7
    %v2734 = vsub.s32 %v2731, %v2733
    %v2735 = vrot.slane %v2727, %v2734
    %v2737 = vunpack.c.l.s4 1934713408
    %v2738 = vunpack.c.0.s8 %v2737
    %v2739 = vlaneseq
    %v2740 = vshrl.u32 %v2739, 7
    %v2741 = vsub.s32 %v2738, %v2740
    %v2742 = vrot.slane %v2728, %v2741
    %v2743 = vcombine.low %v2678, %v2694
    %v2744 = vcombine.high %v2678, %v2694
    %v2746 = vunpack.c.l.s4 1934713408
    %v2747 = vunpack.c.0.s8 %v2746
    %v2748 = vlaneseq
    %v2749 = vshrl.u32 %v2748, 7
    %v2750 = vsub.s32 %v2747, %v2749
    %v2751 = vrot.slane %v2743, %v2750
    %v2753 = vunpack.c.l.s4 1934713408
    %v2754 = vunpack.c.0.s8 %v2753
    %v2755 = vlaneseq
    %v2756 = vshrl.u32 %v2755, 7
    %v2757 = vsub.s32 %v2754, %v2756
    %v2758 = vrot.slane %v2744, %v2757
    %v2759 = vcombine.low %v2703, %v2735
    %v2760 = vcombine.high %v2703, %v2735
    %v2761 = vcombine.low %v2710, %v2742
    %v2762 = vcombine.high %v2710, %v2742
    %v2763 = vcombine.low %v2719, %v2751
    %v2764 = vcombine.high %v2719, %v2751
    %v2765 = vcombine.low %v2726, %v2758
    %v2766 = vcombine.high %v2726, %v2758
    %v2767 = vcombine.low %v649, %v671
    %v2768 = vcombine.high %v649, %v671
    %v2770 = vunpack.c.l.s4 1983009808
    %v2771 = vunpack.c.0.s8 %v2770
    %v2772 = vlaneseq
    %v2773 = vshrl.u32 %v2772, 7
    %v2774 = vsub.s32 %v2771, %v2773
    %v2775 = vrot.slane %v2767, %v2774
    %v2777 = vunpack.c.l.s4 1983009808
    %v2778 = vunpack.c.0.s8 %v2777
    %v2779 = vlaneseq
    %v2780 = vshrl.u32 %v2779, 7
    %v2781 = vsub.s32 %v2778, %v2780
    %v2782 = vrot.slane %v2768, %v2781
    %v2783 = vcombine.low %v660, %v682
    %v2784 = vcombine.high %v660, %v682
    %v2786 = vunpack.c.l.s4 1983009808
    %v2787 = vunpack.c.0.s8 %v2786
    %v2788 = vlaneseq
    %v2789 = vshrl.u32 %v2788, 7
    %v2790 = vsub.s32 %v2787, %v2789
    %v2791 = vrot.slane %v2783, %v2790
    %v2793 = vunpack.c.l.s4 1983009808
    %v2794 = vunpack.c.0.s8 %v2793
    %v2795 = vlaneseq
    %v2796 = vshrl.u32 %v2795, 7
    %v2797 = vsub.s32 %v2794, %v2796
    %v2798 = vrot.slane %v2784, %v2797
    %v2799 = vcombine.low %v693, %v715
    %v2800 = vcombine.high %v693, %v715
    %v2802 = vunpack.c.l.s4 1983009808
    %v2803 = vunpack.c.0.s8 %v2802
    %v2804 = vlaneseq
    %v2805 = vshrl.u32 %v2804, 7
    %v2806 = vsub.s32 %v2803, %v2805
    %v2807 = vrot.slane %v2799, %v2806
    %v2809 = vunpack.c.l.s4 1983009808
    %v2810 = vunpack.c.0.s8 %v2809
    %v2811 = vlaneseq
    %v2812 = vshrl.u32 %v2811, 7
    %v2813 = vsub.s32 %v2810, %v2812
    %v2814 = vrot.slane %v2800, %v2813
    %v2815 = vcombine.low %v704, %v726
    %v2816 = vcombine.high %v704, %v726
    %v2818 = vunpack.c.l.s4 1983009808
    %v2819 = vunpack.c.0.s8 %v2818
    %v2820 = vlaneseq
    %v2821 = vshrl.u32 %v2820, 7
    %v2822 = vsub.s32 %v2819, %v2821
    %v2823 = vrot.slane %v2815, %v2822
    %v2825 = vunpack.c.l.s4 1983009808
    %v2826 = vunpack.c.0.s8 %v2825
    %v2827 = vlaneseq
    %v2828 = vshrl.u32 %v2827, 7
    %v2829 = vsub.s32 %v2826, %v2828
    %v2830 = vrot.slane %v2816, %v2829
    %v2831 = vcombine.low %v2775, %v2791
    %v2832 = vcombine.high %v2775, %v2791
    %v2834 = vunpack.c.l.s4 1934713408
    %v2835 = vunpack.c.0.s8 %v2834
    %v2836 = vlaneseq
    %v2837 = vshrl.u32 %v2836, 7
    %v2838 = vsub.s32 %v2835, %v2837
    %v2839 = vrot.slane %v2831, %v2838
    %v2841 = vunpack.c.l.s4 1934713408
    %v2842 = vunpack.c.0.s8 %v2841
    %v2843 = vlaneseq
    %v2844 = vshrl.u32 %v2843, 7
    %v2845 = vsub.s32 %v2842, %v2844
    %v2846 = vrot.slane %v2832, %v2845
    %v2847 = vcombine.low %v2782, %v2798
    %v2848 = vcombine.high %v2782, %v2798
    %v2850 = vunpack.c.l.s4 1934713408
    %v2851 = vunpack.c.0.s8 %v2850
    %v2852 = vlaneseq
    %v2853 = vshrl.u32 %v2852, 7
    %v2854 = vsub.s32 %v2851, %v2853
    %v2855 = vrot.slane %v2847, %v2854
    %v2857 = vunpack.c.l.s4 1934713408
    %v2858 = vunpack.c.0.s8 %v2857
    %v2859 = vlaneseq
    %v2860 = vshrl.u32 %v2859, 7
    %v2861 = vsub.s32 %v2858, %v2860
    %v2862 = vrot.slane %v2848, %v2861
    %v2863 = vcombine.low %v2807, %v2823
    %v2864 = vcombine.high %v2807, %v2823
    %v2866 = vunpack.c.l.s4 1934713408
    %v2867 = vunpack.c.0.s8 %v2866
    %v2868 = vlaneseq
    %v2869 = vshrl.u32 %v2868, 7
    %v2870 = vsub.s32 %v2867, %v2869
    %v2871 = vrot.slane %v2863, %v2870
    %v2873 = vunpack.c.l.s4 1934713408
    %v2874 = vunpack.c.0.s8 %v2873
    %v2875 = vlaneseq
    %v2876 = vshrl.u32 %v2875, 7
    %v2877 = vsub.s32 %v2874, %v2876
    %v2878 = vrot.slane %v2864, %v2877
    %v2879 = vcombine.low %v2814, %v2830
    %v2880 = vcombine.high %v2814, %v2830
    %v2882 = vunpack.c.l.s4 1934713408
    %v2883 = vunpack.c.0.s8 %v2882
    %v2884 = vlaneseq
    %v2885 = vshrl.u32 %v2884, 7
    %v2886 = vsub.s32 %v2883, %v2885
    %v2887 = vrot.slane %v2879, %v2886
    %v2889 = vunpack.c.l.s4 1934713408
    %v2890 = vunpack.c.0.s8 %v2889
    %v2891 = vlaneseq
    %v2892 = vshrl.u32 %v2891, 7
    %v2893 = vsub.s32 %v2890, %v2892
    %v2894 = vrot.slane %v2880, %v2893
    %v2895 = vcombine.low %v2839, %v2871
    %v2896 = vcombine.high %v2839, %v2871
    %v2897 = vcombine.low %v2846, %v2878
    %v2898 = vcombine.high %v2846, %v2878
    %v2899 = vcombine.low %v2855, %v2887
    %v2900 = vcombine.high %v2855, %v2887
    %v2901 = vcombine.low %v2862, %v2894
    %v2902 = vcombine.high %v2862, %v2894
    %2911 = vrot.lane.b32.xlu0 %v856, 8
    %v2912 = vpop.permute.xlu0 %2911
    %2913 = vrot.lane.b32.xlu0 %v992, 8
    %v2914 = vpop.permute.xlu0 %2913
    %2915 = vrot.lane.b32.xlu0 %v1128, 8
    %v2916 = vpop.permute.xlu0 %2915
    %2917 = vrot.lane.b32.xlu0 %v1264, 8
    %v2918 = vpop.permute.xlu0 %2917
    %2919 = vrot.lane.b32.xlu0 %v1400, 8
    %v2920 = vpop.permute.xlu0 %2919
    %2921 = vrot.lane.b32.xlu0 %v1536, 8
    %v2922 = vpop.permute.xlu0 %2921
    %2923 = vrot.lane.b32.xlu0 %v1672, 8
    %v2924 = vpop.permute.xlu0 %2923
    %2925 = vrot.lane.b32.xlu0 %v1808, 8
    %v2926 = vpop.permute.xlu0 %2925
    %2943 = vrot.lane.b32.xlu0 %v857, 16
    %v2944 = vpop.permute.xlu0 %2943
    %2945 = vrot.lane.b32.xlu0 %v993, 16
    %v2946 = vpop.permute.xlu0 %2945
    %2947 = vrot.lane.b32.xlu0 %v1129, 16
    %v2948 = vpop.permute.xlu0 %2947
    %2949 = vrot.lane.b32.xlu0 %v1265, 16
    %v2950 = vpop.permute.xlu0 %2949
    %2951 = vrot.lane.b32.xlu0 %v1401, 16
    %v2952 = vpop.permute.xlu0 %2951
    %2953 = vrot.lane.b32.xlu0 %v1537, 16
    %v2954 = vpop.permute.xlu0 %2953
    %2955 = vrot.lane.b32.xlu0 %v1673, 16
    %v2956 = vpop.permute.xlu0 %2955
    %2957 = vrot.lane.b32.xlu0 %v1809, 16
    %v2958 = vpop.permute.xlu0 %2957
    %2975 = vrot.lane.b32.xlu0 %v858, 24
    %v2976 = vpop.permute.xlu0 %2975
    %2977 = vrot.lane.b32.xlu0 %v994, 24
    %v2978 = vpop.permute.xlu0 %2977
    %2979 = vrot.lane.b32.xlu0 %v1130, 24
    %v2980 = vpop.permute.xlu0 %2979
    %2981 = vrot.lane.b32.xlu0 %v1266, 24
    %v2982 = vpop.permute.xlu0 %2981
    %2983 = vrot.lane.b32.xlu0 %v1402, 24
    %v2984 = vpop.permute.xlu0 %2983
    %2985 = vrot.lane.b32.xlu0 %v1538, 24
    %v2986 = vpop.permute.xlu0 %2985
    %2987 = vrot.lane.b32.xlu0 %v1674, 24
    %v2988 = vpop.permute.xlu0 %2987
    %2989 = vrot.lane.b32.xlu0 %v1810, 24
    %v2990 = vpop.permute.xlu0 %2989
    %3007 = vrot.lane.b32.xlu0 %v859, 32
    %v3008 = vpop.permute.xlu0 %3007
    %3009 = vrot.lane.b32.xlu0 %v995, 32
    %v3010 = vpop.permute.xlu0 %3009
    %3011 = vrot.lane.b32.xlu0 %v1131, 32
    %v3012 = vpop.permute.xlu0 %3011
    %3013 = vrot.lane.b32.xlu0 %v1267, 32
    %v3014 = vpop.permute.xlu0 %3013
    %3015 = vrot.lane.b32.xlu0 %v1403, 32
    %v3016 = vpop.permute.xlu0 %3015
    %3017 = vrot.lane.b32.xlu0 %v1539, 32
    %v3018 = vpop.permute.xlu0 %3017
    %3019 = vrot.lane.b32.xlu0 %v1675, 32
    %v3020 = vpop.permute.xlu0 %3019
    %3021 = vrot.lane.b32.xlu0 %v1811, 32
    %v3022 = vpop.permute.xlu0 %3021
    %3039 = vrot.lane.b32.xlu0 %v860, 40
    %v3040 = vpop.permute.xlu0 %3039
    %3041 = vrot.lane.b32.xlu0 %v996, 40
    %v3042 = vpop.permute.xlu0 %3041
    %3043 = vrot.lane.b32.xlu0 %v1132, 40
    %v3044 = vpop.permute.xlu0 %3043
    %3045 = vrot.lane.b32.xlu0 %v1268, 40
    %v3046 = vpop.permute.xlu0 %3045
    %3047 = vrot.lane.b32.xlu0 %v1404, 40
    %v3048 = vpop.permute.xlu0 %3047
    %3049 = vrot.lane.b32.xlu0 %v1540, 40
    %v3050 = vpop.permute.xlu0 %3049
    %3051 = vrot.lane.b32.xlu0 %v1676, 40
    %v3052 = vpop.permute.xlu0 %3051
    %3053 = vrot.lane.b32.xlu0 %v1812, 40
    %v3054 = vpop.permute.xlu0 %3053
    %3071 = vrot.lane.b32.xlu0 %v861, 48
    %v3072 = vpop.permute.xlu0 %3071
    %3073 = vrot.lane.b32.xlu0 %v997, 48
    %v3074 = vpop.permute.xlu0 %3073
    %3075 = vrot.lane.b32.xlu0 %v1133, 48
    %v3076 = vpop.permute.xlu0 %3075
    %3077 = vrot.lane.b32.xlu0 %v1269, 48
    %v3078 = vpop.permute.xlu0 %3077
    %3079 = vrot.lane.b32.xlu0 %v1405, 48
    %v3080 = vpop.permute.xlu0 %3079
    %3081 = vrot.lane.b32.xlu0 %v1541, 48
    %v3082 = vpop.permute.xlu0 %3081
    %3083 = vrot.lane.b32.xlu0 %v1677, 48
    %v3084 = vpop.permute.xlu0 %3083
    %3085 = vrot.lane.b32.xlu0 %v1813, 48
    %v3086 = vpop.permute.xlu0 %3085
    %3103 = vrot.lane.b32.xlu0 %v862, 56
    %v3104 = vpop.permute.xlu0 %3103
    %3105 = vrot.lane.b32.xlu0 %v998, 56
    %v3106 = vpop.permute.xlu0 %3105
    %3107 = vrot.lane.b32.xlu0 %v1134, 56
    %v3108 = vpop.permute.xlu0 %3107
    %3109 = vrot.lane.b32.xlu0 %v1270, 56
    %v3110 = vpop.permute.xlu0 %3109
    %3111 = vrot.lane.b32.xlu0 %v1406, 56
    %v3112 = vpop.permute.xlu0 %3111
    %3113 = vrot.lane.b32.xlu0 %v1542, 56
    %v3114 = vpop.permute.xlu0 %3113
    %3115 = vrot.lane.b32.xlu0 %v1678, 56
    %v3116 = vpop.permute.xlu0 %3115
    %3117 = vrot.lane.b32.xlu0 %v1814, 56
    %v3118 = vpop.permute.xlu0 %3117
    %3135 = vrot.lane.b32.xlu0 %v1943, 64
    %v3136 = vpop.permute.xlu0 %3135
    %3137 = vrot.lane.b32.xlu0 %v2079, 64
    %v3138 = vpop.permute.xlu0 %3137
    %3139 = vrot.lane.b32.xlu0 %v2215, 64
    %v3140 = vpop.permute.xlu0 %3139
    %3141 = vrot.lane.b32.xlu0 %v2351, 64
    %v3142 = vpop.permute.xlu0 %3141
    %3143 = vrot.lane.b32.xlu0 %v2487, 64
    %v3144 = vpop.permute.xlu0 %3143
    %3145 = vrot.lane.b32.xlu0 %v2623, 64
    %v3146 = vpop.permute.xlu0 %3145
    %3147 = vrot.lane.b32.xlu0 %v2759, 64
    %v3148 = vpop.permute.xlu0 %3147
    %3149 = vrot.lane.b32.xlu0 %v2895, 64
    %v3150 = vpop.permute.xlu0 %3149
    %3167 = vrot.lane.b32.xlu0 %v1944, 72
    %v3168 = vpop.permute.xlu0 %3167
    %3169 = vrot.lane.b32.xlu0 %v2080, 72
    %v3170 = vpop.permute.xlu0 %3169
    %3171 = vrot.lane.b32.xlu0 %v2216, 72
    %v3172 = vpop.permute.xlu0 %3171
    %3173 = vrot.lane.b32.xlu0 %v2352, 72
    %v3174 = vpop.permute.xlu0 %3173
    %3175 = vrot.lane.b32.xlu0 %v2488, 72
    %v3176 = vpop.permute.xlu0 %3175
    %3177 = vrot.lane.b32.xlu0 %v2624, 72
    %v3178 = vpop.permute.xlu0 %3177
    %3179 = vrot.lane.b32.xlu0 %v2760, 72
    %v3180 = vpop.permute.xlu0 %3179
    %3181 = vrot.lane.b32.xlu0 %v2896, 72
    %v3182 = vpop.permute.xlu0 %3181
    %3199 = vrot.lane.b32.xlu0 %v1945, 80
    %v3200 = vpop.permute.xlu0 %3199
    %3201 = vrot.lane.b32.xlu0 %v2081, 80
    %v3202 = vpop.permute.xlu0 %3201
    %3203 = vrot.lane.b32.xlu0 %v2217, 80
    %v3204 = vpop.permute.xlu0 %3203
    %3205 = vrot.lane.b32.xlu0 %v2353, 80
    %v3206 = vpop.permute.xlu0 %3205
    %3207 = vrot.lane.b32.xlu0 %v2489, 80
    %v3208 = vpop.permute.xlu0 %3207
    %3209 = vrot.lane.b32.xlu0 %v2625, 80
    %v3210 = vpop.permute.xlu0 %3209
    %3211 = vrot.lane.b32.xlu0 %v2761, 80
    %v3212 = vpop.permute.xlu0 %3211
    %3213 = vrot.lane.b32.xlu0 %v2897, 80
    %v3214 = vpop.permute.xlu0 %3213
    %3231 = vrot.lane.b32.xlu0 %v1946, 88
    %v3232 = vpop.permute.xlu0 %3231
    %3233 = vrot.lane.b32.xlu0 %v2082, 88
    %v3234 = vpop.permute.xlu0 %3233
    %3235 = vrot.lane.b32.xlu0 %v2218, 88
    %v3236 = vpop.permute.xlu0 %3235
    %3237 = vrot.lane.b32.xlu0 %v2354, 88
    %v3238 = vpop.permute.xlu0 %3237
    %3239 = vrot.lane.b32.xlu0 %v2490, 88
    %v3240 = vpop.permute.xlu0 %3239
    %3241 = vrot.lane.b32.xlu0 %v2626, 88
    %v3242 = vpop.permute.xlu0 %3241
    %3243 = vrot.lane.b32.xlu0 %v2762, 88
    %v3244 = vpop.permute.xlu0 %3243
    %3245 = vrot.lane.b32.xlu0 %v2898, 88
    %v3246 = vpop.permute.xlu0 %3245
    %3263 = vrot.lane.b32.xlu0 %v1947, 96
    %v3264 = vpop.permute.xlu0 %3263
    %3265 = vrot.lane.b32.xlu0 %v2083, 96
    %v3266 = vpop.permute.xlu0 %3265
    %3267 = vrot.lane.b32.xlu0 %v2219, 96
    %v3268 = vpop.permute.xlu0 %3267
    %3269 = vrot.lane.b32.xlu0 %v2355, 96
    %v3270 = vpop.permute.xlu0 %3269
    %3271 = vrot.lane.b32.xlu0 %v2491, 96
    %v3272 = vpop.permute.xlu0 %3271
    %3273 = vrot.lane.b32.xlu0 %v2627, 96
    %v3274 = vpop.permute.xlu0 %3273
    %3275 = vrot.lane.b32.xlu0 %v2763, 96
    %v3276 = vpop.permute.xlu0 %3275
    %3277 = vrot.lane.b32.xlu0 %v2899, 96
    %v3278 = vpop.permute.xlu0 %3277
    %3295 = vrot.lane.b32.xlu0 %v1948, 104
    %v3296 = vpop.permute.xlu0 %3295
    %3297 = vrot.lane.b32.xlu0 %v2084, 104
    %v3298 = vpop.permute.xlu0 %3297
    %3299 = vrot.lane.b32.xlu0 %v2220, 104
    %v3300 = vpop.permute.xlu0 %3299
    %3301 = vrot.lane.b32.xlu0 %v2356, 104
    %v3302 = vpop.permute.xlu0 %3301
    %3303 = vrot.lane.b32.xlu0 %v2492, 104
    %v3304 = vpop.permute.xlu0 %3303
    %3305 = vrot.lane.b32.xlu0 %v2628, 104
    %v3306 = vpop.permute.xlu0 %3305
    %3307 = vrot.lane.b32.xlu0 %v2764, 104
    %v3308 = vpop.permute.xlu0 %3307
    %3309 = vrot.lane.b32.xlu0 %v2900, 104
    %v3310 = vpop.permute.xlu0 %3309
    %3327 = vrot.lane.b32.xlu0 %v1949, 112
    %v3328 = vpop.permute.xlu0 %3327
    %3329 = vrot.lane.b32.xlu0 %v2085, 112
    %v3330 = vpop.permute.xlu0 %3329
    %3331 = vrot.lane.b32.xlu0 %v2221, 112
    %v3332 = vpop.permute.xlu0 %3331
    %3333 = vrot.lane.b32.xlu0 %v2357, 112
    %v3334 = vpop.permute.xlu0 %3333
    %3335 = vrot.lane.b32.xlu0 %v2493, 112
    %v3336 = vpop.permute.xlu0 %3335
    %3337 = vrot.lane.b32.xlu0 %v2629, 112
    %v3338 = vpop.permute.xlu0 %3337
    %3339 = vrot.lane.b32.xlu0 %v2765, 112
    %v3340 = vpop.permute.xlu0 %3339
    %3341 = vrot.lane.b32.xlu0 %v2901, 112
    %v3342 = vpop.permute.xlu0 %3341
    %3359 = vrot.lane.b32.xlu0 %v1950, 120
    %v3360 = vpop.permute.xlu0 %3359
    %3361 = vrot.lane.b32.xlu0 %v2086, 120
    %v3362 = vpop.permute.xlu0 %3361
    %3363 = vrot.lane.b32.xlu0 %v2222, 120
    %v3364 = vpop.permute.xlu0 %3363
    %3365 = vrot.lane.b32.xlu0 %v2358, 120
    %v3366 = vpop.permute.xlu0 %3365
    %3367 = vrot.lane.b32.xlu0 %v2494, 120
    %v3368 = vpop.permute.xlu0 %3367
    %3369 = vrot.lane.b32.xlu0 %v2630, 120
    %v3370 = vpop.permute.xlu0 %3369
    %3371 = vrot.lane.b32.xlu0 %v2766, 120
    %v3372 = vpop.permute.xlu0 %3371
    %3373 = vrot.lane.b32.xlu0 %v2902, 120
    %v3374 = vpop.permute.xlu0 %3373
    %vm3383 = vcmask 64512
    %v3384 = vsel %vm3383, %v855, %v2912
    %v3385 = vsel %vm3383, %v991, %v2914
    %v3386 = vsel %vm3383, %v1127, %v2916
    %v3387 = vsel %vm3383, %v1263, %v2918
    %v3388 = vsel %vm3383, %v1399, %v2920
    %v3389 = vsel %vm3383, %v1535, %v2922
    %v3390 = vsel %vm3383, %v1671, %v2924
    %v3391 = vsel %vm3383, %v1807, %v2926
    %vm3392 = vcmask 130048
    %v3393 = vsel %vm3392, %v3384, %v2944
    %v3394 = vsel %vm3392, %v3385, %v2946
    %v3395 = vsel %vm3392, %v3386, %v2948
    %v3396 = vsel %vm3392, %v3387, %v2950
    %v3397 = vsel %vm3392, %v3388, %v2952
    %v3398 = vsel %vm3392, %v3389, %v2954
    %v3399 = vsel %vm3392, %v3390, %v2956
    %v3400 = vsel %vm3392, %v3391, %v2958
    %vm3401 = vcmask 195584
    %v3402 = vsel %vm3401, %v3393, %v2976
    %v3403 = vsel %vm3401, %v3394, %v2978
    %v3404 = vsel %vm3401, %v3395, %v2980
    %v3405 = vsel %vm3401, %v3396, %v2982
    %v3406 = vsel %vm3401, %v3397, %v2984
    %v3407 = vsel %vm3401, %v3398, %v2986
    %v3408 = vsel %vm3401, %v3399, %v2988
    %v3409 = vsel %vm3401, %v3400, %v2990
    %vm3410 = vcmask 261120
    %v3411 = vsel %vm3410, %v3402, %v3008
    %v3412 = vsel %vm3410, %v3403, %v3010
    %v3413 = vsel %vm3410, %v3404, %v3012
    %v3414 = vsel %vm3410, %v3405, %v3014
    %v3415 = vsel %vm3410, %v3406, %v3016
    %v3416 = vsel %vm3410, %v3407, %v3018
    %v3417 = vsel %vm3410, %v3408, %v3020
    %v3418 = vsel %vm3410, %v3409, %v3022
    %vm3419 = vcmask 326656
    %v3420 = vsel %vm3419, %v3411, %v3040
    %v3421 = vsel %vm3419, %v3412, %v3042
    %v3422 = vsel %vm3419, %v3413, %v3044
    %v3423 = vsel %vm3419, %v3414, %v3046
    %v3424 = vsel %vm3419, %v3415, %v3048
    %v3425 = vsel %vm3419, %v3416, %v3050
    %v3426 = vsel %vm3419, %v3417, %v3052
    %v3427 = vsel %vm3419, %v3418, %v3054
    %vm3428 = vcmask 392192
    %v3429 = vsel %vm3428, %v3420, %v3072
    %v3430 = vsel %vm3428, %v3421, %v3074
    %v3431 = vsel %vm3428, %v3422, %v3076
    %v3432 = vsel %vm3428, %v3423, %v3078
    %v3433 = vsel %vm3428, %v3424, %v3080
    %v3434 = vsel %vm3428, %v3425, %v3082
    %v3435 = vsel %vm3428, %v3426, %v3084
    %v3436 = vsel %vm3428, %v3427, %v3086
    %vm3437 = vcmask 457728
    %v3438 = vsel %vm3437, %v3429, %v3104
    %v3439 = vsel %vm3437, %v3430, %v3106
    %v3440 = vsel %vm3437, %v3431, %v3108
    %v3441 = vsel %vm3437, %v3432, %v3110
    %v3442 = vsel %vm3437, %v3433, %v3112
    %v3443 = vsel %vm3437, %v3434, %v3114
    %v3444 = vsel %vm3437, %v3435, %v3116
    %v3445 = vsel %vm3437, %v3436, %v3118
    %vm3446 = vcmask 523264
    %v3447 = vsel %vm3446, %v3438, %v3136
    %v3448 = vsel %vm3446, %v3439, %v3138
    %v3449 = vsel %vm3446, %v3440, %v3140
    %v3450 = vsel %vm3446, %v3441, %v3142
    %v3451 = vsel %vm3446, %v3442, %v3144
    %v3452 = vsel %vm3446, %v3443, %v3146
    %v3453 = vsel %vm3446, %v3444, %v3148
    %v3454 = vsel %vm3446, %v3445, %v3150
    %vm3455 = vcmask 588800
    %v3456 = vsel %vm3455, %v3447, %v3168
    %v3457 = vsel %vm3455, %v3448, %v3170
    %v3458 = vsel %vm3455, %v3449, %v3172
    %v3459 = vsel %vm3455, %v3450, %v3174
    %v3460 = vsel %vm3455, %v3451, %v3176
    %v3461 = vsel %vm3455, %v3452, %v3178
    %v3462 = vsel %vm3455, %v3453, %v3180
    %v3463 = vsel %vm3455, %v3454, %v3182
    %vm3464 = vcmask 654336
    %v3465 = vsel %vm3464, %v3456, %v3200
    %v3466 = vsel %vm3464, %v3457, %v3202
    %v3467 = vsel %vm3464, %v3458, %v3204
    %v3468 = vsel %vm3464, %v3459, %v3206
    %v3469 = vsel %vm3464, %v3460, %v3208
    %v3470 = vsel %vm3464, %v3461, %v3210
    %v3471 = vsel %vm3464, %v3462, %v3212
    %v3472 = vsel %vm3464, %v3463, %v3214
    %vm3473 = vcmask 719872
    %v3474 = vsel %vm3473, %v3465, %v3232
    %v3475 = vsel %vm3473, %v3466, %v3234
    %v3476 = vsel %vm3473, %v3467, %v3236
    %v3477 = vsel %vm3473, %v3468, %v3238
    %v3478 = vsel %vm3473, %v3469, %v3240
    %v3479 = vsel %vm3473, %v3470, %v3242
    %v3480 = vsel %vm3473, %v3471, %v3244
    %v3481 = vsel %vm3473, %v3472, %v3246
    %vm3482 = vcmask 785408
    %v3483 = vsel %vm3482, %v3474, %v3264
    %v3484 = vsel %vm3482, %v3475, %v3266
    %v3485 = vsel %vm3482, %v3476, %v3268
    %v3486 = vsel %vm3482, %v3477, %v3270
    %v3487 = vsel %vm3482, %v3478, %v3272
    %v3488 = vsel %vm3482, %v3479, %v3274
    %v3489 = vsel %vm3482, %v3480, %v3276
    %v3490 = vsel %vm3482, %v3481, %v3278
    %vm3491 = vcmask 850944
    %v3492 = vsel %vm3491, %v3483, %v3296
    %v3493 = vsel %vm3491, %v3484, %v3298
    %v3494 = vsel %vm3491, %v3485, %v3300
    %v3495 = vsel %vm3491, %v3486, %v3302
    %v3496 = vsel %vm3491, %v3487, %v3304
    %v3497 = vsel %vm3491, %v3488, %v3306
    %v3498 = vsel %vm3491, %v3489, %v3308
    %v3499 = vsel %vm3491, %v3490, %v3310
    %vm3500 = vcmask 916480
    %v3501 = vsel %vm3500, %v3492, %v3328
    %v3502 = vsel %vm3500, %v3493, %v3330
    %v3503 = vsel %vm3500, %v3494, %v3332
    %v3504 = vsel %vm3500, %v3495, %v3334
    %v3505 = vsel %vm3500, %v3496, %v3336
    %v3506 = vsel %vm3500, %v3497, %v3338
    %v3507 = vsel %vm3500, %v3498, %v3340
    %v3508 = vsel %vm3500, %v3499, %v3342
    %vm3509 = vcmask 982016
    %v3510 = vsel %vm3509, %v3501, %v3360
    %v3511 = vsel %vm3509, %v3502, %v3362
    %v3512 = vsel %vm3509, %v3503, %v3364
    %v3513 = vsel %vm3509, %v3504, %v3366
    %v3514 = vsel %vm3509, %v3505, %v3368
    %v3515 = vsel %vm3509, %v3506, %v3370
    %v3516 = vsel %vm3509, %v3507, %v3372
    %v3517 = vsel %vm3509, %v3508, %v3374
    %v3518 = vld [vmem:[%s1] sm:$0x1]
    %v3520 = vlaneseq
    %v3521 = vshrl.u32 %v3520, 7
    %v3522 = vsub.s32 0, %v3521
    %v3523 = vrot.slane %v3518, %v3522
    %v3525 = vmul.f32 %v3510, %v3523
    %v3526 = vmul.f32 %v3511, %v3523
    %v3527 = vmul.f32 %v3512, %v3523
    %v3528 = vmul.f32 %v3513, %v3523
    %v3529 = vmul.f32 %v3514, %v3523
    %v3530 = vmul.f32 %v3515, %v3523
    %v3531 = vmul.f32 %v3516, %v3523
    %v3532 = vmul.f32 %v3517, %v3523
    %v3533 = vld [vmem:[%s2] sm:$0x1]
    %v3535 = vlaneseq
    %v3536 = vshrl.u32 %v3535, 7
    %v3537 = vsub.s32 0, %v3536
    %v3538 = vrot.slane %v3533, %v3537
    %v3540 = vadd.f32 %v3525, %v3538
    %v3541 = vadd.f32 %v3526, %v3538
    %v3542 = vadd.f32 %v3527, %v3538
    %v3543 = vadd.f32 %v3528, %v3538
    %v3544 = vadd.f32 %v3529, %v3538
    %v3545 = vadd.f32 %v3530, %v3538
    %v3546 = vadd.f32 %v3531, %v3538
    %v3547 = vadd.f32 %v3532, %v3538
    %v3548 = vand.u32 2147483647, %v3540
    %vm3549 = vcmp.le.f32.partialorder %v3548, 0.7853982
    %vm3550 = vcmp.lt.s32.totalorder %v3540, 0
    %v3551 = vand.u32 %v3540, 2139095040
    %v3552 = vshrl.u32 %v3551, 23
    %v3553 = vsub.s32 %v3552, 127
    %v3554 = vand.u32 2147483647, %v3540
    %v3555 = vand.u32 %v3554, 8388607
    %v3556 = vor.u32 %v3555, 8388608
    %v3557 = vsub.s32 0, %v3556
    %v3558 = vadd.s32 %v3553, 1
    %vm3559 = vcmp.gt.s32.totalorder %v3558, 0
    %v3560 = vsel %vm3559, %v3558, 0
    %v3561 = vshrl.u32 %v3560, 5
    %v3562 = vand.u32 %v3560, 31
    %v3563 = vsub.s32 32, %v3562
    %v3564 = vshrl.u32 683565275, %v3563
    %v3565 = vshll.u32 683565275, %v3562
    %v3566 = vshrl.u32 2475754826, %v3563
    %v3567 = vor.u32 %v3565, %v3566
    %v3568 = vshll.u32 2475754826, %v3562
    %v3569 = vshrl.u32 2131351028, %v3563
    %v3570 = vor.u32 %v3568, %v3569
    %v3571 = vshll.u32 2131351028, %v3562
    %v3572 = vshrl.u32 2102212464, %v3563
    %v3573 = vor.u32 %v3571, %v3572
    %v3574 = vshll.u32 2102212464, %v3562
    %v3575 = vshrl.u32 920167782, %v3563
    %v3576 = vor.u32 %v3574, %v3575
    %v3577 = vshll.u32 920167782, %v3562
    %v3578 = vshrl.u32 1326507024, %v3563
    %v3579 = vor.u32 %v3577, %v3578
    %vm3580 = vcmp.lt.s32.totalorder %v3561, 1
    %vm3581 = vcmp.lt.s32.totalorder %v3561, 2
    %vm3582 = vcmp.lt.s32.totalorder %v3561, 3
    %vm3583 = vcmp.lt.s32.totalorder %v3561, 4
    %v3584 = vsel %vm3580, %v3564, %v3567
    %v3585 = vsel %vm3583, %v3573, 2102212464
    %v3586 = vsel %vm3582, %v3570, %v3585
    %v3587 = vsel %vm3581, %v3584, %v3586
    %v3588 = vsel %vm3580, %v3567, %v3570
    %v3589 = vsel %vm3583, %v3576, 920167782
    %v3590 = vsel %vm3582, %v3573, %v3589
    %v3591 = vsel %vm3581, %v3588, %v3590
    %v3592 = vsel %vm3580, %v3570, %v3573
    %v3593 = vsel %vm3583, %v3579, 1326507024
    %v3594 = vsel %vm3582, %v3576, %v3593
    %v3595 = vsel %vm3581, %v3592, %v3594
    %v3596 = vshll.u32 %v3556, 8
    %v3597 = vmul.u32.u64.compose %v3596, %v3595
    %v3598 = vextract.low.u32 %v3597
    %v3599 = vextract.high.u32 %v3597
    %v3600 = vmul.u32.u64.compose %v3596, %v3591
    %v3601 = vextract.low.u32 %v3600
    %v3602 = vextract.high.u32 %v3600
    %v3603 = vmul.u32 %v3596, %v3587
    %v3604 = vadd.s32 %v3599, %v3601
    %vm3605 = vc.u32 %v3599, %v3601
    %v3606 = vadd.s32 %v3602, 1
    %v3607 = vsel %vm3605, %v3606, %v3602
    %v3608 = vadd.s32 %v3603, %v3607
    %v3609 = vadd.s32 %v3608, 536870912
    %v3610 = vshrl.u32 %v3609, 30
    %v3611 = vshll.u32 %v3610, 30
    %v3612 = vsub.s32 %v3608, %v3611
    %vm3613 = vcmp.lt.s32.totalorder %v3612, 0
    %v3614 = vsub.s32 0, %v3612
    %v3615 = vsel %vm3613, %v3614, %v3612
    %v3616 = vclz %v3615
    %v3617 = vsub.s32 %v3616, 2
    %vm3618 = vcmp.gt.s32.totalorder 0, %v3617
    %v3619 = vsel %vm3618, 0, %v3617
    %v3620 = vsub.s32 32, %v3619
    %v3621 = vshll.u32 %v3612, %v3619
    %v3622 = vshrl.u32 %v3604, %v3620
    %v3623 = vor.u32 %v3621, %v3622
    %v3624 = vsub.s32 4294967266, %v3619
    %v3625 = vadd.s32 %v3624, 127
    %v3626 = vshll.u32 %v3625, 23
    %v3627 = vor.u32 4788187, %v3626
    %v3628 = vand.u32 2147483647, %v3627
    %v3630 = vcvt.s32.f32 %v3623
    %v3631 = vmul.f32 %v3630, %v3628
    %v3632 = vxor.u32 %v3631, 2147483648
    %v3633 = vsel %vm3550, %v3632, %v3631
    %v3634 = vsub.s32 4, %v3610
    %v3635 = vsel %vm3550, %v3634, %v3610
    %v3636 = vsel %vm3549, %v3540, %v3633
    %v3637 = vsel %vm3549, 0, %v3635
    %v3638 = vcosq.f32.pop %v3636
    %v3639 = vsinq.f32.pop %v3636
    %vm3640 = vweird.f32 %v3540
    %v3641 = vadd.s32 %v3637, 3
    %v3642 = vand.u32 %v3641, 3
    %vm3643 = vcmp.lt.s32.totalorder %v3642, 2
    %vm3644 = vcmp.eq.s32.totalorder %v3642, 0
    %v3645 = vxor.u32 %v3639, 2147483648
    %v3646 = vsel %vm3644, %v3638, %v3645
    %vm3647 = vcmp.eq.s32.totalorder %v3642, 2
    %v3648 = vxor.u32 %v3638, 2147483648
    %v3649 = vsel %vm3647, %v3648, %v3639
    %v3650 = vsel %vm3643, %v3646, %v3649
    %v3651 = vsel %vm3640, nan, %v3650
    %v3652 = vand.u32 2147483647, %v3541
    %vm3653 = vcmp.le.f32.partialorder %v3652, 0.7853982
    %vm3654 = vcmp.lt.s32.totalorder %v3541, 0
    %v3655 = vand.u32 %v3541, 2139095040
    %v3656 = vshrl.u32 %v3655, 23
    %v3657 = vsub.s32 %v3656, 127
    %v3658 = vand.u32 2147483647, %v3541
    %v3659 = vand.u32 %v3658, 8388607
    %v3660 = vor.u32 %v3659, 8388608
    %v3661 = vsub.s32 0, %v3660
    %v3662 = vadd.s32 %v3657, 1
    %vm3663 = vcmp.gt.s32.totalorder %v3662, 0
    %v3664 = vsel %vm3663, %v3662, 0
    %v3665 = vshrl.u32 %v3664, 5
    %v3666 = vand.u32 %v3664, 31
    %v3667 = vsub.s32 32, %v3666
    %v3668 = vshrl.u32 683565275, %v3667
    %v3669 = vshll.u32 683565275, %v3666
    %v3670 = vshrl.u32 2475754826, %v3667
    %v3671 = vor.u32 %v3669, %v3670
    %v3672 = vshll.u32 2475754826, %v3666
    %v3673 = vshrl.u32 2131351028, %v3667
    %v3674 = vor.u32 %v3672, %v3673
    %v3675 = vshll.u32 2131351028, %v3666
    %v3676 = vshrl.u32 2102212464, %v3667
    %v3677 = vor.u32 %v3675, %v3676
    %v3678 = vshll.u32 2102212464, %v3666
    %v3679 = vshrl.u32 920167782, %v3667
    %v3680 = vor.u32 %v3678, %v3679
    %v3681 = vshll.u32 920167782, %v3666
    %v3682 = vshrl.u32 1326507024, %v3667
    %v3683 = vor.u32 %v3681, %v3682
    %vm3684 = vcmp.lt.s32.totalorder %v3665, 1
    %vm3685 = vcmp.lt.s32.totalorder %v3665, 2
    %vm3686 = vcmp.lt.s32.totalorder %v3665, 3
    %vm3687 = vcmp.lt.s32.totalorder %v3665, 4
    %v3688 = vsel %vm3684, %v3668, %v3671
    %v3689 = vsel %vm3687, %v3677, 2102212464
    %v3690 = vsel %vm3686, %v3674, %v3689
    %v3691 = vsel %vm3685, %v3688, %v3690
    %v3692 = vsel %vm3684, %v3671, %v3674
    %v3693 = vsel %vm3687, %v3680, 920167782
    %v3694 = vsel %vm3686, %v3677, %v3693
    %v3695 = vsel %vm3685, %v3692, %v3694
    %v3696 = vsel %vm3684, %v3674, %v3677
    %v3697 = vsel %vm3687, %v3683, 1326507024
    %v3698 = vsel %vm3686, %v3680, %v3697
    %v3699 = vsel %vm3685, %v3696, %v3698
    %v3700 = vshll.u32 %v3660, 8
    %v3701 = vmul.u32.u64.compose %v3700, %v3699
    %v3702 = vextract.low.u32 %v3701
    %v3703 = vextract.high.u32 %v3701
    %v3704 = vmul.u32.u64.compose %v3700, %v3695
    %v3705 = vextract.low.u32 %v3704
    %v3706 = vextract.high.u32 %v3704
    %v3707 = vmul.u32 %v3700, %v3691
    %v3708 = vadd.s32 %v3703, %v3705
    %vm3709 = vc.u32 %v3703, %v3705
    %v3710 = vadd.s32 %v3706, 1
    %v3711 = vsel %vm3709, %v3710, %v3706
    %v3712 = vadd.s32 %v3707, %v3711
    %v3713 = vadd.s32 %v3712, 536870912
    %v3714 = vshrl.u32 %v3713, 30
    %v3715 = vshll.u32 %v3714, 30
    %v3716 = vsub.s32 %v3712, %v3715
    %vm3717 = vcmp.lt.s32.totalorder %v3716, 0
    %v3718 = vsub.s32 0, %v3716
    %v3719 = vsel %vm3717, %v3718, %v3716
    %v3720 = vclz %v3719
    %v3721 = vsub.s32 %v3720, 2
    %vm3722 = vcmp.gt.s32.totalorder 0, %v3721
    %v3723 = vsel %vm3722, 0, %v3721
    %v3724 = vsub.s32 32, %v3723
    %v3725 = vshll.u32 %v3716, %v3723
    %v3726 = vshrl.u32 %v3708, %v3724
    %v3727 = vor.u32 %v3725, %v3726
    %v3728 = vsub.s32 4294967266, %v3723
    %v3729 = vadd.s32 %v3728, 127
    %v3730 = vshll.u32 %v3729, 23
    %v3731 = vor.u32 4788187, %v3730
    %v3732 = vand.u32 2147483647, %v3731
    %v3734 = vcvt.s32.f32 %v3727
    %v3735 = vmul.f32 %v3734, %v3732
    %v3736 = vxor.u32 %v3735, 2147483648
    %v3737 = vsel %vm3654, %v3736, %v3735
    %v3738 = vsub.s32 4, %v3714
    %v3739 = vsel %vm3654, %v3738, %v3714
    %v3740 = vsel %vm3653, %v3541, %v3737
    %v3741 = vsel %vm3653, 0, %v3739
    %v3742 = vcosq.f32.pop %v3740
    %v3743 = vsinq.f32.pop %v3740
    %vm3744 = vweird.f32 %v3541
    %v3745 = vadd.s32 %v3741, 3
    %v3746 = vand.u32 %v3745, 3
    %vm3747 = vcmp.lt.s32.totalorder %v3746, 2
    %vm3748 = vcmp.eq.s32.totalorder %v3746, 0
    %v3749 = vxor.u32 %v3743, 2147483648
    %v3750 = vsel %vm3748, %v3742, %v3749
    %vm3751 = vcmp.eq.s32.totalorder %v3746, 2
    %v3752 = vxor.u32 %v3742, 2147483648
    %v3753 = vsel %vm3751, %v3752, %v3743
    %v3754 = vsel %vm3747, %v3750, %v3753
    %v3755 = vsel %vm3744, nan, %v3754
    %v3756 = vand.u32 2147483647, %v3542
    %vm3757 = vcmp.le.f32.partialorder %v3756, 0.7853982
    %vm3758 = vcmp.lt.s32.totalorder %v3542, 0
    %v3759 = vand.u32 %v3542, 2139095040
    %v3760 = vshrl.u32 %v3759, 23
    %v3761 = vsub.s32 %v3760, 127
    %v3762 = vand.u32 2147483647, %v3542
    %v3763 = vand.u32 %v3762, 8388607
    %v3764 = vor.u32 %v3763, 8388608
    %v3765 = vsub.s32 0, %v3764
    %v3766 = vadd.s32 %v3761, 1
    %vm3767 = vcmp.gt.s32.totalorder %v3766, 0
    %v3768 = vsel %vm3767, %v3766, 0
    %v3769 = vshrl.u32 %v3768, 5
    %v3770 = vand.u32 %v3768, 31
    %v3771 = vsub.s32 32, %v3770
    %v3772 = vshrl.u32 683565275, %v3771
    %v3773 = vshll.u32 683565275, %v3770
    %v3774 = vshrl.u32 2475754826, %v3771
    %v3775 = vor.u32 %v3773, %v3774
    %v3776 = vshll.u32 2475754826, %v3770
    %v3777 = vshrl.u32 2131351028, %v3771
    %v3778 = vor.u32 %v3776, %v3777
    %v3779 = vshll.u32 2131351028, %v3770
    %v3780 = vshrl.u32 2102212464, %v3771
    %v3781 = vor.u32 %v3779, %v3780
    %v3782 = vshll.u32 2102212464, %v3770
    %v3783 = vshrl.u32 920167782, %v3771
    %v3784 = vor.u32 %v3782, %v3783
    %v3785 = vshll.u32 920167782, %v3770
    %v3786 = vshrl.u32 1326507024, %v3771
    %v3787 = vor.u32 %v3785, %v3786
    %vm3788 = vcmp.lt.s32.totalorder %v3769, 1
    %vm3789 = vcmp.lt.s32.totalorder %v3769, 2
    %vm3790 = vcmp.lt.s32.totalorder %v3769, 3
    %vm3791 = vcmp.lt.s32.totalorder %v3769, 4
    %v3792 = vsel %vm3788, %v3772, %v3775
    %v3793 = vsel %vm3791, %v3781, 2102212464
    %v3794 = vsel %vm3790, %v3778, %v3793
    %v3795 = vsel %vm3789, %v3792, %v3794
    %v3796 = vsel %vm3788, %v3775, %v3778
    %v3797 = vsel %vm3791, %v3784, 920167782
    %v3798 = vsel %vm3790, %v3781, %v3797
    %v3799 = vsel %vm3789, %v3796, %v3798
    %v3800 = vsel %vm3788, %v3778, %v3781
    %v3801 = vsel %vm3791, %v3787, 1326507024
    %v3802 = vsel %vm3790, %v3784, %v3801
    %v3803 = vsel %vm3789, %v3800, %v3802
    %v3804 = vshll.u32 %v3764, 8
    %v3805 = vmul.u32.u64.compose %v3804, %v3803
    %v3806 = vextract.low.u32 %v3805
    %v3807 = vextract.high.u32 %v3805
    %v3808 = vmul.u32.u64.compose %v3804, %v3799
    %v3809 = vextract.low.u32 %v3808
    %v3810 = vextract.high.u32 %v3808
    %v3811 = vmul.u32 %v3804, %v3795
    %v3812 = vadd.s32 %v3807, %v3809
    %vm3813 = vc.u32 %v3807, %v3809
    %v3814 = vadd.s32 %v3810, 1
    %v3815 = vsel %vm3813, %v3814, %v3810
    %v3816 = vadd.s32 %v3811, %v3815
    %v3817 = vadd.s32 %v3816, 536870912
    %v3818 = vshrl.u32 %v3817, 30
    %v3819 = vshll.u32 %v3818, 30
    %v3820 = vsub.s32 %v3816, %v3819
    %vm3821 = vcmp.lt.s32.totalorder %v3820, 0
    %v3822 = vsub.s32 0, %v3820
    %v3823 = vsel %vm3821, %v3822, %v3820
    %v3824 = vclz %v3823
    %v3825 = vsub.s32 %v3824, 2
    %vm3826 = vcmp.gt.s32.totalorder 0, %v3825
    %v3827 = vsel %vm3826, 0, %v3825
    %v3828 = vsub.s32 32, %v3827
    %v3829 = vshll.u32 %v3820, %v3827
    %v3830 = vshrl.u32 %v3812, %v3828
    %v3831 = vor.u32 %v3829, %v3830
    %v3832 = vsub.s32 4294967266, %v3827
    %v3833 = vadd.s32 %v3832, 127
    %v3834 = vshll.u32 %v3833, 23
    %v3835 = vor.u32 4788187, %v3834
    %v3836 = vand.u32 2147483647, %v3835
    %v3838 = vcvt.s32.f32 %v3831
    %v3839 = vmul.f32 %v3838, %v3836
    %v3840 = vxor.u32 %v3839, 2147483648
    %v3841 = vsel %vm3758, %v3840, %v3839
    %v3842 = vsub.s32 4, %v3818
    %v3843 = vsel %vm3758, %v3842, %v3818
    %v3844 = vsel %vm3757, %v3542, %v3841
    %v3845 = vsel %vm3757, 0, %v3843
    %v3846 = vcosq.f32.pop %v3844
    %v3847 = vsinq.f32.pop %v3844
    %vm3848 = vweird.f32 %v3542
    %v3849 = vadd.s32 %v3845, 3
    %v3850 = vand.u32 %v3849, 3
    %vm3851 = vcmp.lt.s32.totalorder %v3850, 2
    %vm3852 = vcmp.eq.s32.totalorder %v3850, 0
    %v3853 = vxor.u32 %v3847, 2147483648
    %v3854 = vsel %vm3852, %v3846, %v3853
    %vm3855 = vcmp.eq.s32.totalorder %v3850, 2
    %v3856 = vxor.u32 %v3846, 2147483648
    %v3857 = vsel %vm3855, %v3856, %v3847
    %v3858 = vsel %vm3851, %v3854, %v3857
    %v3859 = vsel %vm3848, nan, %v3858
    %v3860 = vand.u32 2147483647, %v3543
    %vm3861 = vcmp.le.f32.partialorder %v3860, 0.7853982
    %vm3862 = vcmp.lt.s32.totalorder %v3543, 0
    %v3863 = vand.u32 %v3543, 2139095040
    %v3864 = vshrl.u32 %v3863, 23
    %v3865 = vsub.s32 %v3864, 127
    %v3866 = vand.u32 2147483647, %v3543
    %v3867 = vand.u32 %v3866, 8388607
    %v3868 = vor.u32 %v3867, 8388608
    %v3869 = vsub.s32 0, %v3868
    %v3870 = vadd.s32 %v3865, 1
    %vm3871 = vcmp.gt.s32.totalorder %v3870, 0
    %v3872 = vsel %vm3871, %v3870, 0
    %v3873 = vshrl.u32 %v3872, 5
    %v3874 = vand.u32 %v3872, 31
    %v3875 = vsub.s32 32, %v3874
    %v3876 = vshrl.u32 683565275, %v3875
    %v3877 = vshll.u32 683565275, %v3874
    %v3878 = vshrl.u32 2475754826, %v3875
    %v3879 = vor.u32 %v3877, %v3878
    %v3880 = vshll.u32 2475754826, %v3874
    %v3881 = vshrl.u32 2131351028, %v3875
    %v3882 = vor.u32 %v3880, %v3881
    %v3883 = vshll.u32 2131351028, %v3874
    %v3884 = vshrl.u32 2102212464, %v3875
    %v3885 = vor.u32 %v3883, %v3884
    %v3886 = vshll.u32 2102212464, %v3874
    %v3887 = vshrl.u32 920167782, %v3875
    %v3888 = vor.u32 %v3886, %v3887
    %v3889 = vshll.u32 920167782, %v3874
    %v3890 = vshrl.u32 1326507024, %v3875
    %v3891 = vor.u32 %v3889, %v3890
    %vm3892 = vcmp.lt.s32.totalorder %v3873, 1
    %vm3893 = vcmp.lt.s32.totalorder %v3873, 2
    %vm3894 = vcmp.lt.s32.totalorder %v3873, 3
    %vm3895 = vcmp.lt.s32.totalorder %v3873, 4
    %v3896 = vsel %vm3892, %v3876, %v3879
    %v3897 = vsel %vm3895, %v3885, 2102212464
    %v3898 = vsel %vm3894, %v3882, %v3897
    %v3899 = vsel %vm3893, %v3896, %v3898
    %v3900 = vsel %vm3892, %v3879, %v3882
    %v3901 = vsel %vm3895, %v3888, 920167782
    %v3902 = vsel %vm3894, %v3885, %v3901
    %v3903 = vsel %vm3893, %v3900, %v3902
    %v3904 = vsel %vm3892, %v3882, %v3885
    %v3905 = vsel %vm3895, %v3891, 1326507024
    %v3906 = vsel %vm3894, %v3888, %v3905
    %v3907 = vsel %vm3893, %v3904, %v3906
    %v3908 = vshll.u32 %v3868, 8
    %v3909 = vmul.u32.u64.compose %v3908, %v3907
    %v3910 = vextract.low.u32 %v3909
    %v3911 = vextract.high.u32 %v3909
    %v3912 = vmul.u32.u64.compose %v3908, %v3903
    %v3913 = vextract.low.u32 %v3912
    %v3914 = vextract.high.u32 %v3912
    %v3915 = vmul.u32 %v3908, %v3899
    %v3916 = vadd.s32 %v3911, %v3913
    %vm3917 = vc.u32 %v3911, %v3913
    %v3918 = vadd.s32 %v3914, 1
    %v3919 = vsel %vm3917, %v3918, %v3914
    %v3920 = vadd.s32 %v3915, %v3919
    %v3921 = vadd.s32 %v3920, 536870912
    %v3922 = vshrl.u32 %v3921, 30
    %v3923 = vshll.u32 %v3922, 30
    %v3924 = vsub.s32 %v3920, %v3923
    %vm3925 = vcmp.lt.s32.totalorder %v3924, 0
    %v3926 = vsub.s32 0, %v3924
    %v3927 = vsel %vm3925, %v3926, %v3924
    %v3928 = vclz %v3927
    %v3929 = vsub.s32 %v3928, 2
    %vm3930 = vcmp.gt.s32.totalorder 0, %v3929
    %v3931 = vsel %vm3930, 0, %v3929
    %v3932 = vsub.s32 32, %v3931
    %v3933 = vshll.u32 %v3924, %v3931
    %v3934 = vshrl.u32 %v3916, %v3932
    %v3935 = vor.u32 %v3933, %v3934
    %v3936 = vsub.s32 4294967266, %v3931
    %v3937 = vadd.s32 %v3936, 127
    %v3938 = vshll.u32 %v3937, 23
    %v3939 = vor.u32 4788187, %v3938
    %v3940 = vand.u32 2147483647, %v3939
    %v3942 = vcvt.s32.f32 %v3935
    %v3943 = vmul.f32 %v3942, %v3940
    %v3944 = vxor.u32 %v3943, 2147483648
    %v3945 = vsel %vm3862, %v3944, %v3943
    %v3946 = vsub.s32 4, %v3922
    %v3947 = vsel %vm3862, %v3946, %v3922
    %v3948 = vsel %vm3861, %v3543, %v3945
    %v3949 = vsel %vm3861, 0, %v3947
    %v3950 = vcosq.f32.pop %v3948
    %v3951 = vsinq.f32.pop %v3948
    %vm3952 = vweird.f32 %v3543
    %v3953 = vadd.s32 %v3949, 3
    %v3954 = vand.u32 %v3953, 3
    %vm3955 = vcmp.lt.s32.totalorder %v3954, 2
    %vm3956 = vcmp.eq.s32.totalorder %v3954, 0
    %v3957 = vxor.u32 %v3951, 2147483648
    %v3958 = vsel %vm3956, %v3950, %v3957
    %vm3959 = vcmp.eq.s32.totalorder %v3954, 2
    %v3960 = vxor.u32 %v3950, 2147483648
    %v3961 = vsel %vm3959, %v3960, %v3951
    %v3962 = vsel %vm3955, %v3958, %v3961
    %v3963 = vsel %vm3952, nan, %v3962
    %v3964 = vand.u32 2147483647, %v3544
    %vm3965 = vcmp.le.f32.partialorder %v3964, 0.7853982
    %vm3966 = vcmp.lt.s32.totalorder %v3544, 0
    %v3967 = vand.u32 %v3544, 2139095040
    %v3968 = vshrl.u32 %v3967, 23
    %v3969 = vsub.s32 %v3968, 127
    %v3970 = vand.u32 2147483647, %v3544
    %v3971 = vand.u32 %v3970, 8388607
    %v3972 = vor.u32 %v3971, 8388608
    %v3973 = vsub.s32 0, %v3972
    %v3974 = vadd.s32 %v3969, 1
    %vm3975 = vcmp.gt.s32.totalorder %v3974, 0
    %v3976 = vsel %vm3975, %v3974, 0
    %v3977 = vshrl.u32 %v3976, 5
    %v3978 = vand.u32 %v3976, 31
    %v3979 = vsub.s32 32, %v3978
    %v3980 = vshrl.u32 683565275, %v3979
    %v3981 = vshll.u32 683565275, %v3978
    %v3982 = vshrl.u32 2475754826, %v3979
    %v3983 = vor.u32 %v3981, %v3982
    %v3984 = vshll.u32 2475754826, %v3978
    %v3985 = vshrl.u32 2131351028, %v3979
    %v3986 = vor.u32 %v3984, %v3985
    %v3987 = vshll.u32 2131351028, %v3978
    %v3988 = vshrl.u32 2102212464, %v3979
    %v3989 = vor.u32 %v3987, %v3988
    %v3990 = vshll.u32 2102212464, %v3978
    %v3991 = vshrl.u32 920167782, %v3979
    %v3992 = vor.u32 %v3990, %v3991
    %v3993 = vshll.u32 920167782, %v3978
    %v3994 = vshrl.u32 1326507024, %v3979
    %v3995 = vor.u32 %v3993, %v3994
    %vm3996 = vcmp.lt.s32.totalorder %v3977, 1
    %vm3997 = vcmp.lt.s32.totalorder %v3977, 2
    %vm3998 = vcmp.lt.s32.totalorder %v3977, 3
    %vm3999 = vcmp.lt.s32.totalorder %v3977, 4
    %v4000 = vsel %vm3996, %v3980, %v3983
    %v4001 = vsel %vm3999, %v3989, 2102212464
    %v4002 = vsel %vm3998, %v3986, %v4001
    %v4003 = vsel %vm3997, %v4000, %v4002
    %v4004 = vsel %vm3996, %v3983, %v3986
    %v4005 = vsel %vm3999, %v3992, 920167782
    %v4006 = vsel %vm3998, %v3989, %v4005
    %v4007 = vsel %vm3997, %v4004, %v4006
    %v4008 = vsel %vm3996, %v3986, %v3989
    %v4009 = vsel %vm3999, %v3995, 1326507024
    %v4010 = vsel %vm3998, %v3992, %v4009
    %v4011 = vsel %vm3997, %v4008, %v4010
    %v4012 = vshll.u32 %v3972, 8
    %v4013 = vmul.u32.u64.compose %v4012, %v4011
    %v4014 = vextract.low.u32 %v4013
    %v4015 = vextract.high.u32 %v4013
    %v4016 = vmul.u32.u64.compose %v4012, %v4007
    %v4017 = vextract.low.u32 %v4016
    %v4018 = vextract.high.u32 %v4016
    %v4019 = vmul.u32 %v4012, %v4003
    %v4020 = vadd.s32 %v4015, %v4017
    %vm4021 = vc.u32 %v4015, %v4017
    %v4022 = vadd.s32 %v4018, 1
    %v4023 = vsel %vm4021, %v4022, %v4018
    %v4024 = vadd.s32 %v4019, %v4023
    %v4025 = vadd.s32 %v4024, 536870912
    %v4026 = vshrl.u32 %v4025, 30
    %v4027 = vshll.u32 %v4026, 30
    %v4028 = vsub.s32 %v4024, %v4027
    %vm4029 = vcmp.lt.s32.totalorder %v4028, 0
    %v4030 = vsub.s32 0, %v4028
    %v4031 = vsel %vm4029, %v4030, %v4028
    %v4032 = vclz %v4031
    %v4033 = vsub.s32 %v4032, 2
    %vm4034 = vcmp.gt.s32.totalorder 0, %v4033
    %v4035 = vsel %vm4034, 0, %v4033
    %v4036 = vsub.s32 32, %v4035
    %v4037 = vshll.u32 %v4028, %v4035
    %v4038 = vshrl.u32 %v4020, %v4036
    %v4039 = vor.u32 %v4037, %v4038
    %v4040 = vsub.s32 4294967266, %v4035
    %v4041 = vadd.s32 %v4040, 127
    %v4042 = vshll.u32 %v4041, 23
    %v4043 = vor.u32 4788187, %v4042
    %v4044 = vand.u32 2147483647, %v4043
    %v4046 = vcvt.s32.f32 %v4039
    %v4047 = vmul.f32 %v4046, %v4044
    %v4048 = vxor.u32 %v4047, 2147483648
    %v4049 = vsel %vm3966, %v4048, %v4047
    %v4050 = vsub.s32 4, %v4026
    %v4051 = vsel %vm3966, %v4050, %v4026
    %v4052 = vsel %vm3965, %v3544, %v4049
    %v4053 = vsel %vm3965, 0, %v4051
    %v4054 = vcosq.f32.pop %v4052
    %v4055 = vsinq.f32.pop %v4052
    %vm4056 = vweird.f32 %v3544
    %v4057 = vadd.s32 %v4053, 3
    %v4058 = vand.u32 %v4057, 3
    %vm4059 = vcmp.lt.s32.totalorder %v4058, 2
    %vm4060 = vcmp.eq.s32.totalorder %v4058, 0
    %v4061 = vxor.u32 %v4055, 2147483648
    %v4062 = vsel %vm4060, %v4054, %v4061
    %vm4063 = vcmp.eq.s32.totalorder %v4058, 2
    %v4064 = vxor.u32 %v4054, 2147483648
    %v4065 = vsel %vm4063, %v4064, %v4055
    %v4066 = vsel %vm4059, %v4062, %v4065
    %v4067 = vsel %vm4056, nan, %v4066
    %v4068 = vand.u32 2147483647, %v3545
    %vm4069 = vcmp.le.f32.partialorder %v4068, 0.7853982
    %vm4070 = vcmp.lt.s32.totalorder %v3545, 0
    %v4071 = vand.u32 %v3545, 2139095040
    %v4072 = vshrl.u32 %v4071, 23
    %v4073 = vsub.s32 %v4072, 127
    %v4074 = vand.u32 2147483647, %v3545
    %v4075 = vand.u32 %v4074, 8388607
    %v4076 = vor.u32 %v4075, 8388608
    %v4077 = vsub.s32 0, %v4076
    %v4078 = vadd.s32 %v4073, 1
    %vm4079 = vcmp.gt.s32.totalorder %v4078, 0
    %v4080 = vsel %vm4079, %v4078, 0
    %v4081 = vshrl.u32 %v4080, 5
    %v4082 = vand.u32 %v4080, 31
    %v4083 = vsub.s32 32, %v4082
    %v4084 = vshrl.u32 683565275, %v4083
    %v4085 = vshll.u32 683565275, %v4082
    %v4086 = vshrl.u32 2475754826, %v4083
    %v4087 = vor.u32 %v4085, %v4086
    %v4088 = vshll.u32 2475754826, %v4082
    %v4089 = vshrl.u32 2131351028, %v4083
    %v4090 = vor.u32 %v4088, %v4089
    %v4091 = vshll.u32 2131351028, %v4082
    %v4092 = vshrl.u32 2102212464, %v4083
    %v4093 = vor.u32 %v4091, %v4092
    %v4094 = vshll.u32 2102212464, %v4082
    %v4095 = vshrl.u32 920167782, %v4083
    %v4096 = vor.u32 %v4094, %v4095
    %v4097 = vshll.u32 920167782, %v4082
    %v4098 = vshrl.u32 1326507024, %v4083
    %v4099 = vor.u32 %v4097, %v4098
    %vm4100 = vcmp.lt.s32.totalorder %v4081, 1
    %vm4101 = vcmp.lt.s32.totalorder %v4081, 2
    %vm4102 = vcmp.lt.s32.totalorder %v4081, 3
    %vm4103 = vcmp.lt.s32.totalorder %v4081, 4
    %v4104 = vsel %vm4100, %v4084, %v4087
    %v4105 = vsel %vm4103, %v4093, 2102212464
    %v4106 = vsel %vm4102, %v4090, %v4105
    %v4107 = vsel %vm4101, %v4104, %v4106
    %v4108 = vsel %vm4100, %v4087, %v4090
    %v4109 = vsel %vm4103, %v4096, 920167782
    %v4110 = vsel %vm4102, %v4093, %v4109
    %v4111 = vsel %vm4101, %v4108, %v4110
    %v4112 = vsel %vm4100, %v4090, %v4093
    %v4113 = vsel %vm4103, %v4099, 1326507024
    %v4114 = vsel %vm4102, %v4096, %v4113
    %v4115 = vsel %vm4101, %v4112, %v4114
    %v4116 = vshll.u32 %v4076, 8
    %v4117 = vmul.u32.u64.compose %v4116, %v4115
    %v4118 = vextract.low.u32 %v4117
    %v4119 = vextract.high.u32 %v4117
    %v4120 = vmul.u32.u64.compose %v4116, %v4111
    %v4121 = vextract.low.u32 %v4120
    %v4122 = vextract.high.u32 %v4120
    %v4123 = vmul.u32 %v4116, %v4107
    %v4124 = vadd.s32 %v4119, %v4121
    %vm4125 = vc.u32 %v4119, %v4121
    %v4126 = vadd.s32 %v4122, 1
    %v4127 = vsel %vm4125, %v4126, %v4122
    %v4128 = vadd.s32 %v4123, %v4127
    %v4129 = vadd.s32 %v4128, 536870912
    %v4130 = vshrl.u32 %v4129, 30
    %v4131 = vshll.u32 %v4130, 30
    %v4132 = vsub.s32 %v4128, %v4131
    %vm4133 = vcmp.lt.s32.totalorder %v4132, 0
    %v4134 = vsub.s32 0, %v4132
    %v4135 = vsel %vm4133, %v4134, %v4132
    %v4136 = vclz %v4135
    %v4137 = vsub.s32 %v4136, 2
    %vm4138 = vcmp.gt.s32.totalorder 0, %v4137
    %v4139 = vsel %vm4138, 0, %v4137
    %v4140 = vsub.s32 32, %v4139
    %v4141 = vshll.u32 %v4132, %v4139
    %v4142 = vshrl.u32 %v4124, %v4140
    %v4143 = vor.u32 %v4141, %v4142
    %v4144 = vsub.s32 4294967266, %v4139
    %v4145 = vadd.s32 %v4144, 127
    %v4146 = vshll.u32 %v4145, 23
    %v4147 = vor.u32 4788187, %v4146
    %v4148 = vand.u32 2147483647, %v4147
    %v4150 = vcvt.s32.f32 %v4143
    %v4151 = vmul.f32 %v4150, %v4148
    %v4152 = vxor.u32 %v4151, 2147483648
    %v4153 = vsel %vm4070, %v4152, %v4151
    %v4154 = vsub.s32 4, %v4130
    %v4155 = vsel %vm4070, %v4154, %v4130
    %v4156 = vsel %vm4069, %v3545, %v4153
    %v4157 = vsel %vm4069, 0, %v4155
    %v4158 = vcosq.f32.pop %v4156
    %v4159 = vsinq.f32.pop %v4156
    %vm4160 = vweird.f32 %v3545
    %v4161 = vadd.s32 %v4157, 3
    %v4162 = vand.u32 %v4161, 3
    %vm4163 = vcmp.lt.s32.totalorder %v4162, 2
    %vm4164 = vcmp.eq.s32.totalorder %v4162, 0
    %v4165 = vxor.u32 %v4159, 2147483648
    %v4166 = vsel %vm4164, %v4158, %v4165
    %vm4167 = vcmp.eq.s32.totalorder %v4162, 2
    %v4168 = vxor.u32 %v4158, 2147483648
    %v4169 = vsel %vm4167, %v4168, %v4159
    %v4170 = vsel %vm4163, %v4166, %v4169
    %v4171 = vsel %vm4160, nan, %v4170
    %v4172 = vand.u32 2147483647, %v3546
    %vm4173 = vcmp.le.f32.partialorder %v4172, 0.7853982
    %vm4174 = vcmp.lt.s32.totalorder %v3546, 0
    %v4175 = vand.u32 %v3546, 2139095040
    %v4176 = vshrl.u32 %v4175, 23
    %v4177 = vsub.s32 %v4176, 127
    %v4178 = vand.u32 2147483647, %v3546
    %v4179 = vand.u32 %v4178, 8388607
    %v4180 = vor.u32 %v4179, 8388608
    %v4181 = vsub.s32 0, %v4180
    %v4182 = vadd.s32 %v4177, 1
    %vm4183 = vcmp.gt.s32.totalorder %v4182, 0
    %v4184 = vsel %vm4183, %v4182, 0
    %v4185 = vshrl.u32 %v4184, 5
    %v4186 = vand.u32 %v4184, 31
    %v4187 = vsub.s32 32, %v4186
    %v4188 = vshrl.u32 683565275, %v4187
    %v4189 = vshll.u32 683565275, %v4186
    %v4190 = vshrl.u32 2475754826, %v4187
    %v4191 = vor.u32 %v4189, %v4190
    %v4192 = vshll.u32 2475754826, %v4186
    %v4193 = vshrl.u32 2131351028, %v4187
    %v4194 = vor.u32 %v4192, %v4193
    %v4195 = vshll.u32 2131351028, %v4186
    %v4196 = vshrl.u32 2102212464, %v4187
    %v4197 = vor.u32 %v4195, %v4196
    %v4198 = vshll.u32 2102212464, %v4186
    %v4199 = vshrl.u32 920167782, %v4187
    %v4200 = vor.u32 %v4198, %v4199
    %v4201 = vshll.u32 920167782, %v4186
    %v4202 = vshrl.u32 1326507024, %v4187
    %v4203 = vor.u32 %v4201, %v4202
    %vm4204 = vcmp.lt.s32.totalorder %v4185, 1
    %vm4205 = vcmp.lt.s32.totalorder %v4185, 2
    %vm4206 = vcmp.lt.s32.totalorder %v4185, 3
    %vm4207 = vcmp.lt.s32.totalorder %v4185, 4
    %v4208 = vsel %vm4204, %v4188, %v4191
    %v4209 = vsel %vm4207, %v4197, 2102212464
    %v4210 = vsel %vm4206, %v4194, %v4209
    %v4211 = vsel %vm4205, %v4208, %v4210
    %v4212 = vsel %vm4204, %v4191, %v4194
    %v4213 = vsel %vm4207, %v4200, 920167782
    %v4214 = vsel %vm4206, %v4197, %v4213
    %v4215 = vsel %vm4205, %v4212, %v4214
    %v4216 = vsel %vm4204, %v4194, %v4197
    %v4217 = vsel %vm4207, %v4203, 1326507024
    %v4218 = vsel %vm4206, %v4200, %v4217
    %v4219 = vsel %vm4205, %v4216, %v4218
    %v4220 = vshll.u32 %v4180, 8
    %v4221 = vmul.u32.u64.compose %v4220, %v4219
    %v4222 = vextract.low.u32 %v4221
    %v4223 = vextract.high.u32 %v4221
    %v4224 = vmul.u32.u64.compose %v4220, %v4215
    %v4225 = vextract.low.u32 %v4224
    %v4226 = vextract.high.u32 %v4224
    %v4227 = vmul.u32 %v4220, %v4211
    %v4228 = vadd.s32 %v4223, %v4225
    %vm4229 = vc.u32 %v4223, %v4225
    %v4230 = vadd.s32 %v4226, 1
    %v4231 = vsel %vm4229, %v4230, %v4226
    %v4232 = vadd.s32 %v4227, %v4231
    %v4233 = vadd.s32 %v4232, 536870912
    %v4234 = vshrl.u32 %v4233, 30
    %v4235 = vshll.u32 %v4234, 30
    %v4236 = vsub.s32 %v4232, %v4235
    %vm4237 = vcmp.lt.s32.totalorder %v4236, 0
    %v4238 = vsub.s32 0, %v4236
    %v4239 = vsel %vm4237, %v4238, %v4236
    %v4240 = vclz %v4239
    %v4241 = vsub.s32 %v4240, 2
    %vm4242 = vcmp.gt.s32.totalorder 0, %v4241
    %v4243 = vsel %vm4242, 0, %v4241
    %v4244 = vsub.s32 32, %v4243
    %v4245 = vshll.u32 %v4236, %v4243
    %v4246 = vshrl.u32 %v4228, %v4244
    %v4247 = vor.u32 %v4245, %v4246
    %v4248 = vsub.s32 4294967266, %v4243
    %v4249 = vadd.s32 %v4248, 127
    %v4250 = vshll.u32 %v4249, 23
    %v4251 = vor.u32 4788187, %v4250
    %v4252 = vand.u32 2147483647, %v4251
    %v4254 = vcvt.s32.f32 %v4247
    %v4255 = vmul.f32 %v4254, %v4252
    %v4256 = vxor.u32 %v4255, 2147483648
    %v4257 = vsel %vm4174, %v4256, %v4255
    %v4258 = vsub.s32 4, %v4234
    %v4259 = vsel %vm4174, %v4258, %v4234
    %v4260 = vsel %vm4173, %v3546, %v4257
    %v4261 = vsel %vm4173, 0, %v4259
    %v4262 = vcosq.f32.pop %v4260
    %v4263 = vsinq.f32.pop %v4260
    %vm4264 = vweird.f32 %v3546
    %v4265 = vadd.s32 %v4261, 3
    %v4266 = vand.u32 %v4265, 3
    %vm4267 = vcmp.lt.s32.totalorder %v4266, 2
    %vm4268 = vcmp.eq.s32.totalorder %v4266, 0
    %v4269 = vxor.u32 %v4263, 2147483648
    %v4270 = vsel %vm4268, %v4262, %v4269
    %vm4271 = vcmp.eq.s32.totalorder %v4266, 2
    %v4272 = vxor.u32 %v4262, 2147483648
    %v4273 = vsel %vm4271, %v4272, %v4263
    %v4274 = vsel %vm4267, %v4270, %v4273
    %v4275 = vsel %vm4264, nan, %v4274
    %v4276 = vand.u32 2147483647, %v3547
    %vm4277 = vcmp.le.f32.partialorder %v4276, 0.7853982
    %vm4278 = vcmp.lt.s32.totalorder %v3547, 0
    %v4279 = vand.u32 %v3547, 2139095040
    %v4280 = vshrl.u32 %v4279, 23
    %v4281 = vsub.s32 %v4280, 127
    %v4282 = vand.u32 2147483647, %v3547
    %v4283 = vand.u32 %v4282, 8388607
    %v4284 = vor.u32 %v4283, 8388608
    %v4285 = vsub.s32 0, %v4284
    %v4286 = vadd.s32 %v4281, 1
    %vm4287 = vcmp.gt.s32.totalorder %v4286, 0
    %v4288 = vsel %vm4287, %v4286, 0
    %v4289 = vshrl.u32 %v4288, 5
    %v4290 = vand.u32 %v4288, 31
    %v4291 = vsub.s32 32, %v4290
    %v4292 = vshrl.u32 683565275, %v4291
    %v4293 = vshll.u32 683565275, %v4290
    %v4294 = vshrl.u32 2475754826, %v4291
    %v4295 = vor.u32 %v4293, %v4294
    %v4296 = vshll.u32 2475754826, %v4290
    %v4297 = vshrl.u32 2131351028, %v4291
    %v4298 = vor.u32 %v4296, %v4297
    %v4299 = vshll.u32 2131351028, %v4290
    %v4300 = vshrl.u32 2102212464, %v4291
    %v4301 = vor.u32 %v4299, %v4300
    %v4302 = vshll.u32 2102212464, %v4290
    %v4303 = vshrl.u32 920167782, %v4291
    %v4304 = vor.u32 %v4302, %v4303
    %v4305 = vshll.u32 920167782, %v4290
    %v4306 = vshrl.u32 1326507024, %v4291
    %v4307 = vor.u32 %v4305, %v4306
    %vm4308 = vcmp.lt.s32.totalorder %v4289, 1
    %vm4309 = vcmp.lt.s32.totalorder %v4289, 2
    %vm4310 = vcmp.lt.s32.totalorder %v4289, 3
    %vm4311 = vcmp.lt.s32.totalorder %v4289, 4
    %v4312 = vsel %vm4308, %v4292, %v4295
    %v4313 = vsel %vm4311, %v4301, 2102212464
    %v4314 = vsel %vm4310, %v4298, %v4313
    %v4315 = vsel %vm4309, %v4312, %v4314
    %v4316 = vsel %vm4308, %v4295, %v4298
    %v4317 = vsel %vm4311, %v4304, 920167782
    %v4318 = vsel %vm4310, %v4301, %v4317
    %v4319 = vsel %vm4309, %v4316, %v4318
    %v4320 = vsel %vm4308, %v4298, %v4301
    %v4321 = vsel %vm4311, %v4307, 1326507024
    %v4322 = vsel %vm4310, %v4304, %v4321
    %v4323 = vsel %vm4309, %v4320, %v4322
    %v4324 = vshll.u32 %v4284, 8
    %v4325 = vmul.u32.u64.compose %v4324, %v4323
    %v4326 = vextract.low.u32 %v4325
    %v4327 = vextract.high.u32 %v4325
    %v4328 = vmul.u32.u64.compose %v4324, %v4319
    %v4329 = vextract.low.u32 %v4328
    %v4330 = vextract.high.u32 %v4328
    %v4331 = vmul.u32 %v4324, %v4315
    %v4332 = vadd.s32 %v4327, %v4329
    %vm4333 = vc.u32 %v4327, %v4329
    %v4334 = vadd.s32 %v4330, 1
    %v4335 = vsel %vm4333, %v4334, %v4330
    %v4336 = vadd.s32 %v4331, %v4335
    %v4337 = vadd.s32 %v4336, 536870912
    %v4338 = vshrl.u32 %v4337, 30
    %v4339 = vshll.u32 %v4338, 30
    %v4340 = vsub.s32 %v4336, %v4339
    %vm4341 = vcmp.lt.s32.totalorder %v4340, 0
    %v4342 = vsub.s32 0, %v4340
    %v4343 = vsel %vm4341, %v4342, %v4340
    %v4344 = vclz %v4343
    %v4345 = vsub.s32 %v4344, 2
    %vm4346 = vcmp.gt.s32.totalorder 0, %v4345
    %v4347 = vsel %vm4346, 0, %v4345
    %v4348 = vsub.s32 32, %v4347
    %v4349 = vshll.u32 %v4340, %v4347
    %v4350 = vshrl.u32 %v4332, %v4348
    %v4351 = vor.u32 %v4349, %v4350
    %v4352 = vsub.s32 4294967266, %v4347
    %v4353 = vadd.s32 %v4352, 127
    %v4354 = vshll.u32 %v4353, 23
    %v4355 = vor.u32 4788187, %v4354
    %v4356 = vand.u32 2147483647, %v4355
    %v4358 = vcvt.s32.f32 %v4351
    %v4359 = vmul.f32 %v4358, %v4356
    %v4360 = vxor.u32 %v4359, 2147483648
    %v4361 = vsel %vm4278, %v4360, %v4359
    %v4362 = vsub.s32 4, %v4338
    %v4363 = vsel %vm4278, %v4362, %v4338
    %v4364 = vsel %vm4277, %v3547, %v4361
    %v4365 = vsel %vm4277, 0, %v4363
    %v4366 = vcosq.f32.pop %v4364
    %v4367 = vsinq.f32.pop %v4364
    %vm4368 = vweird.f32 %v3547
    %v4369 = vadd.s32 %v4365, 3
    %v4370 = vand.u32 %v4369, 3
    %vm4371 = vcmp.lt.s32.totalorder %v4370, 2
    %vm4372 = vcmp.eq.s32.totalorder %v4370, 0
    %v4373 = vxor.u32 %v4367, 2147483648
    %v4374 = vsel %vm4372, %v4366, %v4373
    %vm4375 = vcmp.eq.s32.totalorder %v4370, 2
    %v4376 = vxor.u32 %v4366, 2147483648
    %v4377 = vsel %vm4375, %v4376, %v4367
    %v4378 = vsel %vm4371, %v4374, %v4377
    %v4379 = vsel %vm4368, nan, %v4378
    %4380 = vst [vmem:[#allocation2] sm:$0xff] %v3651
    %4381 = vst [vmem:[#allocation2 + $0x8] sm:$0xff] %v3755
    %4382 = vst [vmem:[#allocation2 + $0x10] sm:$0xff] %v3859
    %4383 = vst [vmem:[#allocation2 + $0x18] sm:$0xff] %v3963
    %4384 = vst [vmem:[#allocation2 + $0x20] sm:$0xff] %v4067
    %4385 = vst [vmem:[#allocation2 + $0x28] sm:$0xff] %v4171
    %4386 = vst [vmem:[#allocation2 + $0x30] sm:$0xff] %v4275
    %4387 = vst [vmem:[#allocation2 + $0x38] sm:$0xff] %v4379
    // Predicated region
    $region14: #{tpu_custom_call.1} parent=1 // pred_check
      _
    $region15: #{tpu_custom_call.1} parent=1 // pred_check_branch
      %4389 = sbr.rel (0) target = $region17
    $region16: #{tpu_custom_call.1} parent=1 // pred_region
      %s4391 = ssub.s32 1024, 1024
      %4392 = vsyncadd [#allocation3], %s4391
      %s4393 = sshll.u32 [#allocation2], 4
      %s4394 = int_to_ptr.vmem [resolvable:$true] %s4393
      %4399 = dma.vmem_to_hbm [thread:$0]  %s4394, 1024, %s3, [#allocation3], 128, 128, 8
    $region17: #{tpu_custom_call.1} parent=1 // pred_fallthru
      _
    // Predicated region
    $region18: #{tpu_custom_call.1} parent=1 // pred_check
      _
    $region19: #{tpu_custom_call.1} parent=1 // pred_check_branch
      %4401 = sbr.rel (0) target = $region21
    $region20: #{tpu_custom_call.1} parent=1 // pred_region
      %4402 = dma.done [#allocation3], 1024
    $region21: #{tpu_custom_call.1} parent=1 // pred_fallthru
      _
    %4403 = vsyncpa [#allocation3], 1

// kernel: tpu_custom_call.1
$region0: #{tpu_custom_call.1}
  #allocation0 [shape = 'u32[]', space=smem, size = 0x4, offset = 0x4, fixed_abs, tag = 'smem constant byte address 0x4 - core index']
  #allocation1 [shape = 'u32[144,128]{1,0:T(1,128)}', space=vmem, size = 0x12000, scoped, tag = 'internal scratch']
  %s0 = inlined_call_operand.hbm [shape: f32[64,128], index: 0, kind: input, shape index: {}]
  %s1 = inlined_call_operand.vmem [shape: f32[1,128], index: 1, kind: input, shape index: {}]
  %s2 = inlined_call_operand.vmem [shape: f32[1,128], index: 2, kind: input, shape index: {}]
  %s3 = inlined_call_operand.hbm [shape: f32[64,128], index: 3, kind: output, shape index: {}]
  %s4 = sld [smem:[#allocation0]]
  $region26: #{tpu_custom_call.1} parent=0
    _
  %s6 = ssub.s32 1, %s4
  %s7 = scalar_select 0, %s6, %s4
  $region1: #{tpu_custom_call.1} parent=0
    #allocation2 [shape = 'u8[32768]{0}', space=vmem, size = 0x8000, scoped, tag = 'input window, operand 0, single buffered']
    #allocation3 [shape = 's32[1]{0}', space=sflag, size = 0x4, scoped, tag = 'scoped memory for tpu_custom_call.1']
    #allocation4 [shape = 's32[1]{0}', space=sflag, size = 0x4, scoped, tag = 'scoped memory for tpu_custom_call.1']
    #allocation5 [shape = 'u8[32768]{0}', space=vmem, size = 0x8000, scoped, tag = 'output window, operand 0, single buffered']
    %8 = vsyncpa [#allocation3], 0
    %9 = vsyncpa [#allocation4], 0
    // Predicated region
    $region2: #{tpu_custom_call.1} parent=1 // pred_check
      _
    $region3: #{tpu_custom_call.1} parent=1 // pred_check_branch
      %11 = sbr.rel (0) target = $region5
    $region4: #{tpu_custom_call.1} parent=1 // pred_region
      %s13 = ssub.s32 1024, 1024
      %14 = vsyncadd [#allocation3], %s13
      %s15 = sshll.u32 [#allocation2], 4
      %s16 = int_to_ptr.vmem [resolvable:$true] %s15
      %21 = dma.hbm_to_vmem [thread:$0]  %s0, 1024, %s16, [#allocation3], 128, 128, 8
    $region5: #{tpu_custom_call.1} parent=1 // pred_fallthru
      _
    // Predicated region
    $region6: #{tpu_custom_call.1} parent=1 // pred_check
      _
    $region7: #{tpu_custom_call.1} parent=1 // pred_check_branch
      %23 = sbr.rel (0) target = $region9
    $region8: #{tpu_custom_call.1} parent=1 // pred_region
      _
    $region9: #{tpu_custom_call.1} parent=1 // pred_fallthru
      _
    // Predicated region
    $region10: #{tpu_custom_call.1} parent=1 // pred_check
      _
    $region11: #{tpu_custom_call.1} parent=1 // pred_check_branch
      %25 = sbr.rel (0) target = $region13
    $region12: #{tpu_custom_call.1} parent=1 // pred_region
      _
    $region13: #{tpu_custom_call.1} parent=1 // pred_fallthru
      _
    // Predicated region
    $region14: #{tpu_custom_call.1} parent=1 // pred_check
      _
    $region15: #{tpu_custom_call.1} parent=1 // pred_check_branch
      %27 = sbr.rel (0) target = $region17
    $region16: #{tpu_custom_call.1} parent=1 // pred_region
      %28 = dma.done [#allocation3], 1024
    $region17: #{tpu_custom_call.1} parent=1 // pred_fallthru
      _
    %v29 = vld [vmem:[#allocation2] sm:$0xff]
    %v30 = vld [vmem:[#allocation2 + $0x8] sm:$0xff]
    %v31 = vld [vmem:[#allocation2 + $0x10] sm:$0xff]
    %v32 = vld [vmem:[#allocation2 + $0x18] sm:$0xff]
    %v33 = vld [vmem:[#allocation2 + $0x20] sm:$0xff]
    %v34 = vld [vmem:[#allocation2 + $0x28] sm:$0xff]
    %v35 = vld [vmem:[#allocation2 + $0x30] sm:$0xff]
    %v36 = vld [vmem:[#allocation2 + $0x38] sm:$0xff]
    %v37 = vld [vmem:[%s1] sm:$0x1]
    %v39 = vlaneseq
    %v40 = vshrl.u32 %v39, 7
    %v41 = vsub.s32 0, %v40
    %v42 = vrot.slane %v37, %v41
    %v44 = vmul.f32 %v29, %v42
    %v45 = vmul.f32 %v30, %v42
    %v46 = vmul.f32 %v31, %v42
    %v47 = vmul.f32 %v32, %v42
    %v48 = vmul.f32 %v33, %v42
    %v49 = vmul.f32 %v34, %v42
    %v50 = vmul.f32 %v35, %v42
    %v51 = vmul.f32 %v36, %v42
    %v52 = vld [vmem:[%s2] sm:$0x1]
    %v54 = vlaneseq
    %v55 = vshrl.u32 %v54, 7
    %v56 = vsub.s32 0, %v55
    %v57 = vrot.slane %v52, %v56
    %v59 = vadd.f32 %v44, %v57
    %v60 = vadd.f32 %v45, %v57
    %v61 = vadd.f32 %v46, %v57
    %v62 = vadd.f32 %v47, %v57
    %v63 = vadd.f32 %v48, %v57
    %v64 = vadd.f32 %v49, %v57
    %v65 = vadd.f32 %v50, %v57
    %v66 = vadd.f32 %v51, %v57
    %v67 = vand.u32 2147483647, %v59
    %vm68 = vcmp.le.f32.partialorder %v67, 0.7853982
    %vm69 = vcmp.lt.s32.totalorder %v59, 0
    %v70 = vand.u32 %v59, 2139095040
    %v71 = vshrl.u32 %v70, 23
    %v72 = vsub.s32 %v71, 127
    %v73 = vand.u32 2147483647, %v59
    %v74 = vand.u32 %v73, 8388607
    %v75 = vor.u32 %v74, 8388608
    %v76 = vsub.s32 0, %v75
    %v77 = vadd.s32 %v72, 1
    %vm78 = vcmp.gt.s32.totalorder %v77, 0
    %v79 = vsel %vm78, %v77, 0
    %v80 = vshrl.u32 %v79, 5
    %v81 = vand.u32 %v79, 31
    %v82 = vsub.s32 32, %v81
    %v83 = vshrl.u32 683565275, %v82
    %v84 = vshll.u32 683565275, %v81
    %v85 = vshrl.u32 2475754826, %v82
    %v86 = vor.u32 %v84, %v85
    %v87 = vshll.u32 2475754826, %v81
    %v88 = vshrl.u32 2131351028, %v82
    %v89 = vor.u32 %v87, %v88
    %v90 = vshll.u32 2131351028, %v81
    %v91 = vshrl.u32 2102212464, %v82
    %v92 = vor.u32 %v90, %v91
    %v93 = vshll.u32 2102212464, %v81
    %v94 = vshrl.u32 920167782, %v82
    %v95 = vor.u32 %v93, %v94
    %v96 = vshll.u32 920167782, %v81
    %v97 = vshrl.u32 1326507024, %v82
    %v98 = vor.u32 %v96, %v97
    %vm99 = vcmp.lt.s32.totalorder %v80, 1
    %vm100 = vcmp.lt.s32.totalorder %v80, 2
    %vm101 = vcmp.lt.s32.totalorder %v80, 3
    %vm102 = vcmp.lt.s32.totalorder %v80, 4
    %v103 = vsel %vm99, %v83, %v86
    %v104 = vsel %vm102, %v92, 2102212464
    %v105 = vsel %vm101, %v89, %v104
    %v106 = vsel %vm100, %v103, %v105
    %v107 = vsel %vm99, %v86, %v89
    %v108 = vsel %vm102, %v95, 920167782
    %v109 = vsel %vm101, %v92, %v108
    %v110 = vsel %vm100, %v107, %v109
    %v111 = vsel %vm99, %v89, %v92
    %v112 = vsel %vm102, %v98, 1326507024
    %v113 = vsel %vm101, %v95, %v112
    %v114 = vsel %vm100, %v111, %v113
    %v115 = vshll.u32 %v75, 8
    %v116 = vmul.u32.u64.compose %v115, %v114
    %v117 = vextract.low.u32 %v116
    %v118 = vextract.high.u32 %v116
    %v119 = vmul.u32.u64.compose %v115, %v110
    %v120 = vextract.low.u32 %v119
    %v121 = vextract.high.u32 %v119
    %v122 = vmul.u32 %v115, %v106
    %v123 = vadd.s32 %v118, %v120
    %vm124 = vc.u32 %v118, %v120
    %v125 = vadd.s32 %v121, 1
    %v126 = vsel %vm124, %v125, %v121
    %v127 = vadd.s32 %v122, %v126
    %v128 = vadd.s32 %v127, 536870912
    %v129 = vshrl.u32 %v128, 30
    %v130 = vshll.u32 %v129, 30
    %v131 = vsub.s32 %v127, %v130
    %vm132 = vcmp.lt.s32.totalorder %v131, 0
    %v133 = vsub.s32 0, %v131
    %v134 = vsel %vm132, %v133, %v131
    %v135 = vclz %v134
    %v136 = vsub.s32 %v135, 2
    %vm137 = vcmp.gt.s32.totalorder 0, %v136
    %v138 = vsel %vm137, 0, %v136
    %v139 = vsub.s32 32, %v138
    %v140 = vshll.u32 %v131, %v138
    %v141 = vshrl.u32 %v123, %v139
    %v142 = vor.u32 %v140, %v141
    %v143 = vsub.s32 4294967266, %v138
    %v144 = vadd.s32 %v143, 127
    %v145 = vshll.u32 %v144, 23
    %v146 = vor.u32 4788187, %v145
    %v147 = vand.u32 2147483647, %v146
    %v149 = vcvt.s32.f32 %v142
    %v150 = vmul.f32 %v149, %v147
    %v151 = vxor.u32 %v150, 2147483648
    %v152 = vsel %vm69, %v151, %v150
    %v153 = vsub.s32 4, %v129
    %v154 = vsel %vm69, %v153, %v129
    %v155 = vsel %vm68, %v59, %v152
    %v156 = vsel %vm68, 0, %v154
    %v157 = vcosq.f32.pop %v155
    %v158 = vsinq.f32.pop %v155
    %vm159 = vweird.f32 %v59
    %v160 = vadd.s32 %v156, 3
    %v161 = vand.u32 %v160, 3
    %vm162 = vcmp.lt.s32.totalorder %v161, 2
    %vm163 = vcmp.eq.s32.totalorder %v161, 0
    %v164 = vxor.u32 %v158, 2147483648
    %v165 = vsel %vm163, %v157, %v164
    %vm166 = vcmp.eq.s32.totalorder %v161, 2
    %v167 = vxor.u32 %v157, 2147483648
    %v168 = vsel %vm166, %v167, %v158
    %v169 = vsel %vm162, %v165, %v168
    %v170 = vsel %vm159, nan, %v169
    %v171 = vand.u32 2147483647, %v60
    %vm172 = vcmp.le.f32.partialorder %v171, 0.7853982
    %vm173 = vcmp.lt.s32.totalorder %v60, 0
    %v174 = vand.u32 %v60, 2139095040
    %v175 = vshrl.u32 %v174, 23
    %v176 = vsub.s32 %v175, 127
    %v177 = vand.u32 2147483647, %v60
    %v178 = vand.u32 %v177, 8388607
    %v179 = vor.u32 %v178, 8388608
    %v180 = vsub.s32 0, %v179
    %v181 = vadd.s32 %v176, 1
    %vm182 = vcmp.gt.s32.totalorder %v181, 0
    %v183 = vsel %vm182, %v181, 0
    %v184 = vshrl.u32 %v183, 5
    %v185 = vand.u32 %v183, 31
    %v186 = vsub.s32 32, %v185
    %v187 = vshrl.u32 683565275, %v186
    %v188 = vshll.u32 683565275, %v185
    %v189 = vshrl.u32 2475754826, %v186
    %v190 = vor.u32 %v188, %v189
    %v191 = vshll.u32 2475754826, %v185
    %v192 = vshrl.u32 2131351028, %v186
    %v193 = vor.u32 %v191, %v192
    %v194 = vshll.u32 2131351028, %v185
    %v195 = vshrl.u32 2102212464, %v186
    %v196 = vor.u32 %v194, %v195
    %v197 = vshll.u32 2102212464, %v185
    %v198 = vshrl.u32 920167782, %v186
    %v199 = vor.u32 %v197, %v198
    %v200 = vshll.u32 920167782, %v185
    %v201 = vshrl.u32 1326507024, %v186
    %v202 = vor.u32 %v200, %v201
    %vm203 = vcmp.lt.s32.totalorder %v184, 1
    %vm204 = vcmp.lt.s32.totalorder %v184, 2
    %vm205 = vcmp.lt.s32.totalorder %v184, 3
    %vm206 = vcmp.lt.s32.totalorder %v184, 4
    %v207 = vsel %vm203, %v187, %v190
    %v208 = vsel %vm206, %v196, 2102212464
    %v209 = vsel %vm205, %v193, %v208
    %v210 = vsel %vm204, %v207, %v209
    %v211 = vsel %vm203, %v190, %v193
    %v212 = vsel %vm206, %v199, 920167782
    %v213 = vsel %vm205, %v196, %v212
    %v214 = vsel %vm204, %v211, %v213
    %v215 = vsel %vm203, %v193, %v196
    %v216 = vsel %vm206, %v202, 1326507024
    %v217 = vsel %vm205, %v199, %v216
    %v218 = vsel %vm204, %v215, %v217
    %v219 = vshll.u32 %v179, 8
    %v220 = vmul.u32.u64.compose %v219, %v218
    %v221 = vextract.low.u32 %v220
    %v222 = vextract.high.u32 %v220
    %v223 = vmul.u32.u64.compose %v219, %v214
    %v224 = vextract.low.u32 %v223
    %v225 = vextract.high.u32 %v223
    %v226 = vmul.u32 %v219, %v210
    %v227 = vadd.s32 %v222, %v224
    %vm228 = vc.u32 %v222, %v224
    %v229 = vadd.s32 %v225, 1
    %v230 = vsel %vm228, %v229, %v225
    %v231 = vadd.s32 %v226, %v230
    %v232 = vadd.s32 %v231, 536870912
    %v233 = vshrl.u32 %v232, 30
    %v234 = vshll.u32 %v233, 30
    %v235 = vsub.s32 %v231, %v234
    %vm236 = vcmp.lt.s32.totalorder %v235, 0
    %v237 = vsub.s32 0, %v235
    %v238 = vsel %vm236, %v237, %v235
    %v239 = vclz %v238
    %v240 = vsub.s32 %v239, 2
    %vm241 = vcmp.gt.s32.totalorder 0, %v240
    %v242 = vsel %vm241, 0, %v240
    %v243 = vsub.s32 32, %v242
    %v244 = vshll.u32 %v235, %v242
    %v245 = vshrl.u32 %v227, %v243
    %v246 = vor.u32 %v244, %v245
    %v247 = vsub.s32 4294967266, %v242
    %v248 = vadd.s32 %v247, 127
    %v249 = vshll.u32 %v248, 23
    %v250 = vor.u32 4788187, %v249
    %v251 = vand.u32 2147483647, %v250
    %v253 = vcvt.s32.f32 %v246
    %v254 = vmul.f32 %v253, %v251
    %v255 = vxor.u32 %v254, 2147483648
    %v256 = vsel %vm173, %v255, %v254
    %v257 = vsub.s32 4, %v233
    %v258 = vsel %vm173, %v257, %v233
    %v259 = vsel %vm172, %v60, %v256
    %v260 = vsel %vm172, 0, %v258
    %v261 = vcosq.f32.pop %v259
    %v262 = vsinq.f32.pop %v259
    %vm263 = vweird.f32 %v60
    %v264 = vadd.s32 %v260, 3
    %v265 = vand.u32 %v264, 3
    %vm266 = vcmp.lt.s32.totalorder %v265, 2
    %vm267 = vcmp.eq.s32.totalorder %v265, 0
    %v268 = vxor.u32 %v262, 2147483648
    %v269 = vsel %vm267, %v261, %v268
    %vm270 = vcmp.eq.s32.totalorder %v265, 2
    %v271 = vxor.u32 %v261, 2147483648
    %v272 = vsel %vm270, %v271, %v262
    %v273 = vsel %vm266, %v269, %v272
    %v274 = vsel %vm263, nan, %v273
    %v275 = vand.u32 2147483647, %v61
    %vm276 = vcmp.le.f32.partialorder %v275, 0.7853982
    %vm277 = vcmp.lt.s32.totalorder %v61, 0
    %v278 = vand.u32 %v61, 2139095040
    %v279 = vshrl.u32 %v278, 23
    %v280 = vsub.s32 %v279, 127
    %v281 = vand.u32 2147483647, %v61
    %v282 = vand.u32 %v281, 8388607
    %v283 = vor.u32 %v282, 8388608
    %v284 = vsub.s32 0, %v283
    %v285 = vadd.s32 %v280, 1
    %vm286 = vcmp.gt.s32.totalorder %v285, 0
    %v287 = vsel %vm286, %v285, 0
    %v288 = vshrl.u32 %v287, 5
    %v289 = vand.u32 %v287, 31
    %v290 = vsub.s32 32, %v289
    %v291 = vshrl.u32 683565275, %v290
    %v292 = vshll.u32 683565275, %v289
    %v293 = vshrl.u32 2475754826, %v290
    %v294 = vor.u32 %v292, %v293
    %v295 = vshll.u32 2475754826, %v289
    %v296 = vshrl.u32 2131351028, %v290
    %v297 = vor.u32 %v295, %v296
    %v298 = vshll.u32 2131351028, %v289
    %v299 = vshrl.u32 2102212464, %v290
    %v300 = vor.u32 %v298, %v299
    %v301 = vshll.u32 2102212464, %v289
    %v302 = vshrl.u32 920167782, %v290
    %v303 = vor.u32 %v301, %v302
    %v304 = vshll.u32 920167782, %v289
    %v305 = vshrl.u32 1326507024, %v290
    %v306 = vor.u32 %v304, %v305
    %vm307 = vcmp.lt.s32.totalorder %v288, 1
    %vm308 = vcmp.lt.s32.totalorder %v288, 2
    %vm309 = vcmp.lt.s32.totalorder %v288, 3
    %vm310 = vcmp.lt.s32.totalorder %v288, 4
    %v311 = vsel %vm307, %v291, %v294
    %v312 = vsel %vm310, %v300, 2102212464
    %v313 = vsel %vm309, %v297, %v312
    %v314 = vsel %vm308, %v311, %v313
    %v315 = vsel %vm307, %v294, %v297
    %v316 = vsel %vm310, %v303, 920167782
    %v317 = vsel %vm309, %v300, %v316
    %v318 = vsel %vm308, %v315, %v317
    %v319 = vsel %vm307, %v297, %v300
    %v320 = vsel %vm310, %v306, 1326507024
    %v321 = vsel %vm309, %v303, %v320
    %v322 = vsel %vm308, %v319, %v321
    %v323 = vshll.u32 %v283, 8
    %v324 = vmul.u32.u64.compose %v323, %v322
    %v325 = vextract.low.u32 %v324
    %v326 = vextract.high.u32 %v324
    %v327 = vmul.u32.u64.compose %v323, %v318
    %v328 = vextract.low.u32 %v327
    %v329 = vextract.high.u32 %v327
    %v330 = vmul.u32 %v323, %v314
    %v331 = vadd.s32 %v326, %v328
    %vm332 = vc.u32 %v326, %v328
    %v333 = vadd.s32 %v329, 1
    %v334 = vsel %vm332, %v333, %v329
    %v335 = vadd.s32 %v330, %v334
    %v336 = vadd.s32 %v335, 536870912
    %v337 = vshrl.u32 %v336, 30
    %v338 = vshll.u32 %v337, 30
    %v339 = vsub.s32 %v335, %v338
    %vm340 = vcmp.lt.s32.totalorder %v339, 0
    %v341 = vsub.s32 0, %v339
    %v342 = vsel %vm340, %v341, %v339
    %v343 = vclz %v342
    %v344 = vsub.s32 %v343, 2
    %vm345 = vcmp.gt.s32.totalorder 0, %v344
    %v346 = vsel %vm345, 0, %v344
    %v347 = vsub.s32 32, %v346
    %v348 = vshll.u32 %v339, %v346
    %v349 = vshrl.u32 %v331, %v347
    %v350 = vor.u32 %v348, %v349
    %v351 = vsub.s32 4294967266, %v346
    %v352 = vadd.s32 %v351, 127
    %v353 = vshll.u32 %v352, 23
    %v354 = vor.u32 4788187, %v353
    %v355 = vand.u32 2147483647, %v354
    %v357 = vcvt.s32.f32 %v350
    %v358 = vmul.f32 %v357, %v355
    %v359 = vxor.u32 %v358, 2147483648
    %v360 = vsel %vm277, %v359, %v358
    %v361 = vsub.s32 4, %v337
    %v362 = vsel %vm277, %v361, %v337
    %v363 = vsel %vm276, %v61, %v360
    %v364 = vsel %vm276, 0, %v362
    %v365 = vcosq.f32.pop %v363
    %v366 = vsinq.f32.pop %v363
    %vm367 = vweird.f32 %v61
    %v368 = vadd.s32 %v364, 3
    %v369 = vand.u32 %v368, 3
    %vm370 = vcmp.lt.s32.totalorder %v369, 2
    %vm371 = vcmp.eq.s32.totalorder %v369, 0
    %v372 = vxor.u32 %v366, 2147483648
    %v373 = vsel %vm371, %v365, %v372
    %vm374 = vcmp.eq.s32.totalorder %v369, 2
    %v375 = vxor.u32 %v365, 2147483648
    %v376 = vsel %vm374, %v375, %v366
    %v377 = vsel %vm370, %v373, %v376
    %v378 = vsel %vm367, nan, %v377
    %v379 = vand.u32 2147483647, %v62
    %vm380 = vcmp.le.f32.partialorder %v379, 0.7853982
    %vm381 = vcmp.lt.s32.totalorder %v62, 0
    %v382 = vand.u32 %v62, 2139095040
    %v383 = vshrl.u32 %v382, 23
    %v384 = vsub.s32 %v383, 127
    %v385 = vand.u32 2147483647, %v62
    %v386 = vand.u32 %v385, 8388607
    %v387 = vor.u32 %v386, 8388608
    %v388 = vsub.s32 0, %v387
    %v389 = vadd.s32 %v384, 1
    %vm390 = vcmp.gt.s32.totalorder %v389, 0
    %v391 = vsel %vm390, %v389, 0
    %v392 = vshrl.u32 %v391, 5
    %v393 = vand.u32 %v391, 31
    %v394 = vsub.s32 32, %v393
    %v395 = vshrl.u32 683565275, %v394
    %v396 = vshll.u32 683565275, %v393
    %v397 = vshrl.u32 2475754826, %v394
    %v398 = vor.u32 %v396, %v397
    %v399 = vshll.u32 2475754826, %v393
    %v400 = vshrl.u32 2131351028, %v394
    %v401 = vor.u32 %v399, %v400
    %v402 = vshll.u32 2131351028, %v393
    %v403 = vshrl.u32 2102212464, %v394
    %v404 = vor.u32 %v402, %v403
    %v405 = vshll.u32 2102212464, %v393
    %v406 = vshrl.u32 920167782, %v394
    %v407 = vor.u32 %v405, %v406
    %v408 = vshll.u32 920167782, %v393
    %v409 = vshrl.u32 1326507024, %v394
    %v410 = vor.u32 %v408, %v409
    %vm411 = vcmp.lt.s32.totalorder %v392, 1
    %vm412 = vcmp.lt.s32.totalorder %v392, 2
    %vm413 = vcmp.lt.s32.totalorder %v392, 3
    %vm414 = vcmp.lt.s32.totalorder %v392, 4
    %v415 = vsel %vm411, %v395, %v398
    %v416 = vsel %vm414, %v404, 2102212464
    %v417 = vsel %vm413, %v401, %v416
    %v418 = vsel %vm412, %v415, %v417
    %v419 = vsel %vm411, %v398, %v401
    %v420 = vsel %vm414, %v407, 920167782
    %v421 = vsel %vm413, %v404, %v420
    %v422 = vsel %vm412, %v419, %v421
    %v423 = vsel %vm411, %v401, %v404
    %v424 = vsel %vm414, %v410, 1326507024
    %v425 = vsel %vm413, %v407, %v424
    %v426 = vsel %vm412, %v423, %v425
    %v427 = vshll.u32 %v387, 8
    %v428 = vmul.u32.u64.compose %v427, %v426
    %v429 = vextract.low.u32 %v428
    %v430 = vextract.high.u32 %v428
    %v431 = vmul.u32.u64.compose %v427, %v422
    %v432 = vextract.low.u32 %v431
    %v433 = vextract.high.u32 %v431
    %v434 = vmul.u32 %v427, %v418
    %v435 = vadd.s32 %v430, %v432
    %vm436 = vc.u32 %v430, %v432
    %v437 = vadd.s32 %v433, 1
    %v438 = vsel %vm436, %v437, %v433
    %v439 = vadd.s32 %v434, %v438
    %v440 = vadd.s32 %v439, 536870912
    %v441 = vshrl.u32 %v440, 30
    %v442 = vshll.u32 %v441, 30
    %v443 = vsub.s32 %v439, %v442
    %vm444 = vcmp.lt.s32.totalorder %v443, 0
    %v445 = vsub.s32 0, %v443
    %v446 = vsel %vm444, %v445, %v443
    %v447 = vclz %v446
    %v448 = vsub.s32 %v447, 2
    %vm449 = vcmp.gt.s32.totalorder 0, %v448
    %v450 = vsel %vm449, 0, %v448
    %v451 = vsub.s32 32, %v450
    %v452 = vshll.u32 %v443, %v450
    %v453 = vshrl.u32 %v435, %v451
    %v454 = vor.u32 %v452, %v453
    %v455 = vsub.s32 4294967266, %v450
    %v456 = vadd.s32 %v455, 127
    %v457 = vshll.u32 %v456, 23
    %v458 = vor.u32 4788187, %v457
    %v459 = vand.u32 2147483647, %v458
    %v461 = vcvt.s32.f32 %v454
    %v462 = vmul.f32 %v461, %v459
    %v463 = vxor.u32 %v462, 2147483648
    %v464 = vsel %vm381, %v463, %v462
    %v465 = vsub.s32 4, %v441
    %v466 = vsel %vm381, %v465, %v441
    %v467 = vsel %vm380, %v62, %v464
    %v468 = vsel %vm380, 0, %v466
    %v469 = vcosq.f32.pop %v467
    %v470 = vsinq.f32.pop %v467
    %vm471 = vweird.f32 %v62
    %v472 = vadd.s32 %v468, 3
    %v473 = vand.u32 %v472, 3
    %vm474 = vcmp.lt.s32.totalorder %v473, 2
    %vm475 = vcmp.eq.s32.totalorder %v473, 0
    %v476 = vxor.u32 %v470, 2147483648
    %v477 = vsel %vm475, %v469, %v476
    %vm478 = vcmp.eq.s32.totalorder %v473, 2
    %v479 = vxor.u32 %v469, 2147483648
    %v480 = vsel %vm478, %v479, %v470
    %v481 = vsel %vm474, %v477, %v480
    %v482 = vsel %vm471, nan, %v481
    %v483 = vand.u32 2147483647, %v63
    %vm484 = vcmp.le.f32.partialorder %v483, 0.7853982
    %vm485 = vcmp.lt.s32.totalorder %v63, 0
    %v486 = vand.u32 %v63, 2139095040
    %v487 = vshrl.u32 %v486, 23
    %v488 = vsub.s32 %v487, 127
    %v489 = vand.u32 2147483647, %v63
    %v490 = vand.u32 %v489, 8388607
    %v491 = vor.u32 %v490, 8388608
    %v492 = vsub.s32 0, %v491
    %v493 = vadd.s32 %v488, 1
    %vm494 = vcmp.gt.s32.totalorder %v493, 0
    %v495 = vsel %vm494, %v493, 0
    %v496 = vshrl.u32 %v495, 5
    %v497 = vand.u32 %v495, 31
    %v498 = vsub.s32 32, %v497
    %v499 = vshrl.u32 683565275, %v498
    %v500 = vshll.u32 683565275, %v497
    %v501 = vshrl.u32 2475754826, %v498
    %v502 = vor.u32 %v500, %v501
    %v503 = vshll.u32 2475754826, %v497
    %v504 = vshrl.u32 2131351028, %v498
    %v505 = vor.u32 %v503, %v504
    %v506 = vshll.u32 2131351028, %v497
    %v507 = vshrl.u32 2102212464, %v498
    %v508 = vor.u32 %v506, %v507
    %v509 = vshll.u32 2102212464, %v497
    %v510 = vshrl.u32 920167782, %v498
    %v511 = vor.u32 %v509, %v510
    %v512 = vshll.u32 920167782, %v497
    %v513 = vshrl.u32 1326507024, %v498
    %v514 = vor.u32 %v512, %v513
    %vm515 = vcmp.lt.s32.totalorder %v496, 1
    %vm516 = vcmp.lt.s32.totalorder %v496, 2
    %vm517 = vcmp.lt.s32.totalorder %v496, 3
    %vm518 = vcmp.lt.s32.totalorder %v496, 4
    %v519 = vsel %vm515, %v499, %v502
    %v520 = vsel %vm518, %v508, 2102212464
    %v521 = vsel %vm517, %v505, %v520
    %v522 = vsel %vm516, %v519, %v521
    %v523 = vsel %vm515, %v502, %v505
    %v524 = vsel %vm518, %v511, 920167782
    %v525 = vsel %vm517, %v508, %v524
    %v526 = vsel %vm516, %v523, %v525
    %v527 = vsel %vm515, %v505, %v508
    %v528 = vsel %vm518, %v514, 1326507024
    %v529 = vsel %vm517, %v511, %v528
    %v530 = vsel %vm516, %v527, %v529
    %v531 = vshll.u32 %v491, 8
    %v532 = vmul.u32.u64.compose %v531, %v530
    %v533 = vextract.low.u32 %v532
    %v534 = vextract.high.u32 %v532
    %v535 = vmul.u32.u64.compose %v531, %v526
    %v536 = vextract.low.u32 %v535
    %v537 = vextract.high.u32 %v535
    %v538 = vmul.u32 %v531, %v522
    %v539 = vadd.s32 %v534, %v536
    %vm540 = vc.u32 %v534, %v536
    %v541 = vadd.s32 %v537, 1
    %v542 = vsel %vm540, %v541, %v537
    %v543 = vadd.s32 %v538, %v542
    %v544 = vadd.s32 %v543, 536870912
    %v545 = vshrl.u32 %v544, 30
    %v546 = vshll.u32 %v545, 30
    %v547 = vsub.s32 %v543, %v546
    %vm548 = vcmp.lt.s32.totalorder %v547, 0
    %v549 = vsub.s32 0, %v547
    %v550 = vsel %vm548, %v549, %v547
    %v551 = vclz %v550
    %v552 = vsub.s32 %v551, 2
    %vm553 = vcmp.gt.s32.totalorder 0, %v552
    %v554 = vsel %vm553, 0, %v552
    %v555 = vsub.s32 32, %v554
    %v556 = vshll.u32 %v547, %v554
    %v557 = vshrl.u32 %v539, %v555
    %v558 = vor.u32 %v556, %v557
    %v559 = vsub.s32 4294967266, %v554
    %v560 = vadd.s32 %v559, 127
    %v561 = vshll.u32 %v560, 23
    %v562 = vor.u32 4788187, %v561
    %v563 = vand.u32 2147483647, %v562
    %v565 = vcvt.s32.f32 %v558
    %v566 = vmul.f32 %v565, %v563
    %v567 = vxor.u32 %v566, 2147483648
    %v568 = vsel %vm485, %v567, %v566
    %v569 = vsub.s32 4, %v545
    %v570 = vsel %vm485, %v569, %v545
    %v571 = vsel %vm484, %v63, %v568
    %v572 = vsel %vm484, 0, %v570
    %v573 = vcosq.f32.pop %v571
    %v574 = vsinq.f32.pop %v571
    %vm575 = vweird.f32 %v63
    %v576 = vadd.s32 %v572, 3
    %v577 = vand.u32 %v576, 3
    %vm578 = vcmp.lt.s32.totalorder %v577, 2
    %vm579 = vcmp.eq.s32.totalorder %v577, 0
    %v580 = vxor.u32 %v574, 2147483648
    %v581 = vsel %vm579, %v573, %v580
    %vm582 = vcmp.eq.s32.totalorder %v577, 2
    %v583 = vxor.u32 %v573, 2147483648
    %v584 = vsel %vm582, %v583, %v574
    %v585 = vsel %vm578, %v581, %v584
    %v586 = vsel %vm575, nan, %v585
    %v587 = vand.u32 2147483647, %v64
    %vm588 = vcmp.le.f32.partialorder %v587, 0.7853982
    %vm589 = vcmp.lt.s32.totalorder %v64, 0
    %v590 = vand.u32 %v64, 2139095040
    %v591 = vshrl.u32 %v590, 23
    %v592 = vsub.s32 %v591, 127
    %v593 = vand.u32 2147483647, %v64
    %v594 = vand.u32 %v593, 8388607
    %v595 = vor.u32 %v594, 8388608
    %v596 = vsub.s32 0, %v595
    %v597 = vadd.s32 %v592, 1
    %vm598 = vcmp.gt.s32.totalorder %v597, 0
    %v599 = vsel %vm598, %v597, 0
    %v600 = vshrl.u32 %v599, 5
    %v601 = vand.u32 %v599, 31
    %v602 = vsub.s32 32, %v601
    %v603 = vshrl.u32 683565275, %v602
    %v604 = vshll.u32 683565275, %v601
    %v605 = vshrl.u32 2475754826, %v602
    %v606 = vor.u32 %v604, %v605
    %v607 = vshll.u32 2475754826, %v601
    %v608 = vshrl.u32 2131351028, %v602
    %v609 = vor.u32 %v607, %v608
    %v610 = vshll.u32 2131351028, %v601
    %v611 = vshrl.u32 2102212464, %v602
    %v612 = vor.u32 %v610, %v611
    %v613 = vshll.u32 2102212464, %v601
    %v614 = vshrl.u32 920167782, %v602
    %v615 = vor.u32 %v613, %v614
    %v616 = vshll.u32 920167782, %v601
    %v617 = vshrl.u32 1326507024, %v602
    %v618 = vor.u32 %v616, %v617
    %vm619 = vcmp.lt.s32.totalorder %v600, 1
    %vm620 = vcmp.lt.s32.totalorder %v600, 2
    %vm621 = vcmp.lt.s32.totalorder %v600, 3
    %vm622 = vcmp.lt.s32.totalorder %v600, 4
    %v623 = vsel %vm619, %v603, %v606
    %v624 = vsel %vm622, %v612, 2102212464
    %v625 = vsel %vm621, %v609, %v624
    %v626 = vsel %vm620, %v623, %v625
    %v627 = vsel %vm619, %v606, %v609
    %v628 = vsel %vm622, %v615, 920167782
    %v629 = vsel %vm621, %v612, %v628
    %v630 = vsel %vm620, %v627, %v629
    %v631 = vsel %vm619, %v609, %v612
    %v632 = vsel %vm622, %v618, 1326507024
    %v633 = vsel %vm621, %v615, %v632
    %v634 = vsel %vm620, %v631, %v633
    %v635 = vshll.u32 %v595, 8
    %v636 = vmul.u32.u64.compose %v635, %v634
    %v637 = vextract.low.u32 %v636
    %v638 = vextract.high.u32 %v636
    %v639 = vmul.u32.u64.compose %v635, %v630
    %v640 = vextract.low.u32 %v639
    %v641 = vextract.high.u32 %v639
    %v642 = vmul.u32 %v635, %v626
    %v643 = vadd.s32 %v638, %v640
    %vm644 = vc.u32 %v638, %v640
    %v645 = vadd.s32 %v641, 1
    %v646 = vsel %vm644, %v645, %v641
    %v647 = vadd.s32 %v642, %v646
    %v648 = vadd.s32 %v647, 536870912
    %v649 = vshrl.u32 %v648, 30
    %v650 = vshll.u32 %v649, 30
    %v651 = vsub.s32 %v647, %v650
    %vm652 = vcmp.lt.s32.totalorder %v651, 0
    %v653 = vsub.s32 0, %v651
    %v654 = vsel %vm652, %v653, %v651
    %v655 = vclz %v654
    %v656 = vsub.s32 %v655, 2
    %vm657 = vcmp.gt.s32.totalorder 0, %v656
    %v658 = vsel %vm657, 0, %v656
    %v659 = vsub.s32 32, %v658
    %v660 = vshll.u32 %v651, %v658
    %v661 = vshrl.u32 %v643, %v659
    %v662 = vor.u32 %v660, %v661
    %v663 = vsub.s32 4294967266, %v658
    %v664 = vadd.s32 %v663, 127
    %v665 = vshll.u32 %v664, 23
    %v666 = vor.u32 4788187, %v665
    %v667 = vand.u32 2147483647, %v666
    %v669 = vcvt.s32.f32 %v662
    %v670 = vmul.f32 %v669, %v667
    %v671 = vxor.u32 %v670, 2147483648
    %v672 = vsel %vm589, %v671, %v670
    %v673 = vsub.s32 4, %v649
    %v674 = vsel %vm589, %v673, %v649
    %v675 = vsel %vm588, %v64, %v672
    %v676 = vsel %vm588, 0, %v674
    %v677 = vcosq.f32.pop %v675
    %v678 = vsinq.f32.pop %v675
    %vm679 = vweird.f32 %v64
    %v680 = vadd.s32 %v676, 3
    %v681 = vand.u32 %v680, 3
    %vm682 = vcmp.lt.s32.totalorder %v681, 2
    %vm683 = vcmp.eq.s32.totalorder %v681, 0
    %v684 = vxor.u32 %v678, 2147483648
    %v685 = vsel %vm683, %v677, %v684
    %vm686 = vcmp.eq.s32.totalorder %v681, 2
    %v687 = vxor.u32 %v677, 2147483648
    %v688 = vsel %vm686, %v687, %v678
    %v689 = vsel %vm682, %v685, %v688
    %v690 = vsel %vm679, nan, %v689
    %v691 = vand.u32 2147483647, %v65
    %vm692 = vcmp.le.f32.partialorder %v691, 0.7853982
    %vm693 = vcmp.lt.s32.totalorder %v65, 0
    %v694 = vand.u32 %v65, 2139095040
    %v695 = vshrl.u32 %v694, 23
    %v696 = vsub.s32 %v695, 127
    %v697 = vand.u32 2147483647, %v65
    %v698 = vand.u32 %v697, 8388607
    %v699 = vor.u32 %v698, 8388608
    %v700 = vsub.s32 0, %v699
    %v701 = vadd.s32 %v696, 1
    %vm702 = vcmp.gt.s32.totalorder %v701, 0
    %v703 = vsel %vm702, %v701, 0
    %v704 = vshrl.u32 %v703, 5
    %v705 = vand.u32 %v703, 31
    %v706 = vsub.s32 32, %v705
    %v707 = vshrl.u32 683565275, %v706
    %v708 = vshll.u32 683565275, %v705
    %v709 = vshrl.u32 2475754826, %v706
    %v710 = vor.u32 %v708, %v709
    %v711 = vshll.u32 2475754826, %v705
    %v712 = vshrl.u32 2131351028, %v706
    %v713 = vor.u32 %v711, %v712
    %v714 = vshll.u32 2131351028, %v705
    %v715 = vshrl.u32 2102212464, %v706
    %v716 = vor.u32 %v714, %v715
    %v717 = vshll.u32 2102212464, %v705
    %v718 = vshrl.u32 920167782, %v706
    %v719 = vor.u32 %v717, %v718
    %v720 = vshll.u32 920167782, %v705
    %v721 = vshrl.u32 1326507024, %v706
    %v722 = vor.u32 %v720, %v721
    %vm723 = vcmp.lt.s32.totalorder %v704, 1
    %vm724 = vcmp.lt.s32.totalorder %v704, 2
    %vm725 = vcmp.lt.s32.totalorder %v704, 3
    %vm726 = vcmp.lt.s32.totalorder %v704, 4
    %v727 = vsel %vm723, %v707, %v710
    %v728 = vsel %vm726, %v716, 2102212464
    %v729 = vsel %vm725, %v713, %v728
    %v730 = vsel %vm724, %v727, %v729
    %v731 = vsel %vm723, %v710, %v713
    %v732 = vsel %vm726, %v719, 920167782
    %v733 = vsel %vm725, %v716, %v732
    %v734 = vsel %vm724, %v731, %v733
    %v735 = vsel %vm723, %v713, %v716
    %v736 = vsel %vm726, %v722, 1326507024
    %v737 = vsel %vm725, %v719, %v736
    %v738 = vsel %vm724, %v735, %v737
    %v739 = vshll.u32 %v699, 8
    %v740 = vmul.u32.u64.compose %v739, %v738
    %v741 = vextract.low.u32 %v740
    %v742 = vextract.high.u32 %v740
    %v743 = vmul.u32.u64.compose %v739, %v734
    %v744 = vextract.low.u32 %v743
    %v745 = vextract.high.u32 %v743
    %v746 = vmul.u32 %v739, %v730
    %v747 = vadd.s32 %v742, %v744
    %vm748 = vc.u32 %v742, %v744
    %v749 = vadd.s32 %v745, 1
    %v750 = vsel %vm748, %v749, %v745
    %v751 = vadd.s32 %v746, %v750
    %v752 = vadd.s32 %v751, 536870912
    %v753 = vshrl.u32 %v752, 30
    %v754 = vshll.u32 %v753, 30
    %v755 = vsub.s32 %v751, %v754
    %vm756 = vcmp.lt.s32.totalorder %v755, 0
    %v757 = vsub.s32 0, %v755
    %v758 = vsel %vm756, %v757, %v755
    %v759 = vclz %v758
    %v760 = vsub.s32 %v759, 2
    %vm761 = vcmp.gt.s32.totalorder 0, %v760
    %v762 = vsel %vm761, 0, %v760
    %v763 = vsub.s32 32, %v762
    %v764 = vshll.u32 %v755, %v762
    %v765 = vshrl.u32 %v747, %v763
    %v766 = vor.u32 %v764, %v765
    %v767 = vsub.s32 4294967266, %v762
    %v768 = vadd.s32 %v767, 127
    %v769 = vshll.u32 %v768, 23
    %v770 = vor.u32 4788187, %v769
    %v771 = vand.u32 2147483647, %v770
    %v773 = vcvt.s32.f32 %v766
    %v774 = vmul.f32 %v773, %v771
    %v775 = vxor.u32 %v774, 2147483648
    %v776 = vsel %vm693, %v775, %v774
    %v777 = vsub.s32 4, %v753
    %v778 = vsel %vm693, %v777, %v753
    %v779 = vsel %vm692, %v65, %v776
    %v780 = vsel %vm692, 0, %v778
    %v781 = vcosq.f32.pop %v779
    %v782 = vsinq.f32.pop %v779
    %vm783 = vweird.f32 %v65
    %v784 = vadd.s32 %v780, 3
    %v785 = vand.u32 %v784, 3
    %vm786 = vcmp.lt.s32.totalorder %v785, 2
    %vm787 = vcmp.eq.s32.totalorder %v785, 0
    %v788 = vxor.u32 %v782, 2147483648
    %v789 = vsel %vm787, %v781, %v788
    %vm790 = vcmp.eq.s32.totalorder %v785, 2
    %v791 = vxor.u32 %v781, 2147483648
    %v792 = vsel %vm790, %v791, %v782
    %v793 = vsel %vm786, %v789, %v792
    %v794 = vsel %vm783, nan, %v793
    %v795 = vand.u32 2147483647, %v66
    %vm796 = vcmp.le.f32.partialorder %v795, 0.7853982
    %vm797 = vcmp.lt.s32.totalorder %v66, 0
    %v798 = vand.u32 %v66, 2139095040
    %v799 = vshrl.u32 %v798, 23
    %v800 = vsub.s32 %v799, 127
    %v801 = vand.u32 2147483647, %v66
    %v802 = vand.u32 %v801, 8388607
    %v803 = vor.u32 %v802, 8388608
    %v804 = vsub.s32 0, %v803
    %v805 = vadd.s32 %v800, 1
    %vm806 = vcmp.gt.s32.totalorder %v805, 0
    %v807 = vsel %vm806, %v805, 0
    %v808 = vshrl.u32 %v807, 5
    %v809 = vand.u32 %v807, 31
    %v810 = vsub.s32 32, %v809
    %v811 = vshrl.u32 683565275, %v810
    %v812 = vshll.u32 683565275, %v809
    %v813 = vshrl.u32 2475754826, %v810
    %v814 = vor.u32 %v812, %v813
    %v815 = vshll.u32 2475754826, %v809
    %v816 = vshrl.u32 2131351028, %v810
    %v817 = vor.u32 %v815, %v816
    %v818 = vshll.u32 2131351028, %v809
    %v819 = vshrl.u32 2102212464, %v810
    %v820 = vor.u32 %v818, %v819
    %v821 = vshll.u32 2102212464, %v809
    %v822 = vshrl.u32 920167782, %v810
    %v823 = vor.u32 %v821, %v822
    %v824 = vshll.u32 920167782, %v809
    %v825 = vshrl.u32 1326507024, %v810
    %v826 = vor.u32 %v824, %v825
    %vm827 = vcmp.lt.s32.totalorder %v808, 1
    %vm828 = vcmp.lt.s32.totalorder %v808, 2
    %vm829 = vcmp.lt.s32.totalorder %v808, 3
    %vm830 = vcmp.lt.s32.totalorder %v808, 4
    %v831 = vsel %vm827, %v811, %v814
    %v832 = vsel %vm830, %v820, 2102212464
    %v833 = vsel %vm829, %v817, %v832
    %v834 = vsel %vm828, %v831, %v833
    %v835 = vsel %vm827, %v814, %v817
    %v836 = vsel %vm830, %v823, 920167782
    %v837 = vsel %vm829, %v820, %v836
    %v838 = vsel %vm828, %v835, %v837
    %v839 = vsel %vm827, %v817, %v820
    %v840 = vsel %vm830, %v826, 1326507024
    %v841 = vsel %vm829, %v823, %v840
    %v842 = vsel %vm828, %v839, %v841
    %v843 = vshll.u32 %v803, 8
    %v844 = vmul.u32.u64.compose %v843, %v842
    %v845 = vextract.low.u32 %v844
    %v846 = vextract.high.u32 %v844
    %v847 = vmul.u32.u64.compose %v843, %v838
    %v848 = vextract.low.u32 %v847
    %v849 = vextract.high.u32 %v847
    %v850 = vmul.u32 %v843, %v834
    %v851 = vadd.s32 %v846, %v848
    %vm852 = vc.u32 %v846, %v848
    %v853 = vadd.s32 %v849, 1
    %v854 = vsel %vm852, %v853, %v849
    %v855 = vadd.s32 %v850, %v854
    %v856 = vadd.s32 %v855, 536870912
    %v857 = vshrl.u32 %v856, 30
    %v858 = vshll.u32 %v857, 30
    %v859 = vsub.s32 %v855, %v858
    %vm860 = vcmp.lt.s32.totalorder %v859, 0
    %v861 = vsub.s32 0, %v859
    %v862 = vsel %vm860, %v861, %v859
    %v863 = vclz %v862
    %v864 = vsub.s32 %v863, 2
    %vm865 = vcmp.gt.s32.totalorder 0, %v864
    %v866 = vsel %vm865, 0, %v864
    %v867 = vsub.s32 32, %v866
    %v868 = vshll.u32 %v859, %v866
    %v869 = vshrl.u32 %v851, %v867
    %v870 = vor.u32 %v868, %v869
    %v871 = vsub.s32 4294967266, %v866
    %v872 = vadd.s32 %v871, 127
    %v873 = vshll.u32 %v872, 23
    %v874 = vor.u32 4788187, %v873
    %v875 = vand.u32 2147483647, %v874
    %v877 = vcvt.s32.f32 %v870
    %v878 = vmul.f32 %v877, %v875
    %v879 = vxor.u32 %v878, 2147483648
    %v880 = vsel %vm797, %v879, %v878
    %v881 = vsub.s32 4, %v857
    %v882 = vsel %vm797, %v881, %v857
    %v883 = vsel %vm796, %v66, %v880
    %v884 = vsel %vm796, 0, %v882
    %v885 = vcosq.f32.pop %v883
    %v886 = vsinq.f32.pop %v883
    %vm887 = vweird.f32 %v66
    %v888 = vadd.s32 %v884, 3
    %v889 = vand.u32 %v888, 3
    %vm890 = vcmp.lt.s32.totalorder %v889, 2
    %vm891 = vcmp.eq.s32.totalorder %v889, 0
    %v892 = vxor.u32 %v886, 2147483648
    %v893 = vsel %vm891, %v885, %v892
    %vm894 = vcmp.eq.s32.totalorder %v889, 2
    %v895 = vxor.u32 %v885, 2147483648
    %v896 = vsel %vm894, %v895, %v886
    %v897 = vsel %vm890, %v893, %v896
    %v898 = vsel %vm887, nan, %v897
    %899 = vst [vmem:[#allocation5] sm:$0xff] %v170
    %900 = vst [vmem:[#allocation5 + $0x8] sm:$0xff] %v274
    %901 = vst [vmem:[#allocation5 + $0x10] sm:$0xff] %v378
    %902 = vst [vmem:[#allocation5 + $0x18] sm:$0xff] %v482
    %903 = vst [vmem:[#allocation5 + $0x20] sm:$0xff] %v586
    %904 = vst [vmem:[#allocation5 + $0x28] sm:$0xff] %v690
    %905 = vst [vmem:[#allocation5 + $0x30] sm:$0xff] %v794
    %906 = vst [vmem:[#allocation5 + $0x38] sm:$0xff] %v898
    // Predicated region
    $region18: #{tpu_custom_call.1} parent=1 // pred_check
      _
    $region19: #{tpu_custom_call.1} parent=1 // pred_check_branch
      %908 = sbr.rel (0) target = $region21
    $region20: #{tpu_custom_call.1} parent=1 // pred_region
      %s910 = ssub.s32 1024, 1024
      %911 = vsyncadd [#allocation4], %s910
      %s912 = sshll.u32 [#allocation5], 4
      %s913 = int_to_ptr.vmem [resolvable:$true] %s912
      %918 = dma.vmem_to_hbm [thread:$0]  %s913, 1024, %s3, [#allocation4], 128, 128, 8
    $region21: #{tpu_custom_call.1} parent=1 // pred_fallthru
      _
    // Predicated region
    $region22: #{tpu_custom_call.1} parent=1 // pred_check
      _
    $region23: #{tpu_custom_call.1} parent=1 // pred_check_branch
      %920 = sbr.rel (0) target = $region25
    $region24: #{tpu_custom_call.1} parent=1 // pred_region
      %921 = dma.done [#allocation4], 1024
    $region25: #{tpu_custom_call.1} parent=1 // pred_fallthru
      _
    %922 = vsyncpa [#allocation3], 1
    %923 = vsyncpa [#allocation4], 1

</llo_original>
